<compile_context>
chip_gen: v6e
topology: v6e:2x2x1
jax: 0.10.0
libtpu: 0.0.40
codegen_flags: <defaults>
</compile_context>

<pallas_src>
import functools

import jax
import jax.numpy as jnp
from jax import lax
from jax.experimental import pallas as pl
from jax.experimental.pallas import tpu as pltpu

_LN_EPS = 1e-5
_BN_EPS = 1e-5


def _tpu_vmem_bytes():
    try:
        return int(pltpu.get_tpu_info().vmem_capacity_bytes)
    except Exception:
        return 64 * 1024 * 1024          # conservative fallback (v7x-sized)


_SMALL_VMEM = _tpu_vmem_bytes() < 100 * 1024 * 1024   # v7x: 64 MiB; v5e/v6e: 128 MiB
_VMEM_LIMIT = (48 if _SMALL_VMEM else 100) * 1024 * 1024
_ROW_TILE = 512 if _SMALL_VMEM else 1024


def _cparams(n_axes=1):
    return pltpu.CompilerParams(
        dimension_semantics=("parallel",) * n_axes,
        vmem_limit_bytes=_VMEM_LIMIT)


def _row_tile(M):
    # Full array if small; otherwise a multiple-of-8 row tile (rows are independent
    # in every row-tiled kernel, so the ragged tail is masked and safe).
    return M if M <= _ROW_TILE else _ROW_TILE


def _layernorm(x, g, b):
    mu = jnp.mean(x, axis=-1, keepdims=True)
    var = jnp.mean(jnp.square(x - mu), axis=-1, keepdims=True)
    return (x - mu) * lax.rsqrt(var + _LN_EPS) * g + b


# -------------------- fused feed-forward (half-step) ------------------------
# y = x + 0.5 * (swish(LN(x) @ W1 + b1) @ W2 + b2), tiled over rows.
def _ff_block_kernel(x_ref, g_ref, be_ref, w1_ref, b1_ref, w2_ref, b2_ref, o_ref):
    x = x_ref[...]
    xn = _layernorm(x, g_ref[...], be_ref[...])
    h = jnp.dot(xn.astype(jnp.bfloat16), w1_ref[...],
                preferred_element_type=jnp.float32) + b1_ref[...]
    h = h * jax.nn.sigmoid(h)                                    # Swish
    y = jnp.dot(h.astype(jnp.bfloat16), w2_ref[...],
                preferred_element_type=jnp.float32) + b2_ref[...]
    o_ref[...] = x + 0.5 * y                                     # Scale(0.5) + residual


def ff_block(x, g, be, w1, b1, w2, b2):
    M, D = x.shape
    H = w1.shape[1]
    TM = _row_tile(M)
    row = lambda i: (i, 0)
    full = lambda i: (0, 0)
    return pl.pallas_call(
        _ff_block_kernel,
        out_shape=jax.ShapeDtypeStruct((M, D), jnp.float32),
        grid=(pl.cdiv(M, TM),),
        in_specs=[pl.BlockSpec((TM, D), row),
                  pl.BlockSpec((1, D), full),
                  pl.BlockSpec((1, D), full),
                  pl.BlockSpec((D, H), full),
                  pl.BlockSpec((1, H), full),
                  pl.BlockSpec((H, D), full),
                  pl.BlockSpec((1, D), full)],
        out_specs=pl.BlockSpec((TM, D), row),
        compiler_params=_cparams(),
    )(x, g, be, w1, b1, w2, b2)


# --------------------------- attention (per batch) ----------------------------
def _rel_shift(rel, n):
    # rel: (H, n, 2n) with rel[h, i, r] = q_i . rel_win[r];
    # returns pos (H, n, n) with pos[h, i, j] = rel[h, i, j + (n - 1 - i)].
    # Per-row left rotation via log2(n) static rolls + selects (XLU/VPU only).
    row = lax.broadcasted_iota(jnp.int32, (n, 1), 0)
    shift = (n - 1) - row                                        # (n, 1)
    step = 1
    while step < n:
        rolled = jnp.concatenate([rel[..., step:], rel[..., :step]], axis=-1)
        rel = jnp.where((shift & step) != 0, rolled, rel)
        step *= 2
    return rel[..., :n]


def _attn_block_kernel(x_ref, g_ref, b_ref, wqkv_ref, rel_ref, wo_ref, bo_ref,
                       o_ref, *, heads, dim_head, scale):
    N = x_ref.shape[1]
    inner = heads * dim_head
    x = x_ref[0]                                                 # (N, D) fp32
    xn = _layernorm(x, g_ref[...], b_ref[...])

    # QKV in transposed layout: Wqkv^T (3*inner, D) @ xn^T -> (3*inner, N).
    # Heads then live on a cheap leading dim (no lane slices, no lane concat).
    qkv_t = lax.dot_general(wqkv_ref[...], xn.astype(jnp.bfloat16),
                            (((1,), (1,)), ((), ())),
                            preferred_element_type=jnp.float32)  # (3*inner, N)
    qkv_r = qkv_t.reshape(3 * heads, dim_head, N)
    q_b = jnp.transpose(qkv_r[:heads], (0, 2, 1)).astype(jnp.bfloat16)   # (H, N, dh)
    k_b = qkv_r[heads:2 * heads].astype(jnp.bfloat16)                     # (H, dh, N)
    v_b = qkv_r[2 * heads:].astype(jnp.bfloat16)                          # (H, dh, N)

    # Content logits: batched over heads, bf16 on the MXU, fp32 accumulate.
    logits = jnp.einsum('hqd,hdk->hqk', q_b, k_b,
                        preferred_element_type=jnp.float32)               # (H, N, N)

    # Shaw relative-position bias, computed in-kernel (never hits HBM):
    # one (H*N, dh) @ (dh, 2N) matmul + staircase relative shift.
    rel = lax.dot_general(q_b.reshape(heads * N, dim_head), rel_ref[...],
                          (((1,), (1,)), ((), ())),
                          preferred_element_type=jnp.float32)             # (H*N, 2N)
    rel = _rel_shift(rel.reshape(heads, N, 2 * N), N)                     # (H, N, N)

    logits = (logits + rel) * scale

    # fp32 softmax
    m = jnp.max(logits, axis=-1, keepdims=True)
    p = jnp.exp(logits - m)
    p = p * pl.reciprocal(jnp.sum(p, axis=-1, keepdims=True), approx=True)

    # attn @ V in transposed layout, then fused output projection + residual.
    o_t = jnp.einsum('hdk,hqk->hdq', v_b, p.astype(jnp.bfloat16),
                     preferred_element_type=jnp.float32)                  # (H, dh, N)
    o_nh = o_t.reshape(inner, N).T.astype(jnp.bfloat16)                   # (N, inner)
    y = jnp.dot(o_nh, wo_ref[...],
                preferred_element_type=jnp.float32) + bo_ref[...]         # (N, D)
    o_ref[0] = x + y


def attn_block(x, g, b, wqkv_t, rel_win, wo, bo, *, heads, dim_head, scale):
    B, N, D = x.shape
    inner = heads * dim_head
    full2 = lambda bi: (0, 0)
    return pl.pallas_call(
        functools.partial(_attn_block_kernel, heads=heads, dim_head=dim_head,
                          scale=scale),
        out_shape=jax.ShapeDtypeStruct((B, N, D), jnp.float32),
        grid=(B,),
        in_specs=[pl.BlockSpec((1, N, D), lambda bi: (bi, 0, 0)),
                  pl.BlockSpec((1, D), full2),
                  pl.BlockSpec((1, D), full2),
                  pl.BlockSpec((3 * inner, D), full2),
                  pl.BlockSpec((2 * N, dim_head), full2),
                  pl.BlockSpec((inner, D), full2),
                  pl.BlockSpec((1, D), full2)],
        out_specs=pl.BlockSpec((1, N, D), lambda bi: (bi, 0, 0)),
        compiler_params=_cparams(),
    )(x, g, b, wqkv_t, rel_win, wo, bo)


# --------------------------- fused conv module --------------------------------
# LN -> pw conv1 -> GLU -> depthwise conv (sublane-aligned VMEM halo) -> BN ->
# Swish -> pw conv2 -> residual, all in one kernel per batch row.
def _conv_module_kernel(x_ref, g_ref, be_ref, w1_ref, b1_ref, dw_ref, dwb_ref,
                        bns_ref, bnb_ref, w2_ref, b2_ref, o_ref, hpad_ref,
                        *, L, K, C, pad_front):
    x = x_ref[0]                                                 # (L, D)
    xn = _layernorm(x, g_ref[...], be_ref[...])
    h = jnp.dot(xn.astype(jnp.bfloat16), w1_ref[...],
                preferred_element_type=jnp.float32) + b1_ref[...]  # (L, 2C)
    glu = h[:, :C] * jax.nn.sigmoid(h[:, C:])                    # GLU -> (L, C)

    # 'same' padding kept in VMEM scratch; only the pad rows are re-zeroed each
    # step (safe under core-parallel grids, no full-scratch clear).
    tail = hpad_ref.shape[0] - (pad_front + L)
    hpad_ref[pl.ds(0, pad_front), :] = jnp.zeros((pad_front, C), jnp.float32)
    hpad_ref[pl.ds(pad_front + L, tail), :] = jnp.zeros((tail, C), jnp.float32)
    hpad_ref[pl.ds(pad_front, L), :] = glu                       # sublane-aligned write
    hp = hpad_ref[...]                                           # (pad_front+L+tail, C)

    off = pad_front - (K // 2)                 # fold alignment offset into tap index
    dw = dw_ref[...]                                             # (K, C)
    accs = [jnp.zeros((L, C), jnp.float32) for _ in range(4)]    # break serial chain
    for k in range(K):                                           # unrolled stencil
        accs[k % 4] = accs[k % 4] + hp[k + off:k + off + L, :] * dw[k:k + 1, :]
    acc = (accs[0] + accs[1]) + (accs[2] + accs[3]) + dwb_ref[...]
    acc = acc * bns_ref[...] + bnb_ref[...]                      # eval-mode BatchNorm1d
    acc = acc * jax.nn.sigmoid(acc)                              # Swish
    y = jnp.dot(acc.astype(jnp.bfloat16), w2_ref[...],
                preferred_element_type=jnp.float32) + b2_ref[...]
    o_ref[0] = x + y                                             # residual


def conv_module(x, g, be, w1, b1, dw, dwb, bns, bnb, w2, b2):
    B, L, D = x.shape
    K, C = dw.shape
    two_c = w1.shape[1]
    pad_front = ((K // 2 + 7) // 8) * 8                          # >= K//2, sublane-aligned
    pad_tail = (((K - 1) - (K // 2) + 7) // 8) * 8
    Lp = pad_front + L + pad_tail
    full2 = lambda b: (0, 0)
    return pl.pallas_call(
        functools.partial(_conv_module_kernel, L=L, K=K, C=C, pad_front=pad_front),
        out_shape=jax.ShapeDtypeStruct((B, L, D), jnp.float32),
        grid=(B,),
        in_specs=[pl.BlockSpec((1, L, D), lambda b: (b, 0, 0)),
                  pl.BlockSpec((1, D), full2),
                  pl.BlockSpec((1, D), full2),
                  pl.BlockSpec((D, two_c), full2),
                  pl.BlockSpec((1, two_c), full2),
                  pl.BlockSpec((K, C), full2),
                  pl.BlockSpec((1, C), full2),
                  pl.BlockSpec((1, C), full2),
                  pl.BlockSpec((1, C), full2),
                  pl.BlockSpec((C, D), full2),
                  pl.BlockSpec((1, D), full2)],
        out_specs=pl.BlockSpec((1, L, D), lambda b: (b, 0, 0)),
        scratch_shapes=[pltpu.VMEM((Lp, C), jnp.float32)],
        compiler_params=_cparams(),
    )(x, g, be, w1, b1, dw, dwb, bns, bnb, w2, b2)


# ------------- fused FF2 + residual + post-LN + final Linear ------------------
# Output is the 128-lane-padded logits (lane-dense HBM stores); the (M, D)
# intermediate never leaves VMEM.
def _ff_final_kernel(x_ref, g_ref, be_ref, w1_ref, b1_ref, w2_ref, b2_ref,
                     gp_ref, bp_ref, wf_ref, bfb_ref, o_ref):
    x = x_ref[...]
    xn = _layernorm(x, g_ref[...], be_ref[...])
    h = jnp.dot(xn.astype(jnp.bfloat16), w1_ref[...],
                preferred_element_type=jnp.float32) + b1_ref[...]
    h = h * jax.nn.sigmoid(h)                                    # Swish
    y = x + 0.5 * (jnp.dot(h.astype(jnp.bfloat16), w2_ref[...],
                           preferred_element_type=jnp.float32) + b2_ref[...])
    yn = _layernorm(y, gp_ref[...], bp_ref[...])                 # post-LN
    # Dropout p=0 -> identity; final Linear.
    o_ref[...] = jnp.dot(yn.astype(jnp.bfloat16), wf_ref[...],
                         preferred_element_type=jnp.float32) + bfb_ref[...]


def ff_final(x, g, be, w1, b1, w2, b2, gp, bp, wf, bfb):
    M, D = x.shape
    H = w1.shape[1]
    Vp = wf.shape[1]
    TM = _row_tile(M)
    row = lambda i: (i, 0)
    full = lambda i: (0, 0)
    return pl.pallas_call(
        _ff_final_kernel,
        out_shape=jax.ShapeDtypeStruct((M, Vp), jnp.float32),
        grid=(pl.cdiv(M, TM),),
        in_specs=[pl.BlockSpec((TM, D), row),
                  pl.BlockSpec((1, D), full),
                  pl.BlockSpec((1, D), full),
                  pl.BlockSpec((D, H), full),
                  pl.BlockSpec((1, H), full),
                  pl.BlockSpec((H, D), full),
                  pl.BlockSpec((1, D), full),
                  pl.BlockSpec((1, D), full),
                  pl.BlockSpec((1, D), full),
                  pl.BlockSpec((D, Vp), full),
                  pl.BlockSpec((1, Vp), full)],
        out_specs=pl.BlockSpec((TM, Vp), row),
        compiler_params=_cparams(),
    )(x, g, be, w1, b1, w2, b2, gp, bp, wf, bfb)


# ------------------------------ parameters ------------------------------------
def init_params(key, dim=64, dim_head=8, heads=8, ff_mult=4, conv_expansion=2,
                conv_kernel=31, vocab_size=10, max_pos_emb=512):
    inner_attn = dim_head * heads
    hidden = dim * ff_mult
    conv_inner = dim * conv_expansion
    ks = iter(jax.random.split(key, 16))

    def w(shape, scale=0.02):
        return (scale * jax.random.normal(next(ks), shape)).astype(jnp.float32)

    p = {}

    def ff(prefix):
        p[prefix + "_ln_g"] = jnp.ones((1, dim), jnp.float32)
        p[prefix + "_ln_b"] = jnp.zeros((1, dim), jnp.float32)
        p[prefix + "_w1"] = w((dim, hidden))
        p[prefix + "_b1"] = jnp.zeros((1, hidden), jnp.float32)
        p[prefix + "_w2"] = w((hidden, dim))
        p[prefix + "_b2"] = jnp.zeros((1, dim), jnp.float32)

    ff("ff1")
    ff("ff2")

    p["attn_ln_g"] = jnp.ones((1, dim), jnp.float32)
    p["attn_ln_b"] = jnp.zeros((1, dim), jnp.float32)
    p["attn_wqkv"] = w((dim, 3 * inner_attn))            # fused to_q / to_kv (no bias)
    p["attn_wo"] = w((inner_attn, dim))
    p["attn_bo"] = jnp.zeros((1, dim), jnp.float32)
    p["attn_rel_emb"] = w((2 * max_pos_emb + 1, dim_head))

    p["conv_ln_g"] = jnp.ones((1, dim), jnp.float32)
    p["conv_ln_b"] = jnp.zeros((1, dim), jnp.float32)
    p["conv_w1"] = w((dim, 2 * conv_inner))              # pointwise conv1
    p["conv_b1"] = jnp.zeros((1, 2 * conv_inner), jnp.float32)
    p["conv_dw"] = w((conv_kernel, conv_inner))          # depthwise taps (K, C)
    p["conv_dwb"] = jnp.zeros((1, conv_inner), jnp.float32)
    bn_gamma = jnp.ones((1, conv_inner), jnp.float32)
    bn_beta = jnp.zeros((1, conv_inner), jnp.float32)
    bn_mean = jnp.zeros((1, conv_inner), jnp.float32)
    bn_var = jnp.ones((1, conv_inner), jnp.float32)
    p["conv_bn_scale"] = bn_gamma * lax.rsqrt(bn_var + _BN_EPS)
    p["conv_bn_shift"] = bn_beta - bn_mean * p["conv_bn_scale"]
    p["conv_w2"] = w((conv_inner, dim))                  # pointwise conv2
    p["conv_b2"] = jnp.zeros((1, dim), jnp.float32)

    p["post_ln_g"] = jnp.ones((1, dim), jnp.float32)
    p["post_ln_b"] = jnp.zeros((1, dim), jnp.float32)

    p["final_w"] = w((dim, vocab_size + 1))
    p["final_b"] = jnp.zeros((1, vocab_size + 1), jnp.float32)
    return p


def prepare_params(p):
    # One-time weight preprocessing (hoisted out of the forward): bf16 casts,
    # transposed QKV weight, 128-lane-padded final projection.
    bf = lambda a: a.astype(jnp.bfloat16)
    V = p["final_w"].shape[1]
    Vp = max(128, ((V + 127) // 128) * 128)
    pp = {
        "ff1_ln_g": p["ff1_ln_g"], "ff1_ln_b": p["ff1_ln_b"],
        "ff1_w1": bf(p["ff1_w1"]), "ff1_b1": p["ff1_b1"],
        "ff1_w2": bf(p["ff1_w2"]), "ff1_b2": p["ff1_b2"],

        "attn_ln_g": p["attn_ln_g"], "attn_ln_b": p["attn_ln_b"],
        "attn_wqkv_t": bf(p["attn_wqkv"].T),             # (3*inner, D)
        "attn_wo": bf(p["attn_wo"]), "attn_bo": p["attn_bo"],
        "attn_rel_emb": p["attn_rel_emb"],

        "conv_ln_g": p["conv_ln_g"], "conv_ln_b": p["conv_ln_b"],
        "conv_w1": bf(p["conv_w1"]), "conv_b1": p["conv_b1"],
        "conv_dw": p["conv_dw"], "conv_dwb": p["conv_dwb"],
        "conv_bn_scale": p["conv_bn_scale"], "conv_bn_shift": p["conv_bn_shift"],
        "conv_w2": bf(p["conv_w2"]), "conv_b2": p["conv_b2"],

        "ff2_ln_g": p["ff2_ln_g"], "ff2_ln_b": p["ff2_ln_b"],
        "ff2_w1": bf(p["ff2_w1"]), "ff2_b1": p["ff2_b1"],
        "ff2_w2": bf(p["ff2_w2"]), "ff2_b2": p["ff2_b2"],

        "post_ln_g": p["post_ln_g"], "post_ln_b": p["post_ln_b"],
        "final_w_pad": bf(jnp.pad(p["final_w"], ((0, 0), (0, Vp - V)))),
        "final_b_pad": jnp.pad(p["final_b"], ((0, 0), (0, Vp - V))),
    }
    return pp, V


# ------------------------------- forward --------------------------------------
def conformer_linear_forward(x, pp, *, heads=8, dim_head=8, vocab_out=11,
                             max_pos_emb=512):
    B, N, D = x.shape
    M = B * N
    scale = float(dim_head) ** -0.5

    x2 = x.reshape(M, D)

    # FF1 (half-step)
    x2 = ff_block(x2, pp["ff1_ln_g"], pp["ff1_ln_b"], pp["ff1_w1"], pp["ff1_b1"],
                  pp["ff1_w2"], pp["ff1_b2"])

    # Shaw relative-position window (tiny (2N, dh) gather; the (B,H,N,N) bias is
    # computed inside the attention kernel and never materialized in HBM).
    r = jnp.arange(2 * N)
    idx = jnp.clip(max_pos_emb + (N - 1) - r, 0, 2 * max_pos_emb)
    rel_win = jnp.take(pp["attn_rel_emb"], idx, axis=0).astype(jnp.bfloat16)

    # PreNorm + QKV + attention + out-projection + residual, one kernel per batch.
    x3 = attn_block(x2.reshape(B, N, D), pp["attn_ln_g"], pp["attn_ln_b"],
                    pp["attn_wqkv_t"], rel_win, pp["attn_wo"], pp["attn_bo"],
                    heads=heads, dim_head=dim_head, scale=scale)

    # Conv module, fully fused per batch row.
    x3 = conv_module(x3, pp["conv_ln_g"], pp["conv_ln_b"], pp["conv_w1"],
                     pp["conv_b1"], pp["conv_dw"], pp["conv_dwb"],
                     pp["conv_bn_scale"], pp["conv_bn_shift"],
                     pp["conv_w2"], pp["conv_b2"])

    # FF2 + post-LN + dropout(p=0) + final Linear, fused; lane-dense logits output.
    logits = ff_final(x3.reshape(M, D), pp["ff2_ln_g"], pp["ff2_ln_b"],
                      pp["ff2_w1"], pp["ff2_b1"], pp["ff2_w2"], pp["ff2_b2"],
                      pp["post_ln_g"], pp["post_ln_b"],
                      pp["final_w_pad"], pp["final_b_pad"])
    return logits[:, :vocab_out].reshape(B, N, vocab_out)


if __name__ == "__main__":
    B, N, D = 2, 8, 64
    heads, dim_head, vocab_size = 8, 8, 10

    key = jax.random.PRNGKey(0)
    kx, kp = jax.random.split(key)
    x = jax.random.normal(kx, (B, N, D), jnp.float32)
    params = init_params(kp, dim=D, dim_head=dim_head, heads=heads,
                         vocab_size=vocab_size)
    pp, V = prepare_params(params)

    fwd = jax.jit(functools.partial(conformer_linear_forward, heads=heads,
                                    dim_head=dim_head, vocab_out=V))
    out = fwd(x, pp)
    out = jax.block_until_ready(out)

    assert out.shape == (B, N, vocab_size + 1), out.shape
    assert bool(jnp.all(jnp.isfinite(out)))
    print("KERNEL_OK")
</pallas_src>

<mosaic_0001>
module attributes {stable_mosaic.version = 11 : i64} {
  func.func @_ff_block_kernel(%arg0: i32, %arg1: memref<16x64xf32, #tpu.memory_space<vmem>>, %arg2: memref<1x64xf32, #tpu.memory_space<vmem>>, %arg3: memref<1x64xf32, #tpu.memory_space<vmem>>, %arg4: memref<64x256xbf16, #tpu.memory_space<vmem>>, %arg5: memref<1x256xf32, #tpu.memory_space<vmem>>, %arg6: memref<256x64xbf16, #tpu.memory_space<vmem>>, %arg7: memref<1x64xf32, #tpu.memory_space<vmem>>, %arg8: memref<16x64xf32, #tpu.memory_space<vmem>>) attributes {dimension_semantics = [#tpu.dimension_semantics<parallel>], iteration_bounds = array<i64: 1>, scalar_prefetch = 0 : i64, scratch_operands = 0 : i64, tpu.core_type = #tpu.core_type<tc>, window_params = [{transform_indices = @transform_0, window_bounds = array<i64: 16, 64>}, {pipeline_mode = #tpu.pipeline_mode<synchronous>, transform_indices = @transform_1, window_bounds = array<i64: 1, 64>}, {pipeline_mode = #tpu.pipeline_mode<synchronous>, transform_indices = @transform_2, window_bounds = array<i64: 1, 64>}, {pipeline_mode = #tpu.pipeline_mode<synchronous>, transform_indices = @transform_3, window_bounds = array<i64: 64, 256>}, {pipeline_mode = #tpu.pipeline_mode<synchronous>, transform_indices = @transform_4, window_bounds = array<i64: 1, 256>}, {pipeline_mode = #tpu.pipeline_mode<synchronous>, transform_indices = @transform_5, window_bounds = array<i64: 256, 64>}, {pipeline_mode = #tpu.pipeline_mode<synchronous>, transform_indices = @transform_6, window_bounds = array<i64: 1, 64>}, {transform_indices = @transform_7, window_bounds = array<i64: 16, 64>}]} {
    %c0 = arith.constant 0 : index
    %c0_0 = arith.constant 0 : index
    %0 = vector.load %arg1[%c0, %c0_0] : memref<16x64xf32, #tpu.memory_space<vmem>>, vector<16x64xf32>
    %c0_1 = arith.constant 0 : index
    %c0_2 = arith.constant 0 : index
    %1 = vector.load %arg2[%c0_1, %c0_2] : memref<1x64xf32, #tpu.memory_space<vmem>>, vector<1x64xf32>
    %c0_3 = arith.constant 0 : index
    %c0_4 = arith.constant 0 : index
    %2 = vector.load %arg3[%c0_3, %c0_4] : memref<1x64xf32, #tpu.memory_space<vmem>>, vector<1x64xf32>
    %cst = arith.constant dense<0.000000e+00> : vector<16xf32>
    %3 = vector.multi_reduction <add>, %0, %cst [1] : vector<16x64xf32> to vector<16xf32>
    %4 = vector.shape_cast %3 : vector<16xf32> to vector<16x1xf32>
    %cst_5 = arith.constant 6.400000e+01 : f32
    %5 = vector.broadcast %cst_5 : f32 to vector<16x1xf32>
    %6 = arith.divf %4, %5 : vector<16x1xf32>
    %7 = vector.broadcast %6 : vector<16x1xf32> to vector<16x64xf32>
    %8 = arith.subf %0, %7 : vector<16x64xf32>
    %9 = arith.mulf %8, %8 : vector<16x64xf32>
    %cst_6 = arith.constant dense<0.000000e+00> : vector<16xf32>
    %10 = vector.multi_reduction <add>, %9, %cst_6 [1] : vector<16x64xf32> to vector<16xf32>
    %11 = vector.shape_cast %10 : vector<16xf32> to vector<16x1xf32>
    %cst_7 = arith.constant 6.400000e+01 : f32
    %12 = vector.broadcast %cst_7 : f32 to vector<16x1xf32>
    %13 = arith.divf %11, %12 : vector<16x1xf32>
    %14 = vector.broadcast %6 : vector<16x1xf32> to vector<16x64xf32>
    %15 = arith.subf %0, %14 : vector<16x64xf32>
    %cst_8 = arith.constant 9.99999974E-6 : f32
    %16 = vector.broadcast %cst_8 : f32 to vector<16x1xf32>
    %17 = arith.addf %13, %16 : vector<16x1xf32>
    %18 = math.rsqrt %17 : vector<16x1xf32>
    %19 = vector.broadcast %18 : vector<16x1xf32> to vector<16x64xf32>
    %20 = arith.mulf %15, %19 : vector<16x64xf32>
    %21 = vector.broadcast %1 : vector<1x64xf32> to vector<16x64xf32>
    %22 = arith.mulf %20, %21 : vector<16x64xf32>
    %23 = vector.broadcast %2 : vector<1x64xf32> to vector<16x64xf32>
    %24 = arith.addf %22, %23 : vector<16x64xf32>
    %25 = arith.truncf %24 : vector<16x64xf32> to vector<16x64xbf16>
    %c0_9 = arith.constant 0 : index
    %c0_10 = arith.constant 0 : index
    %26 = vector.load %arg4[%c0_9, %c0_10] : memref<64x256xbf16, #tpu.memory_space<vmem>>, vector<64x256xbf16>
    %cst_11 = arith.constant dense<0.000000e+00> : vector<16x256xf32>
    %27 = tpu.matmul %25, %26, %cst_11 {dimension_numbers = #tpu.dot_dimension_numbers<[1], [0], [0], [1], [0, 0, 1, 1], [], []>} : vector<16x64xbf16>, vector<64x256xbf16>, vector<16x256xf32> -> vector<16x256xf32>
    %c0_12 = arith.constant 0 : index
    %c0_13 = arith.constant 0 : index
    %28 = vector.load %arg5[%c0_12, %c0_13] : memref<1x256xf32, #tpu.memory_space<vmem>>, vector<1x256xf32>
    %29 = vector.broadcast %28 : vector<1x256xf32> to vector<16x256xf32>
    %30 = arith.addf %27, %29 : vector<16x256xf32>
    %31 = arith.negf %30 : vector<16x256xf32>
    %32 = math.exp %31 : vector<16x256xf32>
    %cst_14 = arith.constant 1.000000e+00 : f32
    %33 = vector.broadcast %cst_14 : f32 to vector<16x256xf32>
    %34 = arith.addf %33, %32 : vector<16x256xf32>
    %35 = arith.divf %33, %34 : vector<16x256xf32>
    %36 = arith.mulf %30, %35 : vector<16x256xf32>
    %37 = arith.truncf %36 : vector<16x256xf32> to vector<16x256xbf16>
    %c0_15 = arith.constant 0 : index
    %c0_16 = arith.constant 0 : index
    %38 = vector.load %arg6[%c0_15, %c0_16] : memref<256x64xbf16, #tpu.memory_space<vmem>>, vector<256x64xbf16>
    %cst_17 = arith.constant dense<0.000000e+00> : vector<16x64xf32>
    %39 = tpu.matmul %37, %38, %cst_17 {dimension_numbers = #tpu.dot_dimension_numbers<[1], [0], [0], [1], [0, 0, 1, 1], [], []>} : vector<16x256xbf16>, vector<256x64xbf16>, vector<16x64xf32> -> vector<16x64xf32>
    %c0_18 = arith.constant 0 : index
    %c0_19 = arith.constant 0 : index
    %40 = vector.load %arg7[%c0_18, %c0_19] : memref<1x64xf32, #tpu.memory_space<vmem>>, vector<1x64xf32>
    %41 = vector.broadcast %40 : vector<1x64xf32> to vector<16x64xf32>
    %42 = arith.addf %39, %41 : vector<16x64xf32>
    %cst_20 = arith.constant 5.000000e-01 : f32
    %43 = vector.broadcast %cst_20 : f32 to vector<16x64xf32>
    %44 = arith.mulf %43, %42 : vector<16x64xf32>
    %45 = arith.addf %0, %44 : vector<16x64xf32>
    %c0_21 = arith.constant 0 : index
    %c0_22 = arith.constant 0 : index
    %46 = vector.load %arg8[%c0_21, %c0_22] : memref<16x64xf32, #tpu.memory_space<vmem>>, vector<16x64xf32>
    tpu.vector_store %arg8[%c0_21, %c0_22], %45 {strides = array<i32>} : memref<16x64xf32, #tpu.memory_space<vmem>>, vector<16x64xf32>,
    return
  }
  func.func @transform_0(%arg0: i32) -> (i32, i32) {
    %c0_i32 = arith.constant 0 : i32
    %c0_i32_0 = arith.constant 0 : i32
    return %arg0, %c0_i32 : i32, i32
  }
  func.func @transform_1(%arg0: i32) -> (i32, i32) {
    %c0_i32 = arith.constant 0 : i32
    %c0_i32_0 = arith.constant 0 : i32
    %c0_i32_1 = arith.constant 0 : i32
    return %c0_i32, %c0_i32_0 : i32, i32
  }
  func.func @transform_2(%arg0: i32) -> (i32, i32) {
    %c0_i32 = arith.constant 0 : i32
    %c0_i32_0 = arith.constant 0 : i32
    %c0_i32_1 = arith.constant 0 : i32
    return %c0_i32, %c0_i32_0 : i32, i32
  }
  func.func @transform_3(%arg0: i32) -> (i32, i32) {
    %c0_i32 = arith.constant 0 : i32
    %c0_i32_0 = arith.constant 0 : i32
    %c0_i32_1 = arith.constant 0 : i32
    return %c0_i32, %c0_i32_0 : i32, i32
  }
  func.func @transform_4(%arg0: i32) -> (i32, i32) {
    %c0_i32 = arith.constant 0 : i32
    %c0_i32_0 = arith.constant 0 : i32
    %c0_i32_1 = arith.constant 0 : i32
    return %c0_i32, %c0_i32_0 : i32, i32
  }
  func.func @transform_5(%arg0: i32) -> (i32, i32) {
    %c0_i32 = arith.constant 0 : i32
    %c0_i32_0 = arith.constant 0 : i32
    %c0_i32_1 = arith.constant 0 : i32
    return %c0_i32, %c0_i32_0 : i32, i32
  }
  func.func @transform_6(%arg0: i32) -> (i32, i32) {
    %c0_i32 = arith.constant 0 : i32
    %c0_i32_0 = arith.constant 0 : i32
    %c0_i32_1 = arith.constant 0 : i32
    return %c0_i32, %c0_i32_0 : i32, i32
  }
  func.func @transform_7(%arg0: i32) -> (i32, i32) {
    %c0_i32 = arith.constant 0 : i32
    %c0_i32_0 = arith.constant 0 : i32
    return %arg0, %c0_i32 : i32, i32
  }
}

module attributes {stable_mosaic.version = 11 : i64} {
  func.func @_attn_block_kernel(%arg0: i32, %arg1: memref<1x8x64xf32, #tpu.memory_space<vmem>>, %arg2: memref<1x64xf32, #tpu.memory_space<vmem>>, %arg3: memref<1x64xf32, #tpu.memory_space<vmem>>, %arg4: memref<192x64xbf16, #tpu.memory_space<vmem>>, %arg5: memref<16x8xbf16, #tpu.memory_space<vmem>>, %arg6: memref<64x64xbf16, #tpu.memory_space<vmem>>, %arg7: memref<1x64xf32, #tpu.memory_space<vmem>>, %arg8: memref<1x8x64xf32, #tpu.memory_space<vmem>>) attributes {dimension_semantics = [#tpu.dimension_semantics<parallel>], iteration_bounds = array<i64: 2>, scalar_prefetch = 0 : i64, scratch_operands = 0 : i64, tpu.core_type = #tpu.core_type<tc>, window_params = [{transform_indices = @transform_0, window_bounds = array<i64: 1, 8, 64>}, {pipeline_mode = #tpu.pipeline_mode<synchronous>, transform_indices = @transform_1, window_bounds = array<i64: 1, 64>}, {pipeline_mode = #tpu.pipeline_mode<synchronous>, transform_indices = @transform_2, window_bounds = array<i64: 1, 64>}, {pipeline_mode = #tpu.pipeline_mode<synchronous>, transform_indices = @transform_3, window_bounds = array<i64: 192, 64>}, {pipeline_mode = #tpu.pipeline_mode<synchronous>, transform_indices = @transform_4, window_bounds = array<i64: 16, 8>}, {pipeline_mode = #tpu.pipeline_mode<synchronous>, transform_indices = @transform_5, window_bounds = array<i64: 64, 64>}, {pipeline_mode = #tpu.pipeline_mode<synchronous>, transform_indices = @transform_6, window_bounds = array<i64: 1, 64>}, {transform_indices = @transform_7, window_bounds = array<i64: 1, 8, 64>}]} {
    %c0 = arith.constant 0 : index
    %c0_0 = arith.constant 0 : index
    %c0_1 = arith.constant 0 : index
    %0 = vector.load %arg1[%c0, %c0_0, %c0_1] : memref<1x8x64xf32, #tpu.memory_space<vmem>>, vector<1x8x64xf32>
    %1 = vector.shape_cast %0 : vector<1x8x64xf32> to vector<8x64xf32>
    %c0_2 = arith.constant 0 : index
    %c0_3 = arith.constant 0 : index
    %2 = vector.load %arg2[%c0_2, %c0_3] : memref<1x64xf32, #tpu.memory_space<vmem>>, vector<1x64xf32>
    %c0_4 = arith.constant 0 : index
    %c0_5 = arith.constant 0 : index
    %3 = vector.load %arg3[%c0_4, %c0_5] : memref<1x64xf32, #tpu.memory_space<vmem>>, vector<1x64xf32>
    %cst = arith.constant dense<0.000000e+00> : vector<8xf32>
    %4 = vector.multi_reduction <add>, %1, %cst [1] : vector<8x64xf32> to vector<8xf32>
    %5 = vector.shape_cast %4 : vector<8xf32> to vector<8x1xf32>
    %cst_6 = arith.constant 6.400000e+01 : f32
    %6 = vector.broadcast %cst_6 : f32 to vector<8x1xf32>
    %7 = arith.divf %5, %6 : vector<8x1xf32>
    %8 = vector.broadcast %7 : vector<8x1xf32> to vector<8x64xf32>
    %9 = arith.subf %1, %8 : vector<8x64xf32>
    %10 = arith.mulf %9, %9 : vector<8x64xf32>
    %cst_7 = arith.constant dense<0.000000e+00> : vector<8xf32>
    %11 = vector.multi_reduction <add>, %10, %cst_7 [1] : vector<8x64xf32> to vector<8xf32>
    %12 = vector.shape_cast %11 : vector<8xf32> to vector<8x1xf32>
    %cst_8 = arith.constant 6.400000e+01 : f32
    %13 = vector.broadcast %cst_8 : f32 to vector<8x1xf32>
    %14 = arith.divf %12, %13 : vector<8x1xf32>
    %15 = vector.broadcast %7 : vector<8x1xf32> to vector<8x64xf32>
    %16 = arith.subf %1, %15 : vector<8x64xf32>
    %cst_9 = arith.constant 9.99999974E-6 : f32
    %17 = vector.broadcast %cst_9 : f32 to vector<8x1xf32>
    %18 = arith.addf %14, %17 : vector<8x1xf32>
    %19 = math.rsqrt %18 : vector<8x1xf32>
    %20 = vector.broadcast %19 : vector<8x1xf32> to vector<8x64xf32>
    %21 = arith.mulf %16, %20 : vector<8x64xf32>
    %22 = vector.broadcast %2 : vector<1x64xf32> to vector<8x64xf32>
    %23 = arith.mulf %21, %22 : vector<8x64xf32>
    %24 = vector.broadcast %3 : vector<1x64xf32> to vector<8x64xf32>
    %25 = arith.addf %23, %24 : vector<8x64xf32>
    %c0_10 = arith.constant 0 : index
    %c0_11 = arith.constant 0 : index
    %26 = vector.load %arg4[%c0_10, %c0_11] : memref<192x64xbf16, #tpu.memory_space<vmem>>, vector<192x64xbf16>
    %27 = arith.truncf %25 : vector<8x64xf32> to vector<8x64xbf16>
    %cst_12 = arith.constant dense<0.000000e+00> : vector<192x8xf32>
    %28 = tpu.matmul %26, %27, %cst_12 {dimension_numbers = #tpu.dot_dimension_numbers<[1], [1], [0], [0], [0, 0, 1, 0], [], []>} : vector<192x64xbf16>, vector<8x64xbf16>, vector<192x8xf32> -> vector<192x8xf32>
    %29 = vector.shape_cast %28 : vector<192x8xf32> to vector<24x8x8xf32>
    %30 = vector.extract_strided_slice %29 {offsets = [0, 0, 0], sizes = [8, 8, 8], strides = [1, 1, 1]} : vector<24x8x8xf32> to vector<8x8x8xf32>
    %31 = tpu.transpose %30, [0, 2, 1] : vector<8x8x8xf32> -> vector<8x8x8xf32>
    %32 = arith.truncf %31 : vector<8x8x8xf32> to vector<8x8x8xbf16>
    %33 = vector.extract_strided_slice %29 {offsets = [8, 0, 0], sizes = [8, 8, 8], strides = [1, 1, 1]} : vector<24x8x8xf32> to vector<8x8x8xf32>
    %34 = arith.truncf %33 : vector<8x8x8xf32> to vector<8x8x8xbf16>
    %35 = vector.extract_strided_slice %29 {offsets = [16, 0, 0], sizes = [8, 8, 8], strides = [1, 1, 1]} : vector<24x8x8xf32> to vector<8x8x8xf32>
    %36 = arith.truncf %35 : vector<8x8x8xf32> to vector<8x8x8xbf16>
    "tpu.trace_start"() <{level = 10 : i32, message = "hqd,hdk->hqk"}> : () -> ()
    %cst_13 = arith.constant dense<0.000000e+00> : vector<8x8x8xf32>
    %37 = tpu.matmul %32, %34, %cst_13 {dimension_numbers = #tpu.dot_dimension_numbers<[2], [1], [1], [2], [0, 0, 0, 1, 1, 2], [0], [0]>} : vector<8x8x8xbf16>, vector<8x8x8xbf16>, vector<8x8x8xf32> -> vector<8x8x8xf32>
    "tpu.trace_stop"() : () -> ()
    %38 = vector.shape_cast %32 : vector<8x8x8xbf16> to vector<64x8xbf16>
    %c0_14 = arith.constant 0 : index
    %c0_15 = arith.constant 0 : index
    %39 = vector.load %arg5[%c0_14, %c0_15] : memref<16x8xbf16, #tpu.memory_space<vmem>>, vector<16x8xbf16>
    %cst_16 = arith.constant dense<0.000000e+00> : vector<64x16xf32>
    %40 = tpu.matmul %38, %39, %cst_16 {dimension_numbers = #tpu.dot_dimension_numbers<[1], [1], [0], [0], [0, 0, 1, 0], [], []>} : vector<64x8xbf16>, vector<16x8xbf16>, vector<64x16xf32> -> vector<64x16xf32>
    %41 = vector.shape_cast %40 : vector<64x16xf32> to vector<8x8x16xf32>
    %42 = tpu.iota {dimensions = array<i32: 0>} : vector<8x1xi32>
    %c7_i32 = arith.constant 7 : i32
    %43 = vector.broadcast %c7_i32 : i32 to vector<8x1xi32>
    %44 = arith.subi %43, %42 : vector<8x1xi32>
    %45 = vector.extract_strided_slice %41 {offsets = [0, 0, 1], sizes = [8, 8, 15], strides = [1, 1, 1]} : vector<8x8x16xf32> to vector<8x8x15xf32>
    %46 = vector.extract_strided_slice %41 {offsets = [0, 0, 0], sizes = [8, 8, 1], strides = [1, 1, 1]} : vector<8x8x16xf32> to vector<8x8x1xf32>
    %47 = tpu.concatenate %45, %46 in 2 : vector<8x8x15xf32>, vector<8x8x1xf32> -> vector<8x8x16xf32>
    %c1_i32 = arith.constant 1 : i32
    %48 = vector.broadcast %c1_i32 : i32 to vector<8x1xi32>
    %49 = arith.andi %44, %48 : vector<8x1xi32>
    %c0_i32 = arith.constant 0 : i32
    %50 = vector.broadcast %c0_i32 : i32 to vector<8x1xi32>
    %51 = arith.cmpi ne, %49, %50 : vector<8x1xi32>
    %52 = vector.shape_cast %51 : vector<8x1xi1> to vector<1x8x1xi1>
    %53 = vector.broadcast %52 : vector<1x8x1xi1> to vector<8x8x16xi1>
    %54 = arith.select %53, %47, %41 : vector<8x8x16xi1>, vector<8x8x16xf32>
    %55 = vector.extract_strided_slice %54 {offsets = [0, 0, 2], sizes = [8, 8, 14], strides = [1, 1, 1]} : vector<8x8x16xf32> to vector<8x8x14xf32>
    %56 = vector.extract_strided_slice %54 {offsets = [0, 0, 0], sizes = [8, 8, 2], strides = [1, 1, 1]} : vector<8x8x16xf32> to vector<8x8x2xf32>
    %57 = tpu.concatenate %55, %56 in 2 : vector<8x8x14xf32>, vector<8x8x2xf32> -> vector<8x8x16xf32>
    %c2_i32 = arith.constant 2 : i32
    %58 = vector.broadcast %c2_i32 : i32 to vector<8x1xi32>
    %59 = arith.andi %44, %58 : vector<8x1xi32>
    %c0_i32_17 = arith.constant 0 : i32
    %60 = vector.broadcast %c0_i32_17 : i32 to vector<8x1xi32>
    %61 = arith.cmpi ne, %59, %60 : vector<8x1xi32>
    %62 = vector.shape_cast %61 : vector<8x1xi1> to vector<1x8x1xi1>
    %63 = vector.broadcast %62 : vector<1x8x1xi1> to vector<8x8x16xi1>
    %64 = arith.select %63, %57, %54 : vector<8x8x16xi1>, vector<8x8x16xf32>
    %65 = vector.extract_strided_slice %64 {offsets = [0, 0, 4], sizes = [8, 8, 12], strides = [1, 1, 1]} : vector<8x8x16xf32> to vector<8x8x12xf32>
    %66 = vector.extract_strided_slice %64 {offsets = [0, 0, 0], sizes = [8, 8, 4], strides = [1, 1, 1]} : vector<8x8x16xf32> to vector<8x8x4xf32>
    %67 = tpu.concatenate %65, %66 in 2 : vector<8x8x12xf32>, vector<8x8x4xf32> -> vector<8x8x16xf32>
    %c4_i32 = arith.constant 4 : i32
    %68 = vector.broadcast %c4_i32 : i32 to vector<8x1xi32>
    %69 = arith.andi %44, %68 : vector<8x1xi32>
    %c0_i32_18 = arith.constant 0 : i32
    %70 = vector.broadcast %c0_i32_18 : i32 to vector<8x1xi32>
    %71 = arith.cmpi ne, %69, %70 : vector<8x1xi32>
    %72 = vector.shape_cast %71 : vector<8x1xi1> to vector<1x8x1xi1>
    %73 = vector.broadcast %72 : vector<1x8x1xi1> to vector<8x8x16xi1>
    %74 = arith.select %73, %67, %64 : vector<8x8x16xi1>, vector<8x8x16xf32>
    %75 = vector.extract_strided_slice %74 {offsets = [0, 0, 0], sizes = [8, 8, 8], strides = [1, 1, 1]} : vector<8x8x16xf32> to vector<8x8x8xf32>
    %76 = arith.addf %37, %75 : vector<8x8x8xf32>
    %cst_19 = arith.constant 0.353553385 : f32
    %77 = vector.broadcast %cst_19 : f32 to vector<8x8x8xf32>
    %78 = arith.mulf %76, %77 : vector<8x8x8xf32>
    %cst_20 = arith.constant dense<0xFF800000> : vector<8x8xf32>
    %79 = vector.multi_reduction <maximumf>, %78, %cst_20 [2] : vector<8x8x8xf32> to vector<8x8xf32>
    %80 = vector.shape_cast %79 : vector<8x8xf32> to vector<8x8x1xf32>
    %81 = vector.broadcast %80 : vector<8x8x1xf32> to vector<8x8x8xf32>
    %82 = arith.subf %78, %81 : vector<8x8x8xf32>
    %83 = math.exp %82 : vector<8x8x8xf32>
    %cst_21 = arith.constant dense<0.000000e+00> : vector<8x8xf32>
    %84 = vector.multi_reduction <add>, %83, %cst_21 [2] : vector<8x8x8xf32> to vector<8x8xf32>
    %85 = vector.shape_cast %84 : vector<8x8xf32> to vector<8x8x1xf32>
    %86 = tpu.reciprocal %85 {approx = true} : vector<8x8x1xf32> -> vector<8x8x1xf32>
    %87 = vector.broadcast %86 : vector<8x8x1xf32> to vector<8x8x8xf32>
    %88 = arith.mulf %83, %87 : vector<8x8x8xf32>
    %89 = arith.truncf %88 : vector<8x8x8xf32> to vector<8x8x8xbf16>
    "tpu.trace_start"() <{level = 10 : i32, message = "hdk,hqk->hdq"}> : () -> ()
    %cst_22 = arith.constant dense<0.000000e+00> : vector<8x8x8xf32>
    %90 = tpu.matmul %36, %89, %cst_22 {dimension_numbers = #tpu.dot_dimension_numbers<[2], [2], [1], [1], [0, 0, 0, 1, 1, 1], [0], [0]>} : vector<8x8x8xbf16>, vector<8x8x8xbf16>, vector<8x8x8xf32> -> vector<8x8x8xf32>
    "tpu.trace_stop"() : () -> ()
    %91 = vector.shape_cast %90 : vector<8x8x8xf32> to vector<64x8xf32>
    %92 = tpu.transpose %91, [1, 0] : vector<64x8xf32> -> vector<8x64xf32>
    %93 = arith.truncf %92 : vector<8x64xf32> to vector<8x64xbf16>
    %c0_23 = arith.constant 0 : index
    %c0_24 = arith.constant 0 : index
    %94 = vector.load %arg6[%c0_23, %c0_24] : memref<64x64xbf16, #tpu.memory_space<vmem>>, vector<64x64xbf16>
    %cst_25 = arith.constant dense<0.000000e+00> : vector<8x64xf32>
    %95 = tpu.matmul %93, %94, %cst_25 {dimension_numbers = #tpu.dot_dimension_numbers<[1], [0], [0], [1], [0, 0, 1, 1], [], []>} : vector<8x64xbf16>, vector<64x64xbf16>, vector<8x64xf32> -> vector<8x64xf32>
    %c0_26 = arith.constant 0 : index
    %c0_27 = arith.constant 0 : index
    %96 = vector.load %arg7[%c0_26, %c0_27] : memref<1x64xf32, #tpu.memory_space<vmem>>, vector<1x64xf32>
    %97 = vector.broadcast %96 : vector<1x64xf32> to vector<8x64xf32>
    %98 = arith.addf %95, %97 : vector<8x64xf32>
    %99 = arith.addf %1, %98 : vector<8x64xf32>
    %c0_28 = arith.constant 0 : index
    %c0_29 = arith.constant 0 : index
    %c0_30 = arith.constant 0 : index
    %100 = vector.load %arg8[%c0_28, %c0_29, %c0_30] : memref<1x8x64xf32, #tpu.memory_space<vmem>>, vector<1x8x64xf32>
    %101 = vector.shape_cast %100 : vector<1x8x64xf32> to vector<8x64xf32>
    %102 = vector.shape_cast %99 : vector<8x64xf32> to vector<1x8x64xf32>
    tpu.vector_store %arg8[%c0_28, %c0_29, %c0_30], %102 {strides = array<i32>} : memref<1x8x64xf32, #tpu.memory_space<vmem>>, vector<1x8x64xf32>,
    return
  }
  func.func @transform_0(%arg0: i32) -> (i32, i32, i32) {
    %c0_i32 = arith.constant 0 : i32
    %c0_i32_0 = arith.constant 0 : i32
    %c0_i32_1 = arith.constant 0 : i32
    return %arg0, %c0_i32, %c0_i32_0 : i32, i32, i32
  }
  func.func @transform_1(%arg0: i32) -> (i32, i32) {
    %c0_i32 = arith.constant 0 : i32
    %c0_i32_0 = arith.constant 0 : i32
    %c0_i32_1 = arith.constant 0 : i32
    return %c0_i32, %c0_i32_0 : i32, i32
  }
  func.func @transform_2(%arg0: i32) -> (i32, i32) {
    %c0_i32 = arith.constant 0 : i32
    %c0_i32_0 = arith.constant 0 : i32
    %c0_i32_1 = arith.constant 0 : i32
    return %c0_i32, %c0_i32_0 : i32, i32
  }
  func.func @transform_3(%arg0: i32) -> (i32, i32) {
    %c0_i32 = arith.constant 0 : i32
    %c0_i32_0 = arith.constant 0 : i32
    %c0_i32_1 = arith.constant 0 : i32
    return %c0_i32, %c0_i32_0 : i32, i32
  }
  func.func @transform_4(%arg0: i32) -> (i32, i32) {
    %c0_i32 = arith.constant 0 : i32
    %c0_i32_0 = arith.constant 0 : i32
    %c0_i32_1 = arith.constant 0 : i32
    return %c0_i32, %c0_i32_0 : i32, i32
  }
  func.func @transform_5(%arg0: i32) -> (i32, i32) {
    %c0_i32 = arith.constant 0 : i32
    %c0_i32_0 = arith.constant 0 : i32
    %c0_i32_1 = arith.constant 0 : i32
    return %c0_i32, %c0_i32_0 : i32, i32
  }
  func.func @transform_6(%arg0: i32) -> (i32, i32) {
    %c0_i32 = arith.constant 0 : i32
    %c0_i32_0 = arith.constant 0 : i32
    %c0_i32_1 = arith.constant 0 : i32
    return %c0_i32, %c0_i32_0 : i32, i32
  }
  func.func @transform_7(%arg0: i32) -> (i32, i32, i32) {
    %c0_i32 = arith.constant 0 : i32
    %c0_i32_0 = arith.constant 0 : i32
    %c0_i32_1 = arith.constant 0 : i32
    return %arg0, %c0_i32, %c0_i32_0 : i32, i32, i32
  }
}

module attributes {stable_mosaic.version = 11 : i64} {
  func.func @_conv_module_kernel(%arg0: i32, %arg1: memref<1x8x64xf32, #tpu.memory_space<vmem>>, %arg2: memref<1x64xf32, #tpu.memory_space<vmem>>, %arg3: memref<1x64xf32, #tpu.memory_space<vmem>>, %arg4: memref<64x256xbf16, #tpu.memory_space<vmem>>, %arg5: memref<1x256xf32, #tpu.memory_space<vmem>>, %arg6: memref<31x128xf32, #tpu.memory_space<vmem>>, %arg7: memref<1x128xf32, #tpu.memory_space<vmem>>, %arg8: memref<1x128xf32, #tpu.memory_space<vmem>>, %arg9: memref<1x128xf32, #tpu.memory_space<vmem>>, %arg10: memref<128x64xbf16, #tpu.memory_space<vmem>>, %arg11: memref<1x64xf32, #tpu.memory_space<vmem>>, %arg12: memref<1x8x64xf32, #tpu.memory_space<vmem>>, %arg13: memref<40x128xf32, #tpu.memory_space<vmem>>) attributes {dimension_semantics = [#tpu.dimension_semantics<parallel>], iteration_bounds = array<i64: 2>, scalar_prefetch = 0 : i64, scratch_operands = 1 : i64, tpu.core_type = #tpu.core_type<tc>, window_params = [{transform_indices = @transform_0, window_bounds = array<i64: 1, 8, 64>}, {pipeline_mode = #tpu.pipeline_mode<synchronous>, transform_indices = @transform_1, window_bounds = array<i64: 1, 64>}, {pipeline_mode = #tpu.pipeline_mode<synchronous>, transform_indices = @transform_2, window_bounds = array<i64: 1, 64>}, {pipeline_mode = #tpu.pipeline_mode<synchronous>, transform_indices = @transform_3, window_bounds = array<i64: 64, 256>}, {pipeline_mode = #tpu.pipeline_mode<synchronous>, transform_indices = @transform_4, window_bounds = array<i64: 1, 256>}, {pipeline_mode = #tpu.pipeline_mode<synchronous>, transform_indices = @transform_5, window_bounds = array<i64: 31, 128>}, {pipeline_mode = #tpu.pipeline_mode<synchronous>, transform_indices = @transform_6, window_bounds = array<i64: 1, 128>}, {pipeline_mode = #tpu.pipeline_mode<synchronous>, transform_indices = @transform_7, window_bounds = array<i64: 1, 128>}, {pipeline_mode = #tpu.pipeline_mode<synchronous>, transform_indices = @transform_8, window_bounds = array<i64: 1, 128>}, {pipeline_mode = #tpu.pipeline_mode<synchronous>, transform_indices = @transform_9, window_bounds = array<i64: 128, 64>}, {pipeline_mode = #tpu.pipeline_mode<synchronous>, transform_indices = @transform_10, window_bounds = array<i64: 1, 64>}, {transform_indices = @transform_11, window_bounds = array<i64: 1, 8, 64>}]} {
    %c0 = arith.constant 0 : index
    %c0_0 = arith.constant 0 : index
    %c0_1 = arith.constant 0 : index
    %0 = vector.load %arg1[%c0, %c0_0, %c0_1] : memref<1x8x64xf32, #tpu.memory_space<vmem>>, vector<1x8x64xf32>
    %1 = vector.shape_cast %0 : vector<1x8x64xf32> to vector<8x64xf32>
    %c0_2 = arith.constant 0 : index
    %c0_3 = arith.constant 0 : index
    %2 = vector.load %arg2[%c0_2, %c0_3] : memref<1x64xf32, #tpu.memory_space<vmem>>, vector<1x64xf32>
    %c0_4 = arith.constant 0 : index
    %c0_5 = arith.constant 0 : index
    %3 = vector.load %arg3[%c0_4, %c0_5] : memref<1x64xf32, #tpu.memory_space<vmem>>, vector<1x64xf32>
    %cst = arith.constant dense<0.000000e+00> : vector<8xf32>
    %4 = vector.multi_reduction <add>, %1, %cst [1] : vector<8x64xf32> to vector<8xf32>
    %5 = vector.shape_cast %4 : vector<8xf32> to vector<8x1xf32>
    %cst_6 = arith.constant 6.400000e+01 : f32
    %6 = vector.broadcast %cst_6 : f32 to vector<8x1xf32>
    %7 = arith.divf %5, %6 : vector<8x1xf32>
    %8 = vector.broadcast %7 : vector<8x1xf32> to vector<8x64xf32>
    %9 = arith.subf %1, %8 : vector<8x64xf32>
    %10 = arith.mulf %9, %9 : vector<8x64xf32>
    %cst_7 = arith.constant dense<0.000000e+00> : vector<8xf32>
    %11 = vector.multi_reduction <add>, %10, %cst_7 [1] : vector<8x64xf32> to vector<8xf32>
    %12 = vector.shape_cast %11 : vector<8xf32> to vector<8x1xf32>
    %cst_8 = arith.constant 6.400000e+01 : f32
    %13 = vector.broadcast %cst_8 : f32 to vector<8x1xf32>
    %14 = arith.divf %12, %13 : vector<8x1xf32>
    %15 = vector.broadcast %7 : vector<8x1xf32> to vector<8x64xf32>
    %16 = arith.subf %1, %15 : vector<8x64xf32>
    %cst_9 = arith.constant 9.99999974E-6 : f32
    %17 = vector.broadcast %cst_9 : f32 to vector<8x1xf32>
    %18 = arith.addf %14, %17 : vector<8x1xf32>
    %19 = math.rsqrt %18 : vector<8x1xf32>
    %20 = vector.broadcast %19 : vector<8x1xf32> to vector<8x64xf32>
    %21 = arith.mulf %16, %20 : vector<8x64xf32>
    %22 = vector.broadcast %2 : vector<1x64xf32> to vector<8x64xf32>
    %23 = arith.mulf %21, %22 : vector<8x64xf32>
    %24 = vector.broadcast %3 : vector<1x64xf32> to vector<8x64xf32>
    %25 = arith.addf %23, %24 : vector<8x64xf32>
    %26 = arith.truncf %25 : vector<8x64xf32> to vector<8x64xbf16>
    %c0_10 = arith.constant 0 : index
    %c0_11 = arith.constant 0 : index
    %27 = vector.load %arg4[%c0_10, %c0_11] : memref<64x256xbf16, #tpu.memory_space<vmem>>, vector<64x256xbf16>
    %cst_12 = arith.constant dense<0.000000e+00> : vector<8x256xf32>
    %28 = tpu.matmul %26, %27, %cst_12 {dimension_numbers = #tpu.dot_dimension_numbers<[1], [0], [0], [1], [0, 0, 1, 1], [], []>} : vector<8x64xbf16>, vector<64x256xbf16>, vector<8x256xf32> -> vector<8x256xf32>
    %c0_13 = arith.constant 0 : index
    %c0_14 = arith.constant 0 : index
    %29 = vector.load %arg5[%c0_13, %c0_14] : memref<1x256xf32, #tpu.memory_space<vmem>>, vector<1x256xf32>
    %30 = vector.broadcast %29 : vector<1x256xf32> to vector<8x256xf32>
    %31 = arith.addf %28, %30 : vector<8x256xf32>
    %32 = vector.extract_strided_slice %31 {offsets = [0, 0], sizes = [8, 128], strides = [1, 1]} : vector<8x256xf32> to vector<8x128xf32>
    %33 = vector.extract_strided_slice %31 {offsets = [0, 128], sizes = [8, 128], strides = [1, 1]} : vector<8x256xf32> to vector<8x128xf32>
    %34 = arith.negf %33 : vector<8x128xf32>
    %35 = math.exp %34 : vector<8x128xf32>
    %cst_15 = arith.constant 1.000000e+00 : f32
    %36 = vector.broadcast %cst_15 : f32 to vector<8x128xf32>
    %37 = arith.addf %36, %35 : vector<8x128xf32>
    %38 = arith.divf %36, %37 : vector<8x128xf32>
    %39 = arith.mulf %32, %38 : vector<8x128xf32>
    %cst_16 = arith.constant 0.000000e+00 : f32
    %40 = vector.broadcast %cst_16 : f32 to vector<16x128xf32>
    %c0_17 = arith.constant 0 : index
    %c0_18 = arith.constant 0 : index
    %41 = vector.load %arg13[%c0_17, %c0_18] : memref<40x128xf32, #tpu.memory_space<vmem>>, vector<16x128xf32>
    tpu.vector_store %arg13[%c0_17, %c0_18], %40 {strides = array<i32>} : memref<40x128xf32, #tpu.memory_space<vmem>>, vector<16x128xf32>,
    %cst_19 = arith.constant 0.000000e+00 : f32
    %42 = vector.broadcast %cst_19 : f32 to vector<16x128xf32>
    %c24 = arith.constant 24 : index
    %c0_20 = arith.constant 0 : index
    %43 = vector.load %arg13[%c24, %c0_20] : memref<40x128xf32, #tpu.memory_space<vmem>>, vector<16x128xf32>
    tpu.vector_store %arg13[%c24, %c0_20], %42 {strides = array<i32>} : memref<40x128xf32, #tpu.memory_space<vmem>>, vector<16x128xf32>,
    %c16 = arith.constant 16 : index
    %c0_21 = arith.constant 0 : index
    %44 = vector.load %arg13[%c16, %c0_21] : memref<40x128xf32, #tpu.memory_space<vmem>>, vector<8x128xf32>
    tpu.vector_store %arg13[%c16, %c0_21], %39 {strides = array<i32>} : memref<40x128xf32, #tpu.memory_space<vmem>>, vector<8x128xf32>,
    %c0_22 = arith.constant 0 : index
    %c0_23 = arith.constant 0 : index
    %45 = vector.load %arg13[%c0_22, %c0_23] : memref<40x128xf32, #tpu.memory_space<vmem>>, vector<40x128xf32>
    %c0_24 = arith.constant 0 : index
    %c0_25 = arith.constant 0 : index
    %46 = vector.load %arg6[%c0_24, %c0_25] : memref<31x128xf32, #tpu.memory_space<vmem>>, vector<31x128xf32>
    %cst_26 = arith.constant 0.000000e+00 : f32
    %47 = vector.broadcast %cst_26 : f32 to vector<8x128xf32>
    %cst_27 = arith.constant 0.000000e+00 : f32
    %48 = vector.broadcast %cst_27 : f32 to vector<8x128xf32>
    %cst_28 = arith.constant 0.000000e+00 : f32
    %49 = vector.broadcast %cst_28 : f32 to vector<8x128xf32>
    %cst_29 = arith.constant 0.000000e+00 : f32
    %50 = vector.broadcast %cst_29 : f32 to vector<8x128xf32>
    %51 = vector.extract_strided_slice %45 {offsets = [1, 0], sizes = [8, 128], strides = [1, 1]} : vector<40x128xf32> to vector<8x128xf32>
    %52 = vector.extract_strided_slice %46 {offsets = [0, 0], sizes = [1, 128], strides = [1, 1]} : vector<31x128xf32> to vector<1x128xf32>
    %53 = vector.broadcast %52 : vector<1x128xf32> to vector<8x128xf32>
    %54 = arith.mulf %51, %53 : vector<8x128xf32>
    %55 = arith.addf %47, %54 : vector<8x128xf32>
    %56 = vector.extract_strided_slice %45 {offsets = [2, 0], sizes = [8, 128], strides = [1, 1]} : vector<40x128xf32> to vector<8x128xf32>
    %57 = vector.extract_strided_slice %46 {offsets = [1, 0], sizes = [1, 128], strides = [1, 1]} : vector<31x128xf32> to vector<1x128xf32>
    %58 = vector.broadcast %57 : vector<1x128xf32> to vector<8x128xf32>
    %59 = arith.mulf %56, %58 : vector<8x128xf32>
    %60 = arith.addf %48, %59 : vector<8x128xf32>
    %61 = vector.extract_strided_slice %45 {offsets = [3, 0], sizes = [8, 128], strides = [1, 1]} : vector<40x128xf32> to vector<8x128xf32>
    %62 = vector.extract_strided_slice %46 {offsets = [2, 0], sizes = [1, 128], strides = [1, 1]} : vector<31x128xf32> to vector<1x128xf32>
    %63 = vector.broadcast %62 : vector<1x128xf32> to vector<8x128xf32>
    %64 = arith.mulf %61, %63 : vector<8x128xf32>
    %65 = arith.addf %49, %64 : vector<8x128xf32>
    %66 = vector.extract_strided_slice %45 {offsets = [4, 0], sizes = [8, 128], strides = [1, 1]} : vector<40x128xf32> to vector<8x128xf32>
    %67 = vector.extract_strided_slice %46 {offsets = [3, 0], sizes = [1, 128], strides = [1, 1]} : vector<31x128xf32> to vector<1x128xf32>
    %68 = vector.broadcast %67 : vector<1x128xf32> to vector<8x128xf32>
    %69 = arith.mulf %66, %68 : vector<8x128xf32>
    %70 = arith.addf %50, %69 : vector<8x128xf32>
    %71 = vector.extract_strided_slice %45 {offsets = [5, 0], sizes = [8, 128], strides = [1, 1]} : vector<40x128xf32> to vector<8x128xf32>
    %72 = vector.extract_strided_slice %46 {offsets = [4, 0], sizes = [1, 128], strides = [1, 1]} : vector<31x128xf32> to vector<1x128xf32>
    %73 = vector.broadcast %72 : vector<1x128xf32> to vector<8x128xf32>
    %74 = arith.mulf %71, %73 : vector<8x128xf32>
    %75 = arith.addf %55, %74 : vector<8x128xf32>
    %76 = vector.extract_strided_slice %45 {offsets = [6, 0], sizes = [8, 128], strides = [1, 1]} : vector<40x128xf32> to vector<8x128xf32>
    %77 = vector.extract_strided_slice %46 {offsets = [5, 0], sizes = [1, 128], strides = [1, 1]} : vector<31x128xf32> to vector<1x128xf32>
    %78 = vector.broadcast %77 : vector<1x128xf32> to vector<8x128xf32>
    %79 = arith.mulf %76, %78 : vector<8x128xf32>
    %80 = arith.addf %60, %79 : vector<8x128xf32>
    %81 = vector.extract_strided_slice %45 {offsets = [7, 0], sizes = [8, 128], strides = [1, 1]} : vector<40x128xf32> to vector<8x128xf32>
    %82 = vector.extract_strided_slice %46 {offsets = [6, 0], sizes = [1, 128], strides = [1, 1]} : vector<31x128xf32> to vector<1x128xf32>
    %83 = vector.broadcast %82 : vector<1x128xf32> to vector<8x128xf32>
    %84 = arith.mulf %81, %83 : vector<8x128xf32>
    %85 = arith.addf %65, %84 : vector<8x128xf32>
    %86 = vector.extract_strided_slice %45 {offsets = [8, 0], sizes = [8, 128], strides = [1, 1]} : vector<40x128xf32> to vector<8x128xf32>
    %87 = vector.extract_strided_slice %46 {offsets = [7, 0], sizes = [1, 128], strides = [1, 1]} : vector<31x128xf32> to vector<1x128xf32>
    %88 = vector.broadcast %87 : vector<1x128xf32> to vector<8x128xf32>
    %89 = arith.mulf %86, %88 : vector<8x128xf32>
    %90 = arith.addf %70, %89 : vector<8x128xf32>
    %91 = vector.extract_strided_slice %45 {offsets = [9, 0], sizes = [8, 128], strides = [1, 1]} : vector<40x128xf32> to vector<8x128xf32>
    %92 = vector.extract_strided_slice %46 {offsets = [8, 0], sizes = [1, 128], strides = [1, 1]} : vector<31x128xf32> to vector<1x128xf32>
    %93 = vector.broadcast %92 : vector<1x128xf32> to vector<8x128xf32>
    %94 = arith.mulf %91, %93 : vector<8x128xf32>
    %95 = arith.addf %75, %94 : vector<8x128xf32>
    %96 = vector.extract_strided_slice %45 {offsets = [10, 0], sizes = [8, 128], strides = [1, 1]} : vector<40x128xf32> to vector<8x128xf32>
    %97 = vector.extract_strided_slice %46 {offsets = [9, 0], sizes = [1, 128], strides = [1, 1]} : vector<31x128xf32> to vector<1x128xf32>
    %98 = vector.broadcast %97 : vector<1x128xf32> to vector<8x128xf32>
    %99 = arith.mulf %96, %98 : vector<8x128xf32>
    %100 = arith.addf %80, %99 : vector<8x128xf32>
    %101 = vector.extract_strided_slice %45 {offsets = [11, 0], sizes = [8, 128], strides = [1, 1]} : vector<40x128xf32> to vector<8x128xf32>
    %102 = vector.extract_strided_slice %46 {offsets = [10, 0], sizes = [1, 128], strides = [1, 1]} : vector<31x128xf32> to vector<1x128xf32>
    %103 = vector.broadcast %102 : vector<1x128xf32> to vector<8x128xf32>
    %104 = arith.mulf %101, %103 : vector<8x128xf32>
    %105 = arith.addf %85, %104 : vector<8x128xf32>
    %106 = vector.extract_strided_slice %45 {offsets = [12, 0], sizes = [8, 128], strides = [1, 1]} : vector<40x128xf32> to vector<8x128xf32>
    %107 = vector.extract_strided_slice %46 {offsets = [11, 0], sizes = [1, 128], strides = [1, 1]} : vector<31x128xf32> to vector<1x128xf32>
    %108 = vector.broadcast %107 : vector<1x128xf32> to vector<8x128xf32>
    %109 = arith.mulf %106, %108 : vector<8x128xf32>
    %110 = arith.addf %90, %109 : vector<8x128xf32>
    %111 = vector.extract_strided_slice %45 {offsets = [13, 0], sizes = [8, 128], strides = [1, 1]} : vector<40x128xf32> to vector<8x128xf32>
    %112 = vector.extract_strided_slice %46 {offsets = [12, 0], sizes = [1, 128], strides = [1, 1]} : vector<31x128xf32> to vector<1x128xf32>
    %113 = vector.broadcast %112 : vector<1x128xf32> to vector<8x128xf32>
    %114 = arith.mulf %111, %113 : vector<8x128xf32>
    %115 = arith.addf %95, %114 : vector<8x128xf32>
    %116 = vector.extract_strided_slice %45 {offsets = [14, 0], sizes = [8, 128], strides = [1, 1]} : vector<40x128xf32> to vector<8x128xf32>
    %117 = vector.extract_strided_slice %46 {offsets = [13, 0], sizes = [1, 128], strides = [1, 1]} : vector<31x128xf32> to vector<1x128xf32>
    %118 = vector.broadcast %117 : vector<1x128xf32> to vector<8x128xf32>
    %119 = arith.mulf %116, %118 : vector<8x128xf32>
    %120 = arith.addf %100, %119 : vector<8x128xf32>
    %121 = vector.extract_strided_slice %45 {offsets = [15, 0], sizes = [8, 128], strides = [1, 1]} : vector<40x128xf32> to vector<8x128xf32>
    %122 = vector.extract_strided_slice %46 {offsets = [14, 0], sizes = [1, 128], strides = [1, 1]} : vector<31x128xf32> to vector<1x128xf32>
    %123 = vector.broadcast %122 : vector<1x128xf32> to vector<8x128xf32>
    %124 = arith.mulf %121, %123 : vector<8x128xf32>
    %125 = arith.addf %105, %124 : vector<8x128xf32>
    %126 = vector.extract_strided_slice %45 {offsets = [16, 0], sizes = [8, 128], strides = [1, 1]} : vector<40x128xf32> to vector<8x128xf32>
    %127 = vector.extract_strided_slice %46 {offsets = [15, 0], sizes = [1, 128], strides = [1, 1]} : vector<31x128xf32> to vector<1x128xf32>
    %128 = vector.broadcast %127 : vector<1x128xf32> to vector<8x128xf32>
    %129 = arith.mulf %126, %128 : vector<8x128xf32>
    %130 = arith.addf %110, %129 : vector<8x128xf32>
    %131 = vector.extract_strided_slice %45 {offsets = [17, 0], sizes = [8, 128], strides = [1, 1]} : vector<40x128xf32> to vector<8x128xf32>
    %132 = vector.extract_strided_slice %46 {offsets = [16, 0], sizes = [1, 128], strides = [1, 1]} : vector<31x128xf32> to vector<1x128xf32>
    %133 = vector.broadcast %132 : vector<1x128xf32> to vector<8x128xf32>
    %134 = arith.mulf %131, %133 : vector<8x128xf32>
    %135 = arith.addf %115, %134 : vector<8x128xf32>
    %136 = vector.extract_strided_slice %45 {offsets = [18, 0], sizes = [8, 128], strides = [1, 1]} : vector<40x128xf32> to vector<8x128xf32>
    %137 = vector.extract_strided_slice %46 {offsets = [17, 0], sizes = [1, 128], strides = [1, 1]} : vector<31x128xf32> to vector<1x128xf32>
    %138 = vector.broadcast %137 : vector<1x128xf32> to vector<8x128xf32>
    %139 = arith.mulf %136, %138 : vector<8x128xf32>
    %140 = arith.addf %120, %139 : vector<8x128xf32>
    %141 = vector.extract_strided_slice %45 {offsets = [19, 0], sizes = [8, 128], strides = [1, 1]} : vector<40x128xf32> to vector<8x128xf32>
    %142 = vector.extract_strided_slice %46 {offsets = [18, 0], sizes = [1, 128], strides = [1, 1]} : vector<31x128xf32> to vector<1x128xf32>
    %143 = vector.broadcast %142 : vector<1x128xf32> to vector<8x128xf32>
    %144 = arith.mulf %141, %143 : vector<8x128xf32>
    %145 = arith.addf %125, %144 : vector<8x128xf32>
    %146 = vector.extract_strided_slice %45 {offsets = [20, 0], sizes = [8, 128], strides = [1, 1]} : vector<40x128xf32> to vector<8x128xf32>
    %147 = vector.extract_strided_slice %46 {offsets = [19, 0], sizes = [1, 128], strides = [1, 1]} : vector<31x128xf32> to vector<1x128xf32>
    %148 = vector.broadcast %147 : vector<1x128xf32> to vector<8x128xf32>
    %149 = arith.mulf %146, %148 : vector<8x128xf32>
    %150 = arith.addf %130, %149 : vector<8x128xf32>
    %151 = vector.extract_strided_slice %45 {offsets = [21, 0], sizes = [8, 128], strides = [1, 1]} : vector<40x128xf32> to vector<8x128xf32>
    %152 = vector.extract_strided_slice %46 {offsets = [20, 0], sizes = [1, 128], strides = [1, 1]} : vector<31x128xf32> to vector<1x128xf32>
    %153 = vector.broadcast %152 : vector<1x128xf32> to vector<8x128xf32>
    %154 = arith.mulf %151, %153 : vector<8x128xf32>
    %155 = arith.addf %135, %154 : vector<8x128xf32>
    %156 = vector.extract_strided_slice %45 {offsets = [22, 0], sizes = [8, 128], strides = [1, 1]} : vector<40x128xf32> to vector<8x128xf32>
    %157 = vector.extract_strided_slice %46 {offsets = [21, 0], sizes = [1, 128], strides = [1, 1]} : vector<31x128xf32> to vector<1x128xf32>
    %158 = vector.broadcast %157 : vector<1x128xf32> to vector<8x128xf32>
    %159 = arith.mulf %156, %158 : vector<8x128xf32>
    %160 = arith.addf %140, %159 : vector<8x128xf32>
    %161 = vector.extract_strided_slice %45 {offsets = [23, 0], sizes = [8, 128], strides = [1, 1]} : vector<40x128xf32> to vector<8x128xf32>
    %162 = vector.extract_strided_slice %46 {offsets = [22, 0], sizes = [1, 128], strides = [1, 1]} : vector<31x128xf32> to vector<1x128xf32>
    %163 = vector.broadcast %162 : vector<1x128xf32> to vector<8x128xf32>
    %164 = arith.mulf %161, %163 : vector<8x128xf32>
    %165 = arith.addf %145, %164 : vector<8x128xf32>
    %166 = vector.extract_strided_slice %45 {offsets = [24, 0], sizes = [8, 128], strides = [1, 1]} : vector<40x128xf32> to vector<8x128xf32>
    %167 = vector.extract_strided_slice %46 {offsets = [23, 0], sizes = [1, 128], strides = [1, 1]} : vector<31x128xf32> to vector<1x128xf32>
    %168 = vector.broadcast %167 : vector<1x128xf32> to vector<8x128xf32>
    %169 = arith.mulf %166, %168 : vector<8x128xf32>
    %170 = arith.addf %150, %169 : vector<8x128xf32>
    %171 = vector.extract_strided_slice %45 {offsets = [25, 0], sizes = [8, 128], strides = [1, 1]} : vector<40x128xf32> to vector<8x128xf32>
    %172 = vector.extract_strided_slice %46 {offsets = [24, 0], sizes = [1, 128], strides = [1, 1]} : vector<31x128xf32> to vector<1x128xf32>
    %173 = vector.broadcast %172 : vector<1x128xf32> to vector<8x128xf32>
    %174 = arith.mulf %171, %173 : vector<8x128xf32>
    %175 = arith.addf %155, %174 : vector<8x128xf32>
    %176 = vector.extract_strided_slice %45 {offsets = [26, 0], sizes = [8, 128], strides = [1, 1]} : vector<40x128xf32> to vector<8x128xf32>
    %177 = vector.extract_strided_slice %46 {offsets = [25, 0], sizes = [1, 128], strides = [1, 1]} : vector<31x128xf32> to vector<1x128xf32>
    %178 = vector.broadcast %177 : vector<1x128xf32> to vector<8x128xf32>
    %179 = arith.mulf %176, %178 : vector<8x128xf32>
    %180 = arith.addf %160, %179 : vector<8x128xf32>
    %181 = vector.extract_strided_slice %45 {offsets = [27, 0], sizes = [8, 128], strides = [1, 1]} : vector<40x128xf32> to vector<8x128xf32>
    %182 = vector.extract_strided_slice %46 {offsets = [26, 0], sizes = [1, 128], strides = [1, 1]} : vector<31x128xf32> to vector<1x128xf32>
    %183 = vector.broadcast %182 : vector<1x128xf32> to vector<8x128xf32>
    %184 = arith.mulf %181, %183 : vector<8x128xf32>
    %185 = arith.addf %165, %184 : vector<8x128xf32>
    %186 = vector.extract_strided_slice %45 {offsets = [28, 0], sizes = [8, 128], strides = [1, 1]} : vector<40x128xf32> to vector<8x128xf32>
    %187 = vector.extract_strided_slice %46 {offsets = [27, 0], sizes = [1, 128], strides = [1, 1]} : vector<31x128xf32> to vector<1x128xf32>
    %188 = vector.broadcast %187 : vector<1x128xf32> to vector<8x128xf32>
    %189 = arith.mulf %186, %188 : vector<8x128xf32>
    %190 = arith.addf %170, %189 : vector<8x128xf32>
    %191 = vector.extract_strided_slice %45 {offsets = [29, 0], sizes = [8, 128], strides = [1, 1]} : vector<40x128xf32> to vector<8x128xf32>
    %192 = vector.extract_strided_slice %46 {offsets = [28, 0], sizes = [1, 128], strides = [1, 1]} : vector<31x128xf32> to vector<1x128xf32>
    %193 = vector.broadcast %192 : vector<1x128xf32> to vector<8x128xf32>
    %194 = arith.mulf %191, %193 : vector<8x128xf32>
    %195 = arith.addf %175, %194 : vector<8x128xf32>
    %196 = vector.extract_strided_slice %45 {offsets = [30, 0], sizes = [8, 128], strides = [1, 1]} : vector<40x128xf32> to vector<8x128xf32>
    %197 = vector.extract_strided_slice %46 {offsets = [29, 0], sizes = [1, 128], strides = [1, 1]} : vector<31x128xf32> to vector<1x128xf32>
    %198 = vector.broadcast %197 : vector<1x128xf32> to vector<8x128xf32>
    %199 = arith.mulf %196, %198 : vector<8x128xf32>
    %200 = arith.addf %180, %199 : vector<8x128xf32>
    %201 = vector.extract_strided_slice %45 {offsets = [31, 0], sizes = [8, 128], strides = [1, 1]} : vector<40x128xf32> to vector<8x128xf32>
    %202 = vector.extract_strided_slice %46 {offsets = [30, 0], sizes = [1, 128], strides = [1, 1]} : vector<31x128xf32> to vector<1x128xf32>
    %203 = vector.broadcast %202 : vector<1x128xf32> to vector<8x128xf32>
    %204 = arith.mulf %201, %203 : vector<8x128xf32>
    %205 = arith.addf %185, %204 : vector<8x128xf32>
    %206 = arith.addf %195, %200 : vector<8x128xf32>
    %207 = arith.addf %205, %190 : vector<8x128xf32>
    %208 = arith.addf %206, %207 : vector<8x128xf32>
    %c0_30 = arith.constant 0 : index
    %c0_31 = arith.constant 0 : index
    %209 = vector.load %arg7[%c0_30, %c0_31] : memref<1x128xf32, #tpu.memory_space<vmem>>, vector<1x128xf32>
    %210 = vector.broadcast %209 : vector<1x128xf32> to vector<8x128xf32>
    %211 = arith.addf %208, %210 : vector<8x128xf32>
    %c0_32 = arith.constant 0 : index
    %c0_33 = arith.constant 0 : index
    %212 = vector.load %arg8[%c0_32, %c0_33] : memref<1x128xf32, #tpu.memory_space<vmem>>, vector<1x128xf32>
    %213 = vector.broadcast %212 : vector<1x128xf32> to vector<8x128xf32>
    %214 = arith.mulf %211, %213 : vector<8x128xf32>
    %c0_34 = arith.constant 0 : index
    %c0_35 = arith.constant 0 : index
    %215 = vector.load %arg9[%c0_34, %c0_35] : memref<1x128xf32, #tpu.memory_space<vmem>>, vector<1x128xf32>
    %216 = vector.broadcast %215 : vector<1x128xf32> to vector<8x128xf32>
    %217 = arith.addf %214, %216 : vector<8x128xf32>
    %218 = arith.negf %217 : vector<8x128xf32>
    %219 = math.exp %218 : vector<8x128xf32>
    %cst_36 = arith.constant 1.000000e+00 : f32
    %220 = vector.broadcast %cst_36 : f32 to vector<8x128xf32>
    %221 = arith.addf %220, %219 : vector<8x128xf32>
    %222 = arith.divf %220, %221 : vector<8x128xf32>
    %223 = arith.mulf %217, %222 : vector<8x128xf32>
    %224 = arith.truncf %223 : vector<8x128xf32> to vector<8x128xbf16>
    %c0_37 = arith.constant 0 : index
    %c0_38 = arith.constant 0 : index
    %225 = vector.load %arg10[%c0_37, %c0_38] : memref<128x64xbf16, #tpu.memory_space<vmem>>, vector<128x64xbf16>
    %cst_39 = arith.constant dense<0.000000e+00> : vector<8x64xf32>
    %226 = tpu.matmul %224, %225, %cst_39 {dimension_numbers = #tpu.dot_dimension_numbers<[1], [0], [0], [1], [0, 0, 1, 1], [], []>} : vector<8x128xbf16>, vector<128x64xbf16>, vector<8x64xf32> -> vector<8x64xf32>
    %c0_40 = arith.constant 0 : index
    %c0_41 = arith.constant 0 : index
    %227 = vector.load %arg11[%c0_40, %c0_41] : memref<1x64xf32, #tpu.memory_space<vmem>>, vector<1x64xf32>
    %228 = vector.broadcast %227 : vector<1x64xf32> to vector<8x64xf32>
    %229 = arith.addf %226, %228 : vector<8x64xf32>
    %230 = arith.addf %1, %229 : vector<8x64xf32>
    %c0_42 = arith.constant 0 : index
    %c0_43 = arith.constant 0 : index
    %c0_44 = arith.constant 0 : index
    %231 = vector.load %arg12[%c0_42, %c0_43, %c0_44] : memref<1x8x64xf32, #tpu.memory_space<vmem>>, vector<1x8x64xf32>
    %232 = vector.shape_cast %231 : vector<1x8x64xf32> to vector<8x64xf32>
    %233 = vector.shape_cast %230 : vector<8x64xf32> to vector<1x8x64xf32>
    tpu.vector_store %arg12[%c0_42, %c0_43, %c0_44], %233 {strides = array<i32>} : memref<1x8x64xf32, #tpu.memory_space<vmem>>, vector<1x8x64xf32>,
    return
  }
  func.func @transform_0(%arg0: i32) -> (i32, i32, i32) {
    %c0_i32 = arith.constant 0 : i32
    %c0_i32_0 = arith.constant 0 : i32
    %c0_i32_1 = arith.constant 0 : i32
    return %arg0, %c0_i32, %c0_i32_0 : i32, i32, i32
  }
  func.func @transform_1(%arg0: i32) -> (i32, i32) {
    %c0_i32 = arith.constant 0 : i32
    %c0_i32_0 = arith.constant 0 : i32
    %c0_i32_1 = arith.constant 0 : i32
    return %c0_i32, %c0_i32_0 : i32, i32
  }
  func.func @transform_2(%arg0: i32) -> (i32, i32) {
    %c0_i32 = arith.constant 0 : i32
    %c0_i32_0 = arith.constant 0 : i32
    %c0_i32_1 = arith.constant 0 : i32
    return %c0_i32, %c0_i32_0 : i32, i32
  }
  func.func @transform_3(%arg0: i32) -> (i32, i32) {
    %c0_i32 = arith.constant 0 : i32
    %c0_i32_0 = arith.constant 0 : i32
    %c0_i32_1 = arith.constant 0 : i32
    return %c0_i32, %c0_i32_0 : i32, i32
  }
  func.func @transform_4(%arg0: i32) -> (i32, i32) {
    %c0_i32 = arith.constant 0 : i32
    %c0_i32_0 = arith.constant 0 : i32
    %c0_i32_1 = arith.constant 0 : i32
    return %c0_i32, %c0_i32_0 : i32, i32
  }
  func.func @transform_5(%arg0: i32) -> (i32, i32) {
    %c0_i32 = arith.constant 0 : i32
    %c0_i32_0 = arith.constant 0 : i32
    %c0_i32_1 = arith.constant 0 : i32
    return %c0_i32, %c0_i32_0 : i32, i32
  }
  func.func @transform_6(%arg0: i32) -> (i32, i32) {
    %c0_i32 = arith.constant 0 : i32
    %c0_i32_0 = arith.constant 0 : i32
    %c0_i32_1 = arith.constant 0 : i32
    return %c0_i32, %c0_i32_0 : i32, i32
  }
  func.func @transform_7(%arg0: i32) -> (i32, i32) {
    %c0_i32 = arith.constant 0 : i32
    %c0_i32_0 = arith.constant 0 : i32
    %c0_i32_1 = arith.constant 0 : i32
    return %c0_i32, %c0_i32_0 : i32, i32
  }
  func.func @transform_8(%arg0: i32) -> (i32, i32) {
    %c0_i32 = arith.constant 0 : i32
    %c0_i32_0 = arith.constant 0 : i32
    %c0_i32_1 = arith.constant 0 : i32
    return %c0_i32, %c0_i32_0 : i32, i32
  }
  func.func @transform_9(%arg0: i32) -> (i32, i32) {
    %c0_i32 = arith.constant 0 : i32
    %c0_i32_0 = arith.constant 0 : i32
    %c0_i32_1 = arith.constant 0 : i32
    return %c0_i32, %c0_i32_0 : i32, i32
  }
  func.func @transform_10(%arg0: i32) -> (i32, i32) {
    %c0_i32 = arith.constant 0 : i32
    %c0_i32_0 = arith.constant 0 : i32
    %c0_i32_1 = arith.constant 0 : i32
    return %c0_i32, %c0_i32_0 : i32, i32
  }
  func.func @transform_11(%arg0: i32) -> (i32, i32, i32) {
    %c0_i32 = arith.constant 0 : i32
    %c0_i32_0 = arith.constant 0 : i32
    %c0_i32_1 = arith.constant 0 : i32
    return %arg0, %c0_i32, %c0_i32_0 : i32, i32, i32
  }
}

module attributes {stable_mosaic.version = 11 : i64} {
  func.func @_ff_final_kernel(%arg0: i32, %arg1: memref<16x64xf32, #tpu.memory_space<vmem>>, %arg2: memref<1x64xf32, #tpu.memory_space<vmem>>, %arg3: memref<1x64xf32, #tpu.memory_space<vmem>>, %arg4: memref<64x256xbf16, #tpu.memory_space<vmem>>, %arg5: memref<1x256xf32, #tpu.memory_space<vmem>>, %arg6: memref<256x64xbf16, #tpu.memory_space<vmem>>, %arg7: memref<1x64xf32, #tpu.memory_space<vmem>>, %arg8: memref<1x64xf32, #tpu.memory_space<vmem>>, %arg9: memref<1x64xf32, #tpu.memory_space<vmem>>, %arg10: memref<64x128xbf16, #tpu.memory_space<vmem>>, %arg11: memref<1x128xf32, #tpu.memory_space<vmem>>, %arg12: memref<16x128xf32, #tpu.memory_space<vmem>>) attributes {dimension_semantics = [#tpu.dimension_semantics<parallel>], iteration_bounds = array<i64: 1>, scalar_prefetch = 0 : i64, scratch_operands = 0 : i64, tpu.core_type = #tpu.core_type<tc>, window_params = [{transform_indices = @transform_0, window_bounds = array<i64: 16, 64>}, {pipeline_mode = #tpu.pipeline_mode<synchronous>, transform_indices = @transform_1, window_bounds = array<i64: 1, 64>}, {pipeline_mode = #tpu.pipeline_mode<synchronous>, transform_indices = @transform_2, window_bounds = array<i64: 1, 64>}, {pipeline_mode = #tpu.pipeline_mode<synchronous>, transform_indices = @transform_3, window_bounds = array<i64: 64, 256>}, {pipeline_mode = #tpu.pipeline_mode<synchronous>, transform_indices = @transform_4, window_bounds = array<i64: 1, 256>}, {pipeline_mode = #tpu.pipeline_mode<synchronous>, transform_indices = @transform_5, window_bounds = array<i64: 256, 64>}, {pipeline_mode = #tpu.pipeline_mode<synchronous>, transform_indices = @transform_6, window_bounds = array<i64: 1, 64>}, {pipeline_mode = #tpu.pipeline_mode<synchronous>, transform_indices = @transform_7, window_bounds = array<i64: 1, 64>}, {pipeline_mode = #tpu.pipeline_mode<synchronous>, transform_indices = @transform_8, window_bounds = array<i64: 1, 64>}, {pipeline_mode = #tpu.pipeline_mode<synchronous>, transform_indices = @transform_9, window_bounds = array<i64: 64, 128>}, {pipeline_mode = #tpu.pipeline_mode<synchronous>, transform_indices = @transform_10, window_bounds = array<i64: 1, 128>}, {transform_indices = @transform_11, window_bounds = array<i64: 16, 128>}]} {
    %c0 = arith.constant 0 : index
    %c0_0 = arith.constant 0 : index
    %0 = vector.load %arg1[%c0, %c0_0] : memref<16x64xf32, #tpu.memory_space<vmem>>, vector<16x64xf32>
    %c0_1 = arith.constant 0 : index
    %c0_2 = arith.constant 0 : index
    %1 = vector.load %arg2[%c0_1, %c0_2] : memref<1x64xf32, #tpu.memory_space<vmem>>, vector<1x64xf32>
    %c0_3 = arith.constant 0 : index
    %c0_4 = arith.constant 0 : index
    %2 = vector.load %arg3[%c0_3, %c0_4] : memref<1x64xf32, #tpu.memory_space<vmem>>, vector<1x64xf32>
    %cst = arith.constant dense<0.000000e+00> : vector<16xf32>
    %3 = vector.multi_reduction <add>, %0, %cst [1] : vector<16x64xf32> to vector<16xf32>
    %4 = vector.shape_cast %3 : vector<16xf32> to vector<16x1xf32>
    %cst_5 = arith.constant 6.400000e+01 : f32
    %5 = vector.broadcast %cst_5 : f32 to vector<16x1xf32>
    %6 = arith.divf %4, %5 : vector<16x1xf32>
    %7 = vector.broadcast %6 : vector<16x1xf32> to vector<16x64xf32>
    %8 = arith.subf %0, %7 : vector<16x64xf32>
    %9 = arith.mulf %8, %8 : vector<16x64xf32>
    %cst_6 = arith.constant dense<0.000000e+00> : vector<16xf32>
    %10 = vector.multi_reduction <add>, %9, %cst_6 [1] : vector<16x64xf32> to vector<16xf32>
    %11 = vector.shape_cast %10 : vector<16xf32> to vector<16x1xf32>
    %cst_7 = arith.constant 6.400000e+01 : f32
    %12 = vector.broadcast %cst_7 : f32 to vector<16x1xf32>
    %13 = arith.divf %11, %12 : vector<16x1xf32>
    %14 = vector.broadcast %6 : vector<16x1xf32> to vector<16x64xf32>
    %15 = arith.subf %0, %14 : vector<16x64xf32>
    %cst_8 = arith.constant 9.99999974E-6 : f32
    %16 = vector.broadcast %cst_8 : f32 to vector<16x1xf32>
    %17 = arith.addf %13, %16 : vector<16x1xf32>
    %18 = math.rsqrt %17 : vector<16x1xf32>
    %19 = vector.broadcast %18 : vector<16x1xf32> to vector<16x64xf32>
    %20 = arith.mulf %15, %19 : vector<16x64xf32>
    %21 = vector.broadcast %1 : vector<1x64xf32> to vector<16x64xf32>
    %22 = arith.mulf %20, %21 : vector<16x64xf32>
    %23 = vector.broadcast %2 : vector<1x64xf32> to vector<16x64xf32>
    %24 = arith.addf %22, %23 : vector<16x64xf32>
    %25 = arith.truncf %24 : vector<16x64xf32> to vector<16x64xbf16>
    %c0_9 = arith.constant 0 : index
    %c0_10 = arith.constant 0 : index
    %26 = vector.load %arg4[%c0_9, %c0_10] : memref<64x256xbf16, #tpu.memory_space<vmem>>, vector<64x256xbf16>
    %cst_11 = arith.constant dense<0.000000e+00> : vector<16x256xf32>
    %27 = tpu.matmul %25, %26, %cst_11 {dimension_numbers = #tpu.dot_dimension_numbers<[1], [0], [0], [1], [0, 0, 1, 1], [], []>} : vector<16x64xbf16>, vector<64x256xbf16>, vector<16x256xf32> -> vector<16x256xf32>
    %c0_12 = arith.constant 0 : index
    %c0_13 = arith.constant 0 : index
    %28 = vector.load %arg5[%c0_12, %c0_13] : memref<1x256xf32, #tpu.memory_space<vmem>>, vector<1x256xf32>
    %29 = vector.broadcast %28 : vector<1x256xf32> to vector<16x256xf32>
    %30 = arith.addf %27, %29 : vector<16x256xf32>
    %31 = arith.negf %30 : vector<16x256xf32>
    %32 = math.exp %31 : vector<16x256xf32>
    %cst_14 = arith.constant 1.000000e+00 : f32
    %33 = vector.broadcast %cst_14 : f32 to vector<16x256xf32>
    %34 = arith.addf %33, %32 : vector<16x256xf32>
    %35 = arith.divf %33, %34 : vector<16x256xf32>
    %36 = arith.mulf %30, %35 : vector<16x256xf32>
    %37 = arith.truncf %36 : vector<16x256xf32> to vector<16x256xbf16>
    %c0_15 = arith.constant 0 : index
    %c0_16 = arith.constant 0 : index
    %38 = vector.load %arg6[%c0_15, %c0_16] : memref<256x64xbf16, #tpu.memory_space<vmem>>, vector<256x64xbf16>
    %cst_17 = arith.constant dense<0.000000e+00> : vector<16x64xf32>
    %39 = tpu.matmul %37, %38, %cst_17 {dimension_numbers = #tpu.dot_dimension_numbers<[1], [0], [0], [1], [0, 0, 1, 1], [], []>} : vector<16x256xbf16>, vector<256x64xbf16>, vector<16x64xf32> -> vector<16x64xf32>
    %c0_18 = arith.constant 0 : index
    %c0_19 = arith.constant 0 : index
    %40 = vector.load %arg7[%c0_18, %c0_19] : memref<1x64xf32, #tpu.memory_space<vmem>>, vector<1x64xf32>
    %41 = vector.broadcast %40 : vector<1x64xf32> to vector<16x64xf32>
    %42 = arith.addf %39, %41 : vector<16x64xf32>
    %cst_20 = arith.constant 5.000000e-01 : f32
    %43 = vector.broadcast %cst_20 : f32 to vector<16x64xf32>
    %44 = arith.mulf %43, %42 : vector<16x64xf32>
    %45 = arith.addf %0, %44 : vector<16x64xf32>
    %c0_21 = arith.constant 0 : index
    %c0_22 = arith.constant 0 : index
    %46 = vector.load %arg8[%c0_21, %c0_22] : memref<1x64xf32, #tpu.memory_space<vmem>>, vector<1x64xf32>
    %c0_23 = arith.constant 0 : index
    %c0_24 = arith.constant 0 : index
    %47 = vector.load %arg9[%c0_23, %c0_24] : memref<1x64xf32, #tpu.memory_space<vmem>>, vector<1x64xf32>
    %cst_25 = arith.constant dense<0.000000e+00> : vector<16xf32>
    %48 = vector.multi_reduction <add>, %45, %cst_25 [1] : vector<16x64xf32> to vector<16xf32>
    %49 = vector.shape_cast %48 : vector<16xf32> to vector<16x1xf32>
    %cst_26 = arith.constant 6.400000e+01 : f32
    %50 = vector.broadcast %cst_26 : f32 to vector<16x1xf32>
    %51 = arith.divf %49, %50 : vector<16x1xf32>
    %52 = vector.broadcast %51 : vector<16x1xf32> to vector<16x64xf32>
    %53 = arith.subf %45, %52 : vector<16x64xf32>
    %54 = arith.mulf %53, %53 : vector<16x64xf32>
    %cst_27 = arith.constant dense<0.000000e+00> : vector<16xf32>
    %55 = vector.multi_reduction <add>, %54, %cst_27 [1] : vector<16x64xf32> to vector<16xf32>
    %56 = vector.shape_cast %55 : vector<16xf32> to vector<16x1xf32>
    %cst_28 = arith.constant 6.400000e+01 : f32
    %57 = vector.broadcast %cst_28 : f32 to vector<16x1xf32>
    %58 = arith.divf %56, %57 : vector<16x1xf32>
    %59 = vector.broadcast %51 : vector<16x1xf32> to vector<16x64xf32>
    %60 = arith.subf %45, %59 : vector<16x64xf32>
    %cst_29 = arith.constant 9.99999974E-6 : f32
    %61 = vector.broadcast %cst_29 : f32 to vector<16x1xf32>
    %62 = arith.addf %58, %61 : vector<16x1xf32>
    %63 = math.rsqrt %62 : vector<16x1xf32>
    %64 = vector.broadcast %63 : vector<16x1xf32> to vector<16x64xf32>
    %65 = arith.mulf %60, %64 : vector<16x64xf32>
    %66 = vector.broadcast %46 : vector<1x64xf32> to vector<16x64xf32>
    %67 = arith.mulf %65, %66 : vector<16x64xf32>
    %68 = vector.broadcast %47 : vector<1x64xf32> to vector<16x64xf32>
    %69 = arith.addf %67, %68 : vector<16x64xf32>
    %70 = arith.truncf %69 : vector<16x64xf32> to vector<16x64xbf16>
    %c0_30 = arith.constant 0 : index
    %c0_31 = arith.constant 0 : index
    %71 = vector.load %arg10[%c0_30, %c0_31] : memref<64x128xbf16, #tpu.memory_space<vmem>>, vector<64x128xbf16>
    %cst_32 = arith.constant dense<0.000000e+00> : vector<16x128xf32>
    %72 = tpu.matmul %70, %71, %cst_32 {dimension_numbers = #tpu.dot_dimension_numbers<[1], [0], [0], [1], [0, 0, 1, 1], [], []>} : vector<16x64xbf16>, vector<64x128xbf16>, vector<16x128xf32> -> vector<16x128xf32>
    %c0_33 = arith.constant 0 : index
    %c0_34 = arith.constant 0 : index
    %73 = vector.load %arg11[%c0_33, %c0_34] : memref<1x128xf32, #tpu.memory_space<vmem>>, vector<1x128xf32>
    %74 = vector.broadcast %73 : vector<1x128xf32> to vector<16x128xf32>
    %75 = arith.addf %72, %74 : vector<16x128xf32>
    %c0_35 = arith.constant 0 : index
    %c0_36 = arith.constant 0 : index
    %76 = vector.load %arg12[%c0_35, %c0_36] : memref<16x128xf32, #tpu.memory_space<vmem>>, vector<16x128xf32>
    tpu.vector_store %arg12[%c0_35, %c0_36], %75 {strides = array<i32>} : memref<16x128xf32, #tpu.memory_space<vmem>>, vector<16x128xf32>,
    return
  }
  func.func @transform_0(%arg0: i32) -> (i32, i32) {
    %c0_i32 = arith.constant 0 : i32
    %c0_i32_0 = arith.constant 0 : i32
    return %arg0, %c0_i32 : i32, i32
  }
  func.func @transform_1(%arg0: i32) -> (i32, i32) {
    %c0_i32 = arith.constant 0 : i32
    %c0_i32_0 = arith.constant 0 : i32
    %c0_i32_1 = arith.constant 0 : i32
    return %c0_i32, %c0_i32_0 : i32, i32
  }
  func.func @transform_2(%arg0: i32) -> (i32, i32) {
    %c0_i32 = arith.constant 0 : i32
    %c0_i32_0 = arith.constant 0 : i32
    %c0_i32_1 = arith.constant 0 : i32
    return %c0_i32, %c0_i32_0 : i32, i32
  }
  func.func @transform_3(%arg0: i32) -> (i32, i32) {
    %c0_i32 = arith.constant 0 : i32
    %c0_i32_0 = arith.constant 0 : i32
    %c0_i32_1 = arith.constant 0 : i32
    return %c0_i32, %c0_i32_0 : i32, i32
  }
  func.func @transform_4(%arg0: i32) -> (i32, i32) {
    %c0_i32 = arith.constant 0 : i32
    %c0_i32_0 = arith.constant 0 : i32
    %c0_i32_1 = arith.constant 0 : i32
    return %c0_i32, %c0_i32_0 : i32, i32
  }
  func.func @transform_5(%arg0: i32) -> (i32, i32) {
    %c0_i32 = arith.constant 0 : i32
    %c0_i32_0 = arith.constant 0 : i32
    %c0_i32_1 = arith.constant 0 : i32
    return %c0_i32, %c0_i32_0 : i32, i32
  }
  func.func @transform_6(%arg0: i32) -> (i32, i32) {
    %c0_i32 = arith.constant 0 : i32
    %c0_i32_0 = arith.constant 0 : i32
    %c0_i32_1 = arith.constant 0 : i32
    return %c0_i32, %c0_i32_0 : i32, i32
  }
  func.func @transform_7(%arg0: i32) -> (i32, i32) {
    %c0_i32 = arith.constant 0 : i32
    %c0_i32_0 = arith.constant 0 : i32
    %c0_i32_1 = arith.constant 0 : i32
    return %c0_i32, %c0_i32_0 : i32, i32
  }
  func.func @transform_8(%arg0: i32) -> (i32, i32) {
    %c0_i32 = arith.constant 0 : i32
    %c0_i32_0 = arith.constant 0 : i32
    %c0_i32_1 = arith.constant 0 : i32
    return %c0_i32, %c0_i32_0 : i32, i32
  }
  func.func @transform_9(%arg0: i32) -> (i32, i32) {
    %c0_i32 = arith.constant 0 : i32
    %c0_i32_0 = arith.constant 0 : i32
    %c0_i32_1 = arith.constant 0 : i32
    return %c0_i32, %c0_i32_0 : i32, i32
  }
  func.func @transform_10(%arg0: i32) -> (i32, i32) {
    %c0_i32 = arith.constant 0 : i32
    %c0_i32_0 = arith.constant 0 : i32
    %c0_i32_1 = arith.constant 0 : i32
    return %c0_i32, %c0_i32_0 : i32, i32
  }
  func.func @transform_11(%arg0: i32) -> (i32, i32) {
    %c0_i32 = arith.constant 0 : i32
    %c0_i32_0 = arith.constant 0 : i32
    return %arg0, %c0_i32 : i32, i32
  }
}

</mosaic_0001>

<llo_original>
// kernel: conformer_linear_forward.4
$region0: #{conformer_linear_forward.4}
  #allocation0 [shape = 'u32[]', space=smem, size = 0x4, offset = 0x4, fixed_abs, tag = 'smem constant byte address 0x4 - core index']
  #allocation1 [shape = 'u32[144,128]{1,0:T(1,128)}', space=vmem, size = 0x12000, scoped, tag = 'internal scratch']
  %s0 = inlined_call_operand.vmem [shape: f32[16,64], index: 0, kind: input, shape index: {}]
  %s1 = inlined_call_operand.vmem [shape: f32[1,64], index: 1, kind: input, shape index: {}]
  %s2 = inlined_call_operand.vmem [shape: f32[1,64], index: 2, kind: input, shape index: {}]
  %s3 = inlined_call_operand.vmem [shape: bf16[64,256], index: 3, kind: input, shape index: {}]
  %s4 = inlined_call_operand.vmem [shape: f32[1,256], index: 4, kind: input, shape index: {}]
  %s5 = inlined_call_operand.vmem [shape: bf16[256,64], index: 5, kind: input, shape index: {}]
  %s6 = inlined_call_operand.vmem [shape: f32[1,64], index: 6, kind: input, shape index: {}]
  %s7 = inlined_call_operand.vmem [shape: f32[16,64], index: 7, kind: output, shape index: {}]
  %s8 = sld [smem:[#allocation0]]
  $region38: #{conformer_linear_forward.4} parent=0
    _
  %s10 = ssub.s32 1, %s8
  %s11 = scalar_select 0, %s10, %s8
  // Predicated region
  $region2: #{conformer_linear_forward.4} parent=0 // pred_check
    _
  $region3: #{conformer_linear_forward.4} parent=0 // pred_check_branch
    %13 = sbr.rel (0) target = $region5
  $region4: #{conformer_linear_forward.4} parent=0 // pred_region
    _
  $region5: #{conformer_linear_forward.4} parent=0 // pred_fallthru
    _
  // Predicated region
  $region6: #{conformer_linear_forward.4} parent=0 // pred_check
    _
  $region7: #{conformer_linear_forward.4} parent=0 // pred_check_branch
    %15 = sbr.rel (0) target = $region9
  $region8: #{conformer_linear_forward.4} parent=0 // pred_region
    _
  $region9: #{conformer_linear_forward.4} parent=0 // pred_fallthru
    _
  // Predicated region
  $region10: #{conformer_linear_forward.4} parent=0 // pred_check
    _
  $region11: #{conformer_linear_forward.4} parent=0 // pred_check_branch
    %17 = sbr.rel (0) target = $region13
  $region12: #{conformer_linear_forward.4} parent=0 // pred_region
    _
  $region13: #{conformer_linear_forward.4} parent=0 // pred_fallthru
    _
  // Predicated region
  $region14: #{conformer_linear_forward.4} parent=0 // pred_check
    _
  $region15: #{conformer_linear_forward.4} parent=0 // pred_check_branch
    %19 = sbr.rel (0) target = $region17
  $region16: #{conformer_linear_forward.4} parent=0 // pred_region
    _
  $region17: #{conformer_linear_forward.4} parent=0 // pred_fallthru
    _
  // Predicated region
  $region18: #{conformer_linear_forward.4} parent=0 // pred_check
    _
  $region19: #{conformer_linear_forward.4} parent=0 // pred_check_branch
    %21 = sbr.rel (0) target = $region21
  $region20: #{conformer_linear_forward.4} parent=0 // pred_region
    _
  $region21: #{conformer_linear_forward.4} parent=0 // pred_fallthru
    _
  // Predicated region
  $region22: #{conformer_linear_forward.4} parent=0 // pred_check
    _
  $region23: #{conformer_linear_forward.4} parent=0 // pred_check_branch
    %23 = sbr.rel (0) target = $region25
  $region24: #{conformer_linear_forward.4} parent=0 // pred_region
    _
  $region25: #{conformer_linear_forward.4} parent=0 // pred_fallthru
    _
  // Predicated region
  $region26: #{conformer_linear_forward.4} parent=0 // pred_check
    _
  $region27: #{conformer_linear_forward.4} parent=0 // pred_check_branch
    %25 = sbr.rel (0) target = $region29
  $region28: #{conformer_linear_forward.4} parent=0 // pred_region
    _
  $region29: #{conformer_linear_forward.4} parent=0 // pred_fallthru
    _
  %v27 = vld [vmem:[%s0] sm:$0xff]
  %v28 = vld [vmem:[%s0 + $0x8] sm:$0xff]
  %v29 = vld [vmem:[%s1] sm:$0x1]
  %v30 = vld [vmem:[%s2] sm:$0x1]
  %vm31 = vcmask 523264
  %v32 = vsel %vm31, %v27, 0.0
  %33 = vadd.xlane.f32.xlu0 %v32
  %v34 = vpop.xlane.xlu0 %33
  %v35 = vsel %vm31, %v28, 0.0
  %36 = vadd.xlane.f32.xlu0 %v35
  %v37 = vpop.xlane.xlu0 %36
  %v38 = vrcp.pop 64.0
  %v39 = vmul.f32 %v34, %v38
  %v40 = vmul.f32 %v37, %v38
  %v41 = vsub.f32 %v27, %v39
  %v42 = vsub.f32 %v28, %v40
  %v43 = vmul.f32 %v41, %v41
  %v44 = vmul.f32 %v42, %v42
  %v45 = vsel %vm31, %v43, 0.0
  %46 = vadd.xlane.f32.xlu0 %v45
  %v47 = vpop.xlane.xlu0 %46
  %v48 = vsel %vm31, %v44, 0.0
  %49 = vadd.xlane.f32.xlu0 %v48
  %v50 = vpop.xlane.xlu0 %49
  %v51 = vmul.f32 %v47, %v38
  %v52 = vmul.f32 %v50, %v38
  %v53 = vadd.f32 %v51, 1e-05
  %v54 = vadd.f32 %v52, 1e-05
  %v55 = vrsqrt.pop %v53
  %v56 = vrsqrt.pop %v54
  %v57 = vmul.f32 %v41, %v55
  %v58 = vmul.f32 %v42, %v56
  %v60 = vlaneseq
  %v61 = vshrl.u32 %v60, 7
  %v62 = vsub.s32 0, %v61
  %v63 = vrot.slane %v29, %v62
  %v65 = vmul.f32 %v57, %v63
  %v66 = vmul.f32 %v58, %v63
  %v68 = vlaneseq
  %v69 = vshrl.u32 %v68, 7
  %v70 = vsub.s32 0, %v69
  %v71 = vrot.slane %v30, %v70
  %v73 = vadd.f32 %v65, %v71
  %v74 = vadd.f32 %v66, %v71
  %v75 = vpack.c.bf16 %v74, %v73
  %v76 = vld [vmem:[%s3] sm:$0xff]
  %v77 = vld [vmem:[%s3 + $0x8] sm:$0xff]
  %v78 = vld [vmem:[%s3 + $0x10] sm:$0xff]
  %v79 = vld [vmem:[%s3 + $0x18] sm:$0xff]
  %v80 = vld [vmem:[%s3 + $0x20] sm:$0xff]
  %v81 = vld [vmem:[%s3 + $0x28] sm:$0xff]
  %v82 = vld [vmem:[%s3 + $0x30] sm:$0xff]
  %v83 = vld [vmem:[%s3 + $0x38] sm:$0xff]
  %v84 = vld [vmem:[%s4] sm:$0x3]
  %v86 = vlaneseq
  %v87 = vshrl.u32 %v86, 7
  %v88 = vsub.s32 0, %v87
  %v89 = vrot.slane %v84, %v88
  %v90 = vlaneseq
  %v91 = vshrl.u32 %v90, 7
  %v92 = vsub.s32 1, %v91
  %v93 = vrot.slane %v84, %v92
  %v104 = vunpack.c.l.b16 %v76
  %v105 = vunpack.c.h.b16 %v76
  %v106 = vunpack.c.l.b16 %v77
  %v107 = vunpack.c.h.b16 %v77
  %v108 = vunpack.c.l.b16 %v78
  %v109 = vunpack.c.h.b16 %v78
  %v110 = vunpack.c.l.b16 %v79
  %v111 = vunpack.c.h.b16 %v79
  %v112 = vunpack.c.l.b16 %v80
  %v113 = vunpack.c.h.b16 %v80
  %v114 = vunpack.c.l.b16 %v81
  %v115 = vunpack.c.h.b16 %v81
  %v116 = vunpack.c.l.b16 %v82
  %v117 = vunpack.c.h.b16 %v82
  %v118 = vunpack.c.l.b16 %v83
  %v119 = vunpack.c.h.b16 %v83
  %v120 = vpack.c.b16 %v106, %v104
  %v121 = vpack.c.b16 %v107, %v105
  %v122 = vpack.c.b16 %v110, %v108
  %v123 = vpack.c.b16 %v111, %v109
  %v124 = vpack.c.b16 %v114, %v112
  %v125 = vpack.c.b16 %v115, %v113
  %v126 = vpack.c.b16 %v118, %v116
  %v127 = vpack.c.b16 %v119, %v117
  %v137 = vsel %vm31, %v75, 0
  %139 = vmatprep.subr.bf16.mxu0 0
  %140 = vmatpush1.bf16.msra.mxu0 0
  %141 = vmatprep.subr.bf16.mxu0 0
  %142 = vmatpush1.bf16.msra.mxu0 0
  %143 = vmatprep.subr.bf16.mxu0 0
  %144 = vmatpush1.bf16.msra.mxu0 0
  %145 = vmatprep.subr.bf16.mxu0 0
  %146 = vmatpush1.bf16.msra.mxu0 0
  %147 = vmatprep.subr.bf16.mxu0 %v127
  %148 = vmatpush1.bf16.msra.mxu0 %v126
  %149 = vmatprep.subr.bf16.mxu0 %v125
  %150 = vmatpush1.bf16.msra.mxu0 %v124
  %151 = vmatprep.subr.bf16.mxu0 %v123
  %152 = vmatpush1.bf16.msra.mxu0 %v122
  %153 = vmatprep.subr.bf16.mxu0 %v121
  %154 = vmatpush1.bf16.msra.mxu0 %v120
  %155 = vmatprep.subr.bf16.mxu0 0
  %156 = vmatpush2.bf16.msra.mxu0 0
  %157 = vmatprep.subr.bf16.mxu0 0
  %158 = vmatpush2.bf16.msra.mxu0 0
  %159 = vmatprep.subr.bf16.mxu0 0
  %160 = vmatpush2.bf16.msra.mxu0 0
  %161 = vmatprep.subr.bf16.mxu0 0
  %162 = vmatpush2.bf16.msra.mxu0 0
  %163 = vmatprep.subr.bf16.mxu0 0
  %164 = vmatpush2.bf16.msra.mxu0 0
  %165 = vmatprep.subr.bf16.mxu0 0
  %166 = vmatpush2.bf16.msra.mxu0 0
  %167 = vmatprep.subr.bf16.mxu0 0
  %168 = vmatpush2.bf16.msra.mxu0 0
  %169 = vmatprep.subr.bf16.mxu0 0
  %170 = vmatpush2.bf16.msra.mxu0 0
  %171 = vmatprep.mubr.bf16.mxu0 0
  %172 = vmatmul.mubr.bf16.gmra.mxu0 %v137
  %v173 = vpop.f32.mrf.mxu0
  %v174 = vadd.f32 %v89, %v173
  %v175 = vpop.f32.mrf.mxu0
  %v176 = vadd.f32 %v93, %v175
  %v177 = vpop.f32.mrf.mxu0
  %v178 = vadd.f32 %v89, %v177
  %v179 = vpop.f32.mrf.mxu0
  %v180 = vadd.f32 %v93, %v179
  %181 = vdwg.mxu0
  %v182 = vxor.u32 %v174, 2147483648
  %v183 = vxor.u32 %v176, 2147483648
  %v184 = vxor.u32 %v178, 2147483648
  %v185 = vxor.u32 %v180, 2147483648
  %v186 = vmul.f32 %v182, 1.442695
  %v187 = vpow.pop %v186
  %v188 = vmul.f32 %v183, 1.442695
  %v189 = vpow.pop %v188
  %v190 = vmul.f32 %v184, 1.442695
  %v191 = vpow.pop %v190
  %v192 = vmul.f32 %v185, 1.442695
  %v193 = vpow.pop %v192
  %v194 = vadd.f32 %v187, 1.0
  %v195 = vadd.f32 %v189, 1.0
  %v196 = vadd.f32 %v191, 1.0
  %v197 = vadd.f32 %v193, 1.0
  %v198 = vrcp.pop %v194
  %v199 = vmul.f32 1.0, %v198
  %v200 = vrcp.pop %v195
  %v201 = vmul.f32 1.0, %v200
  %v202 = vrcp.pop %v196
  %v203 = vmul.f32 1.0, %v202
  %v204 = vrcp.pop %v197
  %v205 = vmul.f32 1.0, %v204
  %v206 = vmul.f32 %v174, %v199
  %v207 = vmul.f32 %v176, %v201
  %v208 = vmul.f32 %v178, %v203
  %v209 = vmul.f32 %v180, %v205
  %v210 = vpack.c.bf16 %v208, %v206
  %v211 = vpack.c.bf16 %v209, %v207
  %v212 = vld [vmem:[%s5] sm:$0xf]
  %v213 = vld [vmem:[%s5 + $0x4] sm:$0xf]
  %v214 = vld [vmem:[%s5 + $0x8] sm:$0xf]
  %v215 = vld [vmem:[%s5 + $0xc] sm:$0xf]
  %v216 = vld [vmem:[%s5 + $0x10] sm:$0xf]
  %v217 = vld [vmem:[%s5 + $0x14] sm:$0xf]
  %v218 = vld [vmem:[%s5 + $0x18] sm:$0xf]
  %v219 = vld [vmem:[%s5 + $0x1c] sm:$0xf]
  %v220 = vld [vmem:[%s5 + $0x20] sm:$0xf]
  %v221 = vld [vmem:[%s5 + $0x24] sm:$0xf]
  %v222 = vld [vmem:[%s5 + $0x28] sm:$0xf]
  %v223 = vld [vmem:[%s5 + $0x2c] sm:$0xf]
  %v224 = vld [vmem:[%s5 + $0x30] sm:$0xf]
  %v225 = vld [vmem:[%s5 + $0x34] sm:$0xf]
  %v226 = vld [vmem:[%s5 + $0x38] sm:$0xf]
  %v227 = vld [vmem:[%s5 + $0x3c] sm:$0xf]
  %v228 = vld [vmem:[%s5 + $0x40] sm:$0xf]
  %v229 = vld [vmem:[%s5 + $0x44] sm:$0xf]
  %v230 = vld [vmem:[%s5 + $0x48] sm:$0xf]
  %v231 = vld [vmem:[%s5 + $0x4c] sm:$0xf]
  %v232 = vld [vmem:[%s5 + $0x50] sm:$0xf]
  %v233 = vld [vmem:[%s5 + $0x54] sm:$0xf]
  %v234 = vld [vmem:[%s5 + $0x58] sm:$0xf]
  %v235 = vld [vmem:[%s5 + $0x5c] sm:$0xf]
  %v236 = vld [vmem:[%s5 + $0x60] sm:$0xf]
  %v237 = vld [vmem:[%s5 + $0x64] sm:$0xf]
  %v238 = vld [vmem:[%s5 + $0x68] sm:$0xf]
  %v239 = vld [vmem:[%s5 + $0x6c] sm:$0xf]
  %v240 = vld [vmem:[%s5 + $0x70] sm:$0xf]
  %v241 = vld [vmem:[%s5 + $0x74] sm:$0xf]
  %v242 = vld [vmem:[%s5 + $0x78] sm:$0xf]
  %v243 = vld [vmem:[%s5 + $0x7c] sm:$0xf]
  %v244 = vld [vmem:[%s6] sm:$0x1]
  %v246 = vlaneseq
  %v247 = vshrl.u32 %v246, 7
  %v248 = vsub.s32 0, %v247
  %v249 = vrot.slane %v244, %v248
  %v283 = vunpack.c.l.b16 %v212
  %v284 = vunpack.c.l.b16 %v213
  %v285 = vunpack.c.l.b16 %v214
  %v286 = vunpack.c.l.b16 %v215
  %v287 = vunpack.c.l.b16 %v216
  %v288 = vunpack.c.l.b16 %v217
  %v289 = vunpack.c.l.b16 %v218
  %v290 = vunpack.c.l.b16 %v219
  %v291 = vunpack.c.l.b16 %v220
  %v292 = vunpack.c.l.b16 %v221
  %v293 = vunpack.c.l.b16 %v222
  %v294 = vunpack.c.l.b16 %v223
  %v295 = vunpack.c.l.b16 %v224
  %v296 = vunpack.c.l.b16 %v225
  %v297 = vunpack.c.l.b16 %v226
  %v298 = vunpack.c.l.b16 %v227
  %v299 = vunpack.c.l.b16 %v228
  %v300 = vunpack.c.l.b16 %v229
  %v301 = vunpack.c.l.b16 %v230
  %v302 = vunpack.c.l.b16 %v231
  %v303 = vunpack.c.l.b16 %v232
  %v304 = vunpack.c.l.b16 %v233
  %v305 = vunpack.c.l.b16 %v234
  %v306 = vunpack.c.l.b16 %v235
  %v307 = vunpack.c.l.b16 %v236
  %v308 = vunpack.c.l.b16 %v237
  %v309 = vunpack.c.l.b16 %v238
  %v310 = vunpack.c.l.b16 %v239
  %v311 = vunpack.c.l.b16 %v240
  %v312 = vunpack.c.l.b16 %v241
  %v313 = vunpack.c.l.b16 %v242
  %v314 = vunpack.c.l.b16 %v243
  %v315 = vpack.c.b16 %v284, %v283
  %v316 = vpack.c.b16 %v286, %v285
  %v317 = vpack.c.b16 %v288, %v287
  %v318 = vpack.c.b16 %v290, %v289
  %v319 = vpack.c.b16 %v292, %v291
  %v320 = vpack.c.b16 %v294, %v293
  %v321 = vpack.c.b16 %v296, %v295
  %v322 = vpack.c.b16 %v298, %v297
  %v323 = vpack.c.b16 %v300, %v299
  %v324 = vpack.c.b16 %v302, %v301
  %v325 = vpack.c.b16 %v304, %v303
  %v326 = vpack.c.b16 %v306, %v305
  %v327 = vpack.c.b16 %v308, %v307
  %v328 = vpack.c.b16 %v310, %v309
  %v329 = vpack.c.b16 %v312, %v311
  %v330 = vpack.c.b16 %v314, %v313
  %347 = vmatprep.subr.bf16.mxu0 0
  %348 = vmatpush1.bf16.msra.mxu0 %v322
  %349 = vmatprep.subr.bf16.mxu0 0
  %350 = vmatpush1.bf16.msra.mxu0 %v321
  %351 = vmatprep.subr.bf16.mxu0 0
  %352 = vmatpush1.bf16.msra.mxu0 %v320
  %353 = vmatprep.subr.bf16.mxu0 0
  %354 = vmatpush1.bf16.msra.mxu0 %v319
  %355 = vmatprep.subr.bf16.mxu0 0
  %356 = vmatpush1.bf16.msra.mxu0 %v318
  %357 = vmatprep.subr.bf16.mxu0 0
  %358 = vmatpush1.bf16.msra.mxu0 %v317
  %359 = vmatprep.subr.bf16.mxu0 0
  %360 = vmatpush1.bf16.msra.mxu0 %v316
  %361 = vmatprep.subr.bf16.mxu0 0
  %362 = vmatpush1.bf16.msra.mxu0 %v315
  %363 = vmatprep.subr.bf16.mxu0 0
  %364 = vmatpush2.bf16.msra.mxu0 %v330
  %365 = vmatprep.subr.bf16.mxu0 0
  %366 = vmatpush2.bf16.msra.mxu0 %v329
  %367 = vmatprep.subr.bf16.mxu0 0
  %368 = vmatpush2.bf16.msra.mxu0 %v328
  %369 = vmatprep.subr.bf16.mxu0 0
  %370 = vmatpush2.bf16.msra.mxu0 %v327
  %371 = vmatprep.subr.bf16.mxu0 0
  %372 = vmatpush2.bf16.msra.mxu0 %v326
  %373 = vmatprep.subr.bf16.mxu0 0
  %374 = vmatpush2.bf16.msra.mxu0 %v325
  %375 = vmatprep.subr.bf16.mxu0 0
  %376 = vmatpush2.bf16.msra.mxu0 %v324
  %377 = vmatprep.subr.bf16.mxu0 0
  %378 = vmatpush2.bf16.msra.mxu0 %v323
  %379 = vmatprep.mubr.bf16.mxu0 %v211
  %380 = vmatmul.mubr.bf16.gmra.mxu0 %v210
  %v381 = vpop.f32.mrf.mxu0
  %v382 = vadd.f32 %v249, %v381
  %v383 = vpop.f32.mrf.mxu0
  %v384 = vpop.f32.mrf.mxu0
  %v385 = vadd.f32 %v249, %v384
  %v386 = vpop.f32.mrf.mxu0
  %387 = vdwg.mxu0
  %v388 = vmul.f32 %v382, 0.5
  %v389 = vmul.f32 %v385, 0.5
  %v390 = vadd.f32 %v27, %v388
  %v391 = vadd.f32 %v28, %v389
  %392 = vst.msk [vmem:[%s7] sm:$0xff] %vm31, %v390
  %393 = vst.msk [vmem:[%s7 + $0x8] sm:$0xff] %vm31, %v391
  // Predicated region
  $region30: #{conformer_linear_forward.4} parent=0 // pred_check
    _
  $region31: #{conformer_linear_forward.4} parent=0 // pred_check_branch
    %395 = sbr.rel (0) target = $region33
  $region32: #{conformer_linear_forward.4} parent=0 // pred_region
    _
  $region33: #{conformer_linear_forward.4} parent=0 // pred_fallthru
    _
  // Predicated region
  $region34: #{conformer_linear_forward.4} parent=0 // pred_check
    _
  $region35: #{conformer_linear_forward.4} parent=0 // pred_check_branch
    %397 = sbr.rel (0) target = $region37
  $region36: #{conformer_linear_forward.4} parent=0 // pred_region
    _
  $region37: #{conformer_linear_forward.4} parent=0 // pred_fallthru
    _

// kernel: conformer_linear_forward.7
$region0: #{conformer_linear_forward.7}
  #allocation0 [shape = 'u32[]', space=smem, size = 0x4, offset = 0x4, fixed_abs, tag = 'smem constant byte address 0x4 - core index']
  #allocation1 [shape = 'u32[144,128]{1,0:T(1,128)}', space=vmem, size = 0x12000, scoped, tag = 'internal scratch']
  %s0 = inlined_call_operand.vmem [shape: f32[16,64], index: 0, kind: input, shape index: {}]
  %s1 = inlined_call_operand.vmem [shape: f32[1,64], index: 1, kind: input, shape index: {}]
  %s2 = inlined_call_operand.vmem [shape: f32[1,64], index: 2, kind: input, shape index: {}]
  %s3 = inlined_call_operand.vmem [shape: bf16[64,256], index: 3, kind: input, shape index: {}]
  %s4 = inlined_call_operand.vmem [shape: f32[1,256], index: 4, kind: input, shape index: {}]
  %s5 = inlined_call_operand.vmem [shape: bf16[256,64], index: 5, kind: input, shape index: {}]
  %s6 = inlined_call_operand.vmem [shape: f32[1,64], index: 6, kind: input, shape index: {}]
  %s7 = inlined_call_operand.vmem [shape: f32[1,64], index: 7, kind: input, shape index: {}]
  %s8 = inlined_call_operand.vmem [shape: f32[1,64], index: 8, kind: input, shape index: {}]
  %s9 = inlined_call_operand.vmem [shape: bf16[64,128], index: 9, kind: input, shape index: {}]
  %s10 = inlined_call_operand.vmem [shape: f32[1,128], index: 10, kind: input, shape index: {}]
  %s11 = inlined_call_operand.vmem [shape: f32[16,128], index: 11, kind: output, shape index: {}]
  %s12 = sld [smem:[#allocation0]]
  $region54: #{conformer_linear_forward.7} parent=0
    _
  %s14 = ssub.s32 1, %s12
  %s15 = scalar_select 0, %s14, %s12
  // Predicated region
  $region2: #{conformer_linear_forward.7} parent=0 // pred_check
    _
  $region3: #{conformer_linear_forward.7} parent=0 // pred_check_branch
    %17 = sbr.rel (0) target = $region5
  $region4: #{conformer_linear_forward.7} parent=0 // pred_region
    _
  $region5: #{conformer_linear_forward.7} parent=0 // pred_fallthru
    _
  // Predicated region
  $region6: #{conformer_linear_forward.7} parent=0 // pred_check
    _
  $region7: #{conformer_linear_forward.7} parent=0 // pred_check_branch
    %19 = sbr.rel (0) target = $region9
  $region8: #{conformer_linear_forward.7} parent=0 // pred_region
    _
  $region9: #{conformer_linear_forward.7} parent=0 // pred_fallthru
    _
  // Predicated region
  $region10: #{conformer_linear_forward.7} parent=0 // pred_check
    _
  $region11: #{conformer_linear_forward.7} parent=0 // pred_check_branch
    %21 = sbr.rel (0) target = $region13
  $region12: #{conformer_linear_forward.7} parent=0 // pred_region
    _
  $region13: #{conformer_linear_forward.7} parent=0 // pred_fallthru
    _
  // Predicated region
  $region14: #{conformer_linear_forward.7} parent=0 // pred_check
    _
  $region15: #{conformer_linear_forward.7} parent=0 // pred_check_branch
    %23 = sbr.rel (0) target = $region17
  $region16: #{conformer_linear_forward.7} parent=0 // pred_region
    _
  $region17: #{conformer_linear_forward.7} parent=0 // pred_fallthru
    _
  // Predicated region
  $region18: #{conformer_linear_forward.7} parent=0 // pred_check
    _
  $region19: #{conformer_linear_forward.7} parent=0 // pred_check_branch
    %25 = sbr.rel (0) target = $region21
  $region20: #{conformer_linear_forward.7} parent=0 // pred_region
    _
  $region21: #{conformer_linear_forward.7} parent=0 // pred_fallthru
    _
  // Predicated region
  $region22: #{conformer_linear_forward.7} parent=0 // pred_check
    _
  $region23: #{conformer_linear_forward.7} parent=0 // pred_check_branch
    %27 = sbr.rel (0) target = $region25
  $region24: #{conformer_linear_forward.7} parent=0 // pred_region
    _
  $region25: #{conformer_linear_forward.7} parent=0 // pred_fallthru
    _
  // Predicated region
  $region26: #{conformer_linear_forward.7} parent=0 // pred_check
    _
  $region27: #{conformer_linear_forward.7} parent=0 // pred_check_branch
    %29 = sbr.rel (0) target = $region29
  $region28: #{conformer_linear_forward.7} parent=0 // pred_region
    _
  $region29: #{conformer_linear_forward.7} parent=0 // pred_fallthru
    _
  // Predicated region
  $region30: #{conformer_linear_forward.7} parent=0 // pred_check
    _
  $region31: #{conformer_linear_forward.7} parent=0 // pred_check_branch
    %31 = sbr.rel (0) target = $region33
  $region32: #{conformer_linear_forward.7} parent=0 // pred_region
    _
  $region33: #{conformer_linear_forward.7} parent=0 // pred_fallthru
    _
  // Predicated region
  $region34: #{conformer_linear_forward.7} parent=0 // pred_check
    _
  $region35: #{conformer_linear_forward.7} parent=0 // pred_check_branch
    %33 = sbr.rel (0) target = $region37
  $region36: #{conformer_linear_forward.7} parent=0 // pred_region
    _
  $region37: #{conformer_linear_forward.7} parent=0 // pred_fallthru
    _
  // Predicated region
  $region38: #{conformer_linear_forward.7} parent=0 // pred_check
    _
  $region39: #{conformer_linear_forward.7} parent=0 // pred_check_branch
    %35 = sbr.rel (0) target = $region41
  $region40: #{conformer_linear_forward.7} parent=0 // pred_region
    _
  $region41: #{conformer_linear_forward.7} parent=0 // pred_fallthru
    _
  // Predicated region
  $region42: #{conformer_linear_forward.7} parent=0 // pred_check
    _
  $region43: #{conformer_linear_forward.7} parent=0 // pred_check_branch
    %37 = sbr.rel (0) target = $region45
  $region44: #{conformer_linear_forward.7} parent=0 // pred_region
    _
  $region45: #{conformer_linear_forward.7} parent=0 // pred_fallthru
    _
  %v39 = vld [vmem:[%s0] sm:$0xff]
  %v40 = vld [vmem:[%s0 + $0x8] sm:$0xff]
  %v41 = vld [vmem:[%s1] sm:$0x1]
  %v42 = vld [vmem:[%s2] sm:$0x1]
  %vm43 = vcmask 523264
  %v44 = vsel %vm43, %v39, 0.0
  %45 = vadd.xlane.f32.xlu0 %v44
  %v46 = vpop.xlane.xlu0 %45
  %v47 = vsel %vm43, %v40, 0.0
  %48 = vadd.xlane.f32.xlu0 %v47
  %v49 = vpop.xlane.xlu0 %48
  %v50 = vrcp.pop 64.0
  %v51 = vmul.f32 %v46, %v50
  %v52 = vmul.f32 %v49, %v50
  %v53 = vsub.f32 %v39, %v51
  %v54 = vsub.f32 %v40, %v52
  %v55 = vmul.f32 %v53, %v53
  %v56 = vmul.f32 %v54, %v54
  %v57 = vsel %vm43, %v55, 0.0
  %58 = vadd.xlane.f32.xlu0 %v57
  %v59 = vpop.xlane.xlu0 %58
  %v60 = vsel %vm43, %v56, 0.0
  %61 = vadd.xlane.f32.xlu0 %v60
  %v62 = vpop.xlane.xlu0 %61
  %v63 = vmul.f32 %v59, %v50
  %v64 = vmul.f32 %v62, %v50
  %v65 = vadd.f32 %v63, 1e-05
  %v66 = vadd.f32 %v64, 1e-05
  %v67 = vrsqrt.pop %v65
  %v68 = vrsqrt.pop %v66
  %v69 = vmul.f32 %v53, %v67
  %v70 = vmul.f32 %v54, %v68
  %v72 = vlaneseq
  %v73 = vshrl.u32 %v72, 7
  %v74 = vsub.s32 0, %v73
  %v75 = vrot.slane %v41, %v74
  %v77 = vmul.f32 %v69, %v75
  %v78 = vmul.f32 %v70, %v75
  %v80 = vlaneseq
  %v81 = vshrl.u32 %v80, 7
  %v82 = vsub.s32 0, %v81
  %v83 = vrot.slane %v42, %v82
  %v85 = vadd.f32 %v77, %v83
  %v86 = vadd.f32 %v78, %v83
  %v87 = vpack.c.bf16 %v86, %v85
  %v88 = vld [vmem:[%s3] sm:$0xff]
  %v89 = vld [vmem:[%s3 + $0x8] sm:$0xff]
  %v90 = vld [vmem:[%s3 + $0x10] sm:$0xff]
  %v91 = vld [vmem:[%s3 + $0x18] sm:$0xff]
  %v92 = vld [vmem:[%s3 + $0x20] sm:$0xff]
  %v93 = vld [vmem:[%s3 + $0x28] sm:$0xff]
  %v94 = vld [vmem:[%s3 + $0x30] sm:$0xff]
  %v95 = vld [vmem:[%s3 + $0x38] sm:$0xff]
  %v96 = vld [vmem:[%s4] sm:$0x3]
  %v98 = vlaneseq
  %v99 = vshrl.u32 %v98, 7
  %v100 = vsub.s32 0, %v99
  %v101 = vrot.slane %v96, %v100
  %v102 = vlaneseq
  %v103 = vshrl.u32 %v102, 7
  %v104 = vsub.s32 1, %v103
  %v105 = vrot.slane %v96, %v104
  %v116 = vunpack.c.l.b16 %v88
  %v117 = vunpack.c.h.b16 %v88
  %v118 = vunpack.c.l.b16 %v89
  %v119 = vunpack.c.h.b16 %v89
  %v120 = vunpack.c.l.b16 %v90
  %v121 = vunpack.c.h.b16 %v90
  %v122 = vunpack.c.l.b16 %v91
  %v123 = vunpack.c.h.b16 %v91
  %v124 = vunpack.c.l.b16 %v92
  %v125 = vunpack.c.h.b16 %v92
  %v126 = vunpack.c.l.b16 %v93
  %v127 = vunpack.c.h.b16 %v93
  %v128 = vunpack.c.l.b16 %v94
  %v129 = vunpack.c.h.b16 %v94
  %v130 = vunpack.c.l.b16 %v95
  %v131 = vunpack.c.h.b16 %v95
  %v132 = vpack.c.b16 %v118, %v116
  %v133 = vpack.c.b16 %v119, %v117
  %v134 = vpack.c.b16 %v122, %v120
  %v135 = vpack.c.b16 %v123, %v121
  %v136 = vpack.c.b16 %v126, %v124
  %v137 = vpack.c.b16 %v127, %v125
  %v138 = vpack.c.b16 %v130, %v128
  %v139 = vpack.c.b16 %v131, %v129
  %v149 = vsel %vm43, %v87, 0
  %151 = vmatprep.subr.bf16.mxu0 0
  %152 = vmatpush1.bf16.msra.mxu0 0
  %153 = vmatprep.subr.bf16.mxu0 0
  %154 = vmatpush1.bf16.msra.mxu0 0
  %155 = vmatprep.subr.bf16.mxu0 0
  %156 = vmatpush1.bf16.msra.mxu0 0
  %157 = vmatprep.subr.bf16.mxu0 0
  %158 = vmatpush1.bf16.msra.mxu0 0
  %159 = vmatprep.subr.bf16.mxu0 %v139
  %160 = vmatpush1.bf16.msra.mxu0 %v138
  %161 = vmatprep.subr.bf16.mxu0 %v137
  %162 = vmatpush1.bf16.msra.mxu0 %v136
  %163 = vmatprep.subr.bf16.mxu0 %v135
  %164 = vmatpush1.bf16.msra.mxu0 %v134
  %165 = vmatprep.subr.bf16.mxu0 %v133
  %166 = vmatpush1.bf16.msra.mxu0 %v132
  %167 = vmatprep.subr.bf16.mxu0 0
  %168 = vmatpush2.bf16.msra.mxu0 0
  %169 = vmatprep.subr.bf16.mxu0 0
  %170 = vmatpush2.bf16.msra.mxu0 0
  %171 = vmatprep.subr.bf16.mxu0 0
  %172 = vmatpush2.bf16.msra.mxu0 0
  %173 = vmatprep.subr.bf16.mxu0 0
  %174 = vmatpush2.bf16.msra.mxu0 0
  %175 = vmatprep.subr.bf16.mxu0 0
  %176 = vmatpush2.bf16.msra.mxu0 0
  %177 = vmatprep.subr.bf16.mxu0 0
  %178 = vmatpush2.bf16.msra.mxu0 0
  %179 = vmatprep.subr.bf16.mxu0 0
  %180 = vmatpush2.bf16.msra.mxu0 0
  %181 = vmatprep.subr.bf16.mxu0 0
  %182 = vmatpush2.bf16.msra.mxu0 0
  %183 = vmatprep.mubr.bf16.mxu0 0
  %184 = vmatmul.mubr.bf16.gmra.mxu0 %v149
  %v185 = vpop.f32.mrf.mxu0
  %v186 = vadd.f32 %v101, %v185
  %v187 = vpop.f32.mrf.mxu0
  %v188 = vadd.f32 %v105, %v187
  %v189 = vpop.f32.mrf.mxu0
  %v190 = vadd.f32 %v101, %v189
  %v191 = vpop.f32.mrf.mxu0
  %v192 = vadd.f32 %v105, %v191
  %193 = vdwg.mxu0
  %v194 = vxor.u32 %v186, 2147483648
  %v195 = vxor.u32 %v188, 2147483648
  %v196 = vxor.u32 %v190, 2147483648
  %v197 = vxor.u32 %v192, 2147483648
  %v198 = vmul.f32 %v194, 1.442695
  %v199 = vpow.pop %v198
  %v200 = vmul.f32 %v195, 1.442695
  %v201 = vpow.pop %v200
  %v202 = vmul.f32 %v196, 1.442695
  %v203 = vpow.pop %v202
  %v204 = vmul.f32 %v197, 1.442695
  %v205 = vpow.pop %v204
  %v206 = vadd.f32 %v199, 1.0
  %v207 = vadd.f32 %v201, 1.0
  %v208 = vadd.f32 %v203, 1.0
  %v209 = vadd.f32 %v205, 1.0
  %v210 = vrcp.pop %v206
  %v211 = vmul.f32 1.0, %v210
  %v212 = vrcp.pop %v207
  %v213 = vmul.f32 1.0, %v212
  %v214 = vrcp.pop %v208
  %v215 = vmul.f32 1.0, %v214
  %v216 = vrcp.pop %v209
  %v217 = vmul.f32 1.0, %v216
  %v218 = vmul.f32 %v186, %v211
  %v219 = vmul.f32 %v188, %v213
  %v220 = vmul.f32 %v190, %v215
  %v221 = vmul.f32 %v192, %v217
  %v222 = vpack.c.bf16 %v220, %v218
  %v223 = vpack.c.bf16 %v221, %v219
  %v224 = vld [vmem:[%s5] sm:$0xf]
  %v225 = vld [vmem:[%s5 + $0x4] sm:$0xf]
  %v226 = vld [vmem:[%s5 + $0x8] sm:$0xf]
  %v227 = vld [vmem:[%s5 + $0xc] sm:$0xf]
  %v228 = vld [vmem:[%s5 + $0x10] sm:$0xf]
  %v229 = vld [vmem:[%s5 + $0x14] sm:$0xf]
  %v230 = vld [vmem:[%s5 + $0x18] sm:$0xf]
  %v231 = vld [vmem:[%s5 + $0x1c] sm:$0xf]
  %v232 = vld [vmem:[%s5 + $0x20] sm:$0xf]
  %v233 = vld [vmem:[%s5 + $0x24] sm:$0xf]
  %v234 = vld [vmem:[%s5 + $0x28] sm:$0xf]
  %v235 = vld [vmem:[%s5 + $0x2c] sm:$0xf]
  %v236 = vld [vmem:[%s5 + $0x30] sm:$0xf]
  %v237 = vld [vmem:[%s5 + $0x34] sm:$0xf]
  %v238 = vld [vmem:[%s5 + $0x38] sm:$0xf]
  %v239 = vld [vmem:[%s5 + $0x3c] sm:$0xf]
  %v240 = vld [vmem:[%s5 + $0x40] sm:$0xf]
  %v241 = vld [vmem:[%s5 + $0x44] sm:$0xf]
  %v242 = vld [vmem:[%s5 + $0x48] sm:$0xf]
  %v243 = vld [vmem:[%s5 + $0x4c] sm:$0xf]
  %v244 = vld [vmem:[%s5 + $0x50] sm:$0xf]
  %v245 = vld [vmem:[%s5 + $0x54] sm:$0xf]
  %v246 = vld [vmem:[%s5 + $0x58] sm:$0xf]
  %v247 = vld [vmem:[%s5 + $0x5c] sm:$0xf]
  %v248 = vld [vmem:[%s5 + $0x60] sm:$0xf]
  %v249 = vld [vmem:[%s5 + $0x64] sm:$0xf]
  %v250 = vld [vmem:[%s5 + $0x68] sm:$0xf]
  %v251 = vld [vmem:[%s5 + $0x6c] sm:$0xf]
  %v252 = vld [vmem:[%s5 + $0x70] sm:$0xf]
  %v253 = vld [vmem:[%s5 + $0x74] sm:$0xf]
  %v254 = vld [vmem:[%s5 + $0x78] sm:$0xf]
  %v255 = vld [vmem:[%s5 + $0x7c] sm:$0xf]
  %v256 = vld [vmem:[%s6] sm:$0x1]
  %v258 = vlaneseq
  %v259 = vshrl.u32 %v258, 7
  %v260 = vsub.s32 0, %v259
  %v261 = vrot.slane %v256, %v260
  %v295 = vunpack.c.l.b16 %v224
  %v296 = vunpack.c.l.b16 %v225
  %v297 = vunpack.c.l.b16 %v226
  %v298 = vunpack.c.l.b16 %v227
  %v299 = vunpack.c.l.b16 %v228
  %v300 = vunpack.c.l.b16 %v229
  %v301 = vunpack.c.l.b16 %v230
  %v302 = vunpack.c.l.b16 %v231
  %v303 = vunpack.c.l.b16 %v232
  %v304 = vunpack.c.l.b16 %v233
  %v305 = vunpack.c.l.b16 %v234
  %v306 = vunpack.c.l.b16 %v235
  %v307 = vunpack.c.l.b16 %v236
  %v308 = vunpack.c.l.b16 %v237
  %v309 = vunpack.c.l.b16 %v238
  %v310 = vunpack.c.l.b16 %v239
  %v311 = vunpack.c.l.b16 %v240
  %v312 = vunpack.c.l.b16 %v241
  %v313 = vunpack.c.l.b16 %v242
  %v314 = vunpack.c.l.b16 %v243
  %v315 = vunpack.c.l.b16 %v244
  %v316 = vunpack.c.l.b16 %v245
  %v317 = vunpack.c.l.b16 %v246
  %v318 = vunpack.c.l.b16 %v247
  %v319 = vunpack.c.l.b16 %v248
  %v320 = vunpack.c.l.b16 %v249
  %v321 = vunpack.c.l.b16 %v250
  %v322 = vunpack.c.l.b16 %v251
  %v323 = vunpack.c.l.b16 %v252
  %v324 = vunpack.c.l.b16 %v253
  %v325 = vunpack.c.l.b16 %v254
  %v326 = vunpack.c.l.b16 %v255
  %v327 = vpack.c.b16 %v296, %v295
  %v328 = vpack.c.b16 %v298, %v297
  %v329 = vpack.c.b16 %v300, %v299
  %v330 = vpack.c.b16 %v302, %v301
  %v331 = vpack.c.b16 %v304, %v303
  %v332 = vpack.c.b16 %v306, %v305
  %v333 = vpack.c.b16 %v308, %v307
  %v334 = vpack.c.b16 %v310, %v309
  %v335 = vpack.c.b16 %v312, %v311
  %v336 = vpack.c.b16 %v314, %v313
  %v337 = vpack.c.b16 %v316, %v315
  %v338 = vpack.c.b16 %v318, %v317
  %v339 = vpack.c.b16 %v320, %v319
  %v340 = vpack.c.b16 %v322, %v321
  %v341 = vpack.c.b16 %v324, %v323
  %v342 = vpack.c.b16 %v326, %v325
  %359 = vmatprep.subr.bf16.mxu0 0
  %360 = vmatpush1.bf16.msra.mxu0 %v334
  %361 = vmatprep.subr.bf16.mxu0 0
  %362 = vmatpush1.bf16.msra.mxu0 %v333
  %363 = vmatprep.subr.bf16.mxu0 0
  %364 = vmatpush1.bf16.msra.mxu0 %v332
  %365 = vmatprep.subr.bf16.mxu0 0
  %366 = vmatpush1.bf16.msra.mxu0 %v331
  %367 = vmatprep.subr.bf16.mxu0 0
  %368 = vmatpush1.bf16.msra.mxu0 %v330
  %369 = vmatprep.subr.bf16.mxu0 0
  %370 = vmatpush1.bf16.msra.mxu0 %v329
  %371 = vmatprep.subr.bf16.mxu0 0
  %372 = vmatpush1.bf16.msra.mxu0 %v328
  %373 = vmatprep.subr.bf16.mxu0 0
  %374 = vmatpush1.bf16.msra.mxu0 %v327
  %375 = vmatprep.subr.bf16.mxu0 0
  %376 = vmatpush2.bf16.msra.mxu0 %v342
  %377 = vmatprep.subr.bf16.mxu0 0
  %378 = vmatpush2.bf16.msra.mxu0 %v341
  %379 = vmatprep.subr.bf16.mxu0 0
  %380 = vmatpush2.bf16.msra.mxu0 %v340
  %381 = vmatprep.subr.bf16.mxu0 0
  %382 = vmatpush2.bf16.msra.mxu0 %v339
  %383 = vmatprep.subr.bf16.mxu0 0
  %384 = vmatpush2.bf16.msra.mxu0 %v338
  %385 = vmatprep.subr.bf16.mxu0 0
  %386 = vmatpush2.bf16.msra.mxu0 %v337
  %387 = vmatprep.subr.bf16.mxu0 0
  %388 = vmatpush2.bf16.msra.mxu0 %v336
  %389 = vmatprep.subr.bf16.mxu0 0
  %390 = vmatpush2.bf16.msra.mxu0 %v335
  %391 = vmatprep.mubr.bf16.mxu0 %v223
  %392 = vmatmul.mubr.bf16.gmra.mxu0 %v222
  %v393 = vpop.f32.mrf.mxu0
  %v394 = vadd.f32 %v261, %v393
  %v395 = vpop.f32.mrf.mxu0
  %v396 = vpop.f32.mrf.mxu0
  %v397 = vadd.f32 %v261, %v396
  %v398 = vpop.f32.mrf.mxu0
  %399 = vdwg.mxu0
  %v400 = vmul.f32 %v394, 0.5
  %v401 = vmul.f32 %v397, 0.5
  %v402 = vadd.f32 %v39, %v400
  %v403 = vadd.f32 %v40, %v401
  %v404 = vld [vmem:[%s7] sm:$0x1]
  %v405 = vld [vmem:[%s8] sm:$0x1]
  %v406 = vsel %vm43, %v402, 0.0
  %407 = vadd.xlane.f32.xlu0 %v406
  %v408 = vpop.xlane.xlu0 %407
  %v409 = vsel %vm43, %v403, 0.0
  %410 = vadd.xlane.f32.xlu0 %v409
  %v411 = vpop.xlane.xlu0 %410
  %v412 = vmul.f32 %v408, %v50
  %v413 = vmul.f32 %v411, %v50
  %v414 = vsub.f32 %v402, %v412
  %v415 = vsub.f32 %v403, %v413
  %v416 = vmul.f32 %v414, %v414
  %v417 = vmul.f32 %v415, %v415
  %v418 = vsel %vm43, %v416, 0.0
  %419 = vadd.xlane.f32.xlu0 %v418
  %v420 = vpop.xlane.xlu0 %419
  %v421 = vsel %vm43, %v417, 0.0
  %422 = vadd.xlane.f32.xlu0 %v421
  %v423 = vpop.xlane.xlu0 %422
  %v424 = vmul.f32 %v420, %v50
  %v425 = vmul.f32 %v423, %v50
  %v426 = vadd.f32 %v424, 1e-05
  %v427 = vadd.f32 %v425, 1e-05
  %v428 = vrsqrt.pop %v426
  %v429 = vrsqrt.pop %v427
  %v430 = vmul.f32 %v414, %v428
  %v431 = vmul.f32 %v415, %v429
  %v433 = vlaneseq
  %v434 = vshrl.u32 %v433, 7
  %v435 = vsub.s32 0, %v434
  %v436 = vrot.slane %v404, %v435
  %v438 = vmul.f32 %v430, %v436
  %v439 = vmul.f32 %v431, %v436
  %v441 = vlaneseq
  %v442 = vshrl.u32 %v441, 7
  %v443 = vsub.s32 0, %v442
  %v444 = vrot.slane %v405, %v443
  %v446 = vadd.f32 %v438, %v444
  %v447 = vadd.f32 %v439, %v444
  %v448 = vpack.c.bf16 %v447, %v446
  %v449 = vld [vmem:[%s9] sm:$0xf]
  %v450 = vld [vmem:[%s9 + $0x4] sm:$0xf]
  %v451 = vld [vmem:[%s9 + $0x8] sm:$0xf]
  %v452 = vld [vmem:[%s9 + $0xc] sm:$0xf]
  %v453 = vld [vmem:[%s9 + $0x10] sm:$0xf]
  %v454 = vld [vmem:[%s9 + $0x14] sm:$0xf]
  %v455 = vld [vmem:[%s9 + $0x18] sm:$0xf]
  %v456 = vld [vmem:[%s9 + $0x1c] sm:$0xf]
  %v457 = vld [vmem:[%s10] sm:$0x1]
  %v459 = vlaneseq
  %v460 = vshrl.u32 %v459, 7
  %v461 = vsub.s32 0, %v460
  %v462 = vrot.slane %v457, %v461
  %v472 = vunpack.c.l.b16 %v449
  %v473 = vunpack.c.l.b16 %v450
  %v474 = vunpack.c.l.b16 %v451
  %v475 = vunpack.c.l.b16 %v452
  %v476 = vunpack.c.l.b16 %v453
  %v477 = vunpack.c.l.b16 %v454
  %v478 = vunpack.c.l.b16 %v455
  %v479 = vunpack.c.l.b16 %v456
  %v480 = vpack.c.b16 %v473, %v472
  %v481 = vpack.c.b16 %v475, %v474
  %v482 = vpack.c.b16 %v477, %v476
  %v483 = vpack.c.b16 %v479, %v478
  %v489 = vsel %vm43, %v448, 0
  %491 = vmatprep.subr.bf16.mxu0 0
  %492 = vmatpush1.bf16.msra.mxu0 0
  %493 = vmatprep.subr.bf16.mxu0 0
  %494 = vmatpush1.bf16.msra.mxu0 0
  %495 = vmatprep.subr.bf16.mxu0 0
  %496 = vmatpush1.bf16.msra.mxu0 0
  %497 = vmatprep.subr.bf16.mxu0 0
  %498 = vmatpush1.bf16.msra.mxu0 0
  %499 = vmatprep.subr.bf16.mxu0 0
  %500 = vmatpush1.bf16.msra.mxu0 %v483
  %501 = vmatprep.subr.bf16.mxu0 0
  %502 = vmatpush1.bf16.msra.mxu0 %v482
  %503 = vmatprep.subr.bf16.mxu0 0
  %504 = vmatpush1.bf16.msra.mxu0 %v481
  %505 = vmatprep.subr.bf16.mxu0 0
  %506 = vmatpush1.bf16.msra.mxu0 %v480
  %507 = vmatprep.subr.bf16.mxu0 0
  %508 = vmatpush2.bf16.msra.mxu0 0
  %509 = vmatprep.subr.bf16.mxu0 0
  %510 = vmatpush2.bf16.msra.mxu0 0
  %511 = vmatprep.subr.bf16.mxu0 0
  %512 = vmatpush2.bf16.msra.mxu0 0
  %513 = vmatprep.subr.bf16.mxu0 0
  %514 = vmatpush2.bf16.msra.mxu0 0
  %515 = vmatprep.subr.bf16.mxu0 0
  %516 = vmatpush2.bf16.msra.mxu0 0
  %517 = vmatprep.subr.bf16.mxu0 0
  %518 = vmatpush2.bf16.msra.mxu0 0
  %519 = vmatprep.subr.bf16.mxu0 0
  %520 = vmatpush2.bf16.msra.mxu0 0
  %521 = vmatprep.subr.bf16.mxu0 0
  %522 = vmatpush2.bf16.msra.mxu0 0
  %523 = vmatprep.mubr.bf16.mxu0 0
  %524 = vmatmul.mubr.bf16.gmra.mxu0 %v489
  %v525 = vpop.f32.mrf.mxu0
  %v526 = vadd.f32 %v462, %v525
  %v527 = vpop.f32.mrf.mxu0
  %v528 = vpop.f32.mrf.mxu0
  %v529 = vadd.f32 %v462, %v528
  %v530 = vpop.f32.mrf.mxu0
  %531 = vdwg.mxu0
  %532 = vst [vmem:[%s11] sm:$0xff] %v526
  %533 = vst [vmem:[%s11 + $0x8] sm:$0xff] %v529
  // Predicated region
  $region46: #{conformer_linear_forward.7} parent=0 // pred_check
    _
  $region47: #{conformer_linear_forward.7} parent=0 // pred_check_branch
    %535 = sbr.rel (0) target = $region49
  $region48: #{conformer_linear_forward.7} parent=0 // pred_region
    _
  $region49: #{conformer_linear_forward.7} parent=0 // pred_fallthru
    _
  // Predicated region
  $region50: #{conformer_linear_forward.7} parent=0 // pred_check
    _
  $region51: #{conformer_linear_forward.7} parent=0 // pred_check_branch
    %537 = sbr.rel (0) target = $region53
  $region52: #{conformer_linear_forward.7} parent=0 // pred_region
    _
  $region53: #{conformer_linear_forward.7} parent=0 // pred_fallthru
    _

// kernel: conformer_linear_forward.6
$region0: #{conformer_linear_forward.6}
  #allocation0 [shape = 'u32[]', space=smem, size = 0x4, offset = 0x4, fixed_abs, tag = 'smem constant byte address 0x4 - core index']
  #allocation1 [shape = 'u32[144,128]{1,0:T(1,128)}', space=vmem, size = 0x12000, scoped, tag = 'internal scratch']
  #allocation2 [shape = 'f32[40,128]{1,0:T(8,128)}', space=vmem, size = 0x5000, scoped, tag = 'scratch operand']
  %s0 = inlined_call_operand.vmem [shape: f32[2,8,64], index: 0, kind: input, shape index: {}]
  %s1 = inlined_call_operand.vmem [shape: f32[1,64], index: 1, kind: input, shape index: {}]
  %s2 = inlined_call_operand.vmem [shape: f32[1,64], index: 2, kind: input, shape index: {}]
  %s3 = inlined_call_operand.vmem [shape: bf16[64,256], index: 3, kind: input, shape index: {}]
  %s4 = inlined_call_operand.vmem [shape: f32[1,256], index: 4, kind: input, shape index: {}]
  %s5 = inlined_call_operand.vmem [shape: f32[31,128], index: 5, kind: input, shape index: {}]
  %s6 = inlined_call_operand.vmem [shape: f32[1,128], index: 6, kind: input, shape index: {}]
  %s7 = inlined_call_operand.vmem [shape: f32[1,128], index: 7, kind: input, shape index: {}]
  %s8 = inlined_call_operand.vmem [shape: f32[1,128], index: 8, kind: input, shape index: {}]
  %s9 = inlined_call_operand.vmem [shape: bf16[128,64], index: 9, kind: input, shape index: {}]
  %s10 = inlined_call_operand.vmem [shape: f32[1,64], index: 10, kind: input, shape index: {}]
  %s11 = inlined_call_operand.vmem [shape: f32[2,8,64], index: 11, kind: output, shape index: {}]
  %s12 = sld [smem:[#allocation0]]
  $region77: #{conformer_linear_forward.6} parent=0
    _
  %s14 = ssub.s32 1, %s12
  %s15 = scalar_select 0, %s14, %s12
  loop: start=0, step=1, limit=4
  $region2: #{conformer_linear_forward.6} parent=0 // loop_pre_header
    _
  $region3: #{conformer_linear_forward.6} parent=0 // loop_header
    %s17 = sphi 0, %s21
    %p18 = scmp.ge.s32.totalorder %s17, 4
    %s27 = sphi 0, %s29
    %s30 = sphi 0, %s27
    %s31 = sphi 0, %s30
    %s47 = sphi 0, %s31
    %s51 = sphi 0, %s51
    %s53 = sphi 0, %s51
    %s54 = sphi 0, %s53
    %s68 = sphi 0, %s54
    %s72 = sphi 0, %s72
    %s74 = sphi 0, %s72
    %s75 = sphi 0, %s74
    %s89 = sphi 0, %s75
    %s93 = sphi 0, %s93
    %s95 = sphi 0, %s93
    %s96 = sphi 0, %s95
    %s110 = sphi 0, %s96
    %s114 = sphi 0, %s114
    %s116 = sphi 0, %s114
    %s117 = sphi 0, %s116
    %s131 = sphi 0, %s117
    %s135 = sphi 0, %s135
    %s137 = sphi 0, %s135
    %s138 = sphi 0, %s137
    %s152 = sphi 0, %s138
    %s156 = sphi 0, %s156
    %s158 = sphi 0, %s156
    %s159 = sphi 0, %s158
    %s173 = sphi 0, %s159
    %s177 = sphi 0, %s177
    %s179 = sphi 0, %s177
    %s180 = sphi 0, %s179
    %s194 = sphi 0, %s180
    %s198 = sphi 0, %s198
    %s200 = sphi 0, %s198
    %s201 = sphi 0, %s200
    %s215 = sphi 0, %s201
    %s219 = sphi 0, %s219
    %s221 = sphi 0, %s219
    %s222 = sphi 0, %s221
    %s236 = sphi 0, %s222
    %s240 = sphi 0, %s240
    %s242 = sphi 0, %s240
    %s243 = sphi 0, %s242
    %s257 = sphi 0, %s243
    %s263 = sphi 0, %s265
    %s266 = sphi 0, %s263
    %s267 = sphi 0, %s266
    %s283 = sphi 0, %s267
  $region4: #{conformer_linear_forward.6} parent=0 // loop_header_branch
    %20 = sbr.rel (%p18) target = $region8
  $region5: #{conformer_linear_forward.6} parent=0 // loop_body
    %s22 = ssub.s32 %s17, 1
    %s23 = ssub.s32 %s17, 2
    %s24 = sadd.s32 %s17, 1
    %s25 = ssub.s32 %s17, %s24
    %p26 = scmp.eq.s32.totalorder %s25, 0
    %s28 = sadd.s32 %s27, 1
    %s29 = scalar_select %p26, %s27, %s28
    %p32 = pneg %p26
    %p33 = scmp.eq.s32.totalorder %s17, 1
    %p34 = por %p32, %p33
    %p35 = scmp.ne.s32.totalorder %s27, %s30
    %p36 = scmp.eq.s32.totalorder %s17, 0
    %p37 = por %p35, %p36
    %p38 = scmp.ne.s32.totalorder %s27, %s30
    %p39 = scmp.eq.s32.totalorder %s22, 1
    %p40 = por %p38, %p39
    %p41 = scmp.ne.s32.totalorder %s30, %s31
    %p42 = scmp.eq.s32.totalorder %s22, 0
    %p43 = por %p41, %p42
    %p44 = scmp.ne.s32.totalorder %s30, %s31
    %p45 = scmp.eq.s32.totalorder %s23, 1
    %p46 = por %p44, %p45
    %p48 = scmp.ne.s32.totalorder %s31, %s47
    %p49 = scmp.eq.s32.totalorder %s23, 0
    %p50 = por %p48, %p49
    %s52 = sadd.s32 %s51, 1
    %p55 = scmp.eq.s32.totalorder %s17, 1
    %p56 = scmp.ne.s32.totalorder %s51, %s53
    %p57 = scmp.eq.s32.totalorder %s17, 0
    %p58 = por %p56, %p57
    %p59 = scmp.ne.s32.totalorder %s51, %s53
    %p60 = scmp.eq.s32.totalorder %s22, 1
    %p61 = por %p59, %p60
    %p62 = scmp.ne.s32.totalorder %s53, %s54
    %p63 = scmp.eq.s32.totalorder %s22, 0
    %p64 = por %p62, %p63
    %p65 = scmp.ne.s32.totalorder %s53, %s54
    %p66 = scmp.eq.s32.totalorder %s23, 1
    %p67 = por %p65, %p66
    %p69 = scmp.ne.s32.totalorder %s54, %s68
    %p70 = scmp.eq.s32.totalorder %s23, 0
    %p71 = por %p69, %p70
    %s73 = sadd.s32 %s72, 1
    %p76 = scmp.eq.s32.totalorder %s17, 1
    %p77 = scmp.ne.s32.totalorder %s72, %s74
    %p78 = scmp.eq.s32.totalorder %s17, 0
    %p79 = por %p77, %p78
    %p80 = scmp.ne.s32.totalorder %s72, %s74
    %p81 = scmp.eq.s32.totalorder %s22, 1
    %p82 = por %p80, %p81
    %p83 = scmp.ne.s32.totalorder %s74, %s75
    %p84 = scmp.eq.s32.totalorder %s22, 0
    %p85 = por %p83, %p84
    %p86 = scmp.ne.s32.totalorder %s74, %s75
    %p87 = scmp.eq.s32.totalorder %s23, 1
    %p88 = por %p86, %p87
    %p90 = scmp.ne.s32.totalorder %s75, %s89
    %p91 = scmp.eq.s32.totalorder %s23, 0
    %p92 = por %p90, %p91
    %s94 = sadd.s32 %s93, 1
    %p97 = scmp.eq.s32.totalorder %s17, 1
    %p98 = scmp.ne.s32.totalorder %s93, %s95
    %p99 = scmp.eq.s32.totalorder %s17, 0
    %p100 = por %p98, %p99
    %p101 = scmp.ne.s32.totalorder %s93, %s95
    %p102 = scmp.eq.s32.totalorder %s22, 1
    %p103 = por %p101, %p102
    %p104 = scmp.ne.s32.totalorder %s95, %s96
    %p105 = scmp.eq.s32.totalorder %s22, 0
    %p106 = por %p104, %p105
    %p107 = scmp.ne.s32.totalorder %s95, %s96
    %p108 = scmp.eq.s32.totalorder %s23, 1
    %p109 = por %p107, %p108
    %p111 = scmp.ne.s32.totalorder %s96, %s110
    %p112 = scmp.eq.s32.totalorder %s23, 0
    %p113 = por %p111, %p112
    %s115 = sadd.s32 %s114, 1
    %p118 = scmp.eq.s32.totalorder %s17, 1
    %p119 = scmp.ne.s32.totalorder %s114, %s116
    %p120 = scmp.eq.s32.totalorder %s17, 0
    %p121 = por %p119, %p120
    %p122 = scmp.ne.s32.totalorder %s114, %s116
    %p123 = scmp.eq.s32.totalorder %s22, 1
    %p124 = por %p122, %p123
    %p125 = scmp.ne.s32.totalorder %s116, %s117
    %p126 = scmp.eq.s32.totalorder %s22, 0
    %p127 = por %p125, %p126
    %p128 = scmp.ne.s32.totalorder %s116, %s117
    %p129 = scmp.eq.s32.totalorder %s23, 1
    %p130 = por %p128, %p129
    %p132 = scmp.ne.s32.totalorder %s117, %s131
    %p133 = scmp.eq.s32.totalorder %s23, 0
    %p134 = por %p132, %p133
    %s136 = sadd.s32 %s135, 1
    %p139 = scmp.eq.s32.totalorder %s17, 1
    %p140 = scmp.ne.s32.totalorder %s135, %s137
    %p141 = scmp.eq.s32.totalorder %s17, 0
    %p142 = por %p140, %p141
    %p143 = scmp.ne.s32.totalorder %s135, %s137
    %p144 = scmp.eq.s32.totalorder %s22, 1
    %p145 = por %p143, %p144
    %p146 = scmp.ne.s32.totalorder %s137, %s138
    %p147 = scmp.eq.s32.totalorder %s22, 0
    %p148 = por %p146, %p147
    %p149 = scmp.ne.s32.totalorder %s137, %s138
    %p150 = scmp.eq.s32.totalorder %s23, 1
    %p151 = por %p149, %p150
    %p153 = scmp.ne.s32.totalorder %s138, %s152
    %p154 = scmp.eq.s32.totalorder %s23, 0
    %p155 = por %p153, %p154
    %s157 = sadd.s32 %s156, 1
    %p160 = scmp.eq.s32.totalorder %s17, 1
    %p161 = scmp.ne.s32.totalorder %s156, %s158
    %p162 = scmp.eq.s32.totalorder %s17, 0
    %p163 = por %p161, %p162
    %p164 = scmp.ne.s32.totalorder %s156, %s158
    %p165 = scmp.eq.s32.totalorder %s22, 1
    %p166 = por %p164, %p165
    %p167 = scmp.ne.s32.totalorder %s158, %s159
    %p168 = scmp.eq.s32.totalorder %s22, 0
    %p169 = por %p167, %p168
    %p170 = scmp.ne.s32.totalorder %s158, %s159
    %p171 = scmp.eq.s32.totalorder %s23, 1
    %p172 = por %p170, %p171
    %p174 = scmp.ne.s32.totalorder %s159, %s173
    %p175 = scmp.eq.s32.totalorder %s23, 0
    %p176 = por %p174, %p175
    %s178 = sadd.s32 %s177, 1
    %p181 = scmp.eq.s32.totalorder %s17, 1
    %p182 = scmp.ne.s32.totalorder %s177, %s179
    %p183 = scmp.eq.s32.totalorder %s17, 0
    %p184 = por %p182, %p183
    %p185 = scmp.ne.s32.totalorder %s177, %s179
    %p186 = scmp.eq.s32.totalorder %s22, 1
    %p187 = por %p185, %p186
    %p188 = scmp.ne.s32.totalorder %s179, %s180
    %p189 = scmp.eq.s32.totalorder %s22, 0
    %p190 = por %p188, %p189
    %p191 = scmp.ne.s32.totalorder %s179, %s180
    %p192 = scmp.eq.s32.totalorder %s23, 1
    %p193 = por %p191, %p192
    %p195 = scmp.ne.s32.totalorder %s180, %s194
    %p196 = scmp.eq.s32.totalorder %s23, 0
    %p197 = por %p195, %p196
    %s199 = sadd.s32 %s198, 1
    %p202 = scmp.eq.s32.totalorder %s17, 1
    %p203 = scmp.ne.s32.totalorder %s198, %s200
    %p204 = scmp.eq.s32.totalorder %s17, 0
    %p205 = por %p203, %p204
    %p206 = scmp.ne.s32.totalorder %s198, %s200
    %p207 = scmp.eq.s32.totalorder %s22, 1
    %p208 = por %p206, %p207
    %p209 = scmp.ne.s32.totalorder %s200, %s201
    %p210 = scmp.eq.s32.totalorder %s22, 0
    %p211 = por %p209, %p210
    %p212 = scmp.ne.s32.totalorder %s200, %s201
    %p213 = scmp.eq.s32.totalorder %s23, 1
    %p214 = por %p212, %p213
    %p216 = scmp.ne.s32.totalorder %s201, %s215
    %p217 = scmp.eq.s32.totalorder %s23, 0
    %p218 = por %p216, %p217
    %s220 = sadd.s32 %s219, 1
    %p223 = scmp.eq.s32.totalorder %s17, 1
    %p224 = scmp.ne.s32.totalorder %s219, %s221
    %p225 = scmp.eq.s32.totalorder %s17, 0
    %p226 = por %p224, %p225
    %p227 = scmp.ne.s32.totalorder %s219, %s221
    %p228 = scmp.eq.s32.totalorder %s22, 1
    %p229 = por %p227, %p228
    %p230 = scmp.ne.s32.totalorder %s221, %s222
    %p231 = scmp.eq.s32.totalorder %s22, 0
    %p232 = por %p230, %p231
    %p233 = scmp.ne.s32.totalorder %s221, %s222
    %p234 = scmp.eq.s32.totalorder %s23, 1
    %p235 = por %p233, %p234
    %p237 = scmp.ne.s32.totalorder %s222, %s236
    %p238 = scmp.eq.s32.totalorder %s23, 0
    %p239 = por %p237, %p238
    %s241 = sadd.s32 %s240, 1
    %p244 = scmp.eq.s32.totalorder %s17, 1
    %p245 = scmp.ne.s32.totalorder %s240, %s242
    %p246 = scmp.eq.s32.totalorder %s17, 0
    %p247 = por %p245, %p246
    %p248 = scmp.ne.s32.totalorder %s240, %s242
    %p249 = scmp.eq.s32.totalorder %s22, 1
    %p250 = por %p248, %p249
    %p251 = scmp.ne.s32.totalorder %s242, %s243
    %p252 = scmp.eq.s32.totalorder %s22, 0
    %p253 = por %p251, %p252
    %p254 = scmp.ne.s32.totalorder %s242, %s243
    %p255 = scmp.eq.s32.totalorder %s23, 1
    %p256 = por %p254, %p255
    %p258 = scmp.ne.s32.totalorder %s243, %s257
    %p259 = scmp.eq.s32.totalorder %s23, 0
    %p260 = por %p258, %p259
    %s261 = ssub.s32 %s17, %s24
    %p262 = scmp.eq.s32.totalorder %s261, 0
    %s264 = sadd.s32 %s263, 1
    %s265 = scalar_select %p262, %s263, %s264
    %p268 = pneg %p262
    %p269 = scmp.eq.s32.totalorder %s17, 1
    %p270 = por %p268, %p269
    %p271 = scmp.ne.s32.totalorder %s263, %s266
    %p272 = scmp.eq.s32.totalorder %s17, 0
    %p273 = por %p271, %p272
    %p274 = scmp.ne.s32.totalorder %s263, %s266
    %p275 = scmp.eq.s32.totalorder %s22, 1
    %p276 = por %p274, %p275
    %p277 = scmp.ne.s32.totalorder %s266, %s267
    %p278 = scmp.eq.s32.totalorder %s22, 0
    %p279 = por %p277, %p278
    %p280 = scmp.ne.s32.totalorder %s266, %s267
    %p281 = scmp.eq.s32.totalorder %s23, 1
    %p282 = por %p280, %p281
    %p284 = scmp.ne.s32.totalorder %s267, %s283
    %p285 = scmp.eq.s32.totalorder %s23, 0
    %p286 = por %p284, %p285
    %p287 = scmp.le.s32.totalorder 1, %s17
    %p288 = scmp.lt.s32.totalorder %s17, 3
    %p289 = pnand %p287, %p288
    %p290 = pneg %p289
    // Predicated region
    $region9: #{conformer_linear_forward.6} parent=5 // pred_check
      _
    $region10: #{conformer_linear_forward.6} parent=5 // pred_check_branch
      %292 = sbr.rel (%p289) target = $region12
    $region11: #{conformer_linear_forward.6} parent=5 // pred_region
      %s293 = ssub.s32 %s17, 1
      // Predicated region
      $region13: #{conformer_linear_forward.6} parent=11 // pred_check
        %p294 = pneg %p64
      $region14: #{conformer_linear_forward.6} parent=11 // pred_check_branch
        %296 = sbr.rel (%p294) target = $region16
      $region15: #{conformer_linear_forward.6} parent=11 // pred_region
        _
      $region16: #{conformer_linear_forward.6} parent=11 // pred_fallthru
        _
      // Predicated region
      $region17: #{conformer_linear_forward.6} parent=11 // pred_check
        %p297 = pneg %p85
      $region18: #{conformer_linear_forward.6} parent=11 // pred_check_branch
        %299 = sbr.rel (%p297) target = $region20
      $region19: #{conformer_linear_forward.6} parent=11 // pred_region
        _
      $region20: #{conformer_linear_forward.6} parent=11 // pred_fallthru
        _
      // Predicated region
      $region21: #{conformer_linear_forward.6} parent=11 // pred_check
        %p300 = pneg %p106
      $region22: #{conformer_linear_forward.6} parent=11 // pred_check_branch
        %302 = sbr.rel (%p300) target = $region24
      $region23: #{conformer_linear_forward.6} parent=11 // pred_region
        _
      $region24: #{conformer_linear_forward.6} parent=11 // pred_fallthru
        _
      // Predicated region
      $region25: #{conformer_linear_forward.6} parent=11 // pred_check
        %p303 = pneg %p127
      $region26: #{conformer_linear_forward.6} parent=11 // pred_check_branch
        %305 = sbr.rel (%p303) target = $region28
      $region27: #{conformer_linear_forward.6} parent=11 // pred_region
        _
      $region28: #{conformer_linear_forward.6} parent=11 // pred_fallthru
        _
      // Predicated region
      $region29: #{conformer_linear_forward.6} parent=11 // pred_check
        %p306 = pneg %p148
      $region30: #{conformer_linear_forward.6} parent=11 // pred_check_branch
        %308 = sbr.rel (%p306) target = $region32
      $region31: #{conformer_linear_forward.6} parent=11 // pred_region
        _
      $region32: #{conformer_linear_forward.6} parent=11 // pred_fallthru
        _
      // Predicated region
      $region33: #{conformer_linear_forward.6} parent=11 // pred_check
        %p309 = pneg %p169
      $region34: #{conformer_linear_forward.6} parent=11 // pred_check_branch
        %311 = sbr.rel (%p309) target = $region36
      $region35: #{conformer_linear_forward.6} parent=11 // pred_region
        _
      $region36: #{conformer_linear_forward.6} parent=11 // pred_fallthru
        _
      // Predicated region
      $region37: #{conformer_linear_forward.6} parent=11 // pred_check
        %p312 = pneg %p190
      $region38: #{conformer_linear_forward.6} parent=11 // pred_check_branch
        %314 = sbr.rel (%p312) target = $region40
      $region39: #{conformer_linear_forward.6} parent=11 // pred_region
        _
      $region40: #{conformer_linear_forward.6} parent=11 // pred_fallthru
        _
      // Predicated region
      $region41: #{conformer_linear_forward.6} parent=11 // pred_check
        %p315 = pneg %p211
      $region42: #{conformer_linear_forward.6} parent=11 // pred_check_branch
        %317 = sbr.rel (%p315) target = $region44
      $region43: #{conformer_linear_forward.6} parent=11 // pred_region
        _
      $region44: #{conformer_linear_forward.6} parent=11 // pred_fallthru
        _
      // Predicated region
      $region45: #{conformer_linear_forward.6} parent=11 // pred_check
        %p318 = pneg %p232
      $region46: #{conformer_linear_forward.6} parent=11 // pred_check_branch
        %320 = sbr.rel (%p318) target = $region48
      $region47: #{conformer_linear_forward.6} parent=11 // pred_region
        _
      $region48: #{conformer_linear_forward.6} parent=11 // pred_fallthru
        _
      // Predicated region
      $region49: #{conformer_linear_forward.6} parent=11 // pred_check
        %p321 = pneg %p253
      $region50: #{conformer_linear_forward.6} parent=11 // pred_check_branch
        %323 = sbr.rel (%p321) target = $region52
      $region51: #{conformer_linear_forward.6} parent=11 // pred_region
        _
      $region52: #{conformer_linear_forward.6} parent=11 // pred_fallthru
        _
    $region12: #{conformer_linear_forward.6} parent=5 // pred_fallthru
      _
    %p324 = scmp.lt.s32.totalorder %s17, 2
    // Predicated region
    $region53: #{conformer_linear_forward.6} parent=5 // pred_check
      %p325 = pneg %p324
    $region54: #{conformer_linear_forward.6} parent=5 // pred_check_branch
      %327 = sbr.rel (%p325) target = $region56
    $region55: #{conformer_linear_forward.6} parent=5 // pred_region
      // Predicated region
      $region57: #{conformer_linear_forward.6} parent=55 // pred_check
        %p328 = pneg %p37
      $region58: #{conformer_linear_forward.6} parent=55 // pred_check_branch
        %330 = sbr.rel (%p328) target = $region60
      $region59: #{conformer_linear_forward.6} parent=55 // pred_region
        %p331 = scmp.lt.s32.totalorder %s17, 1
        %s332 = scalar_select %p331, %s17, 1
        %s333 = smul.addr %s332, 8
        %s334 = scalar_lea.vmem %s0, %s333
      $region60: #{conformer_linear_forward.6} parent=55 // pred_fallthru
        _
    $region56: #{conformer_linear_forward.6} parent=5 // pred_fallthru
      _
    %p335 = scmp.le.s32.totalorder 1, %s17
    %p336 = scmp.lt.s32.totalorder %s17, 3
    %p337 = pnand %p335, %p336
    %p338 = pneg %p337
    // Predicated region
    $region61: #{conformer_linear_forward.6} parent=5 // pred_check
      _
    $region62: #{conformer_linear_forward.6} parent=5 // pred_check_branch
      %340 = sbr.rel (%p337) target = $region64
    $region63: #{conformer_linear_forward.6} parent=5 // pred_region
      %s341 = ssub.s32 %s17, 1
      %p342 = scmp.lt.s32.totalorder %s22, 1
      %s343 = scalar_select %p342, %s22, 1
      %s344 = smul.addr %s343, 8
      %s345 = scalar_lea.vmem %s0, %s344
      %p346 = pneg %p43
      %p347 = pneg %p40
      %p348 = pneg %p64
      %p349 = pneg %p61
      %p350 = pneg %p85
      %p351 = pneg %p82
      %p352 = pneg %p106
      %p353 = pneg %p103
      %p354 = pneg %p127
      %p355 = pneg %p124
      %p356 = pneg %p148
      %p357 = pneg %p145
      %p358 = pneg %p169
      %p359 = pneg %p166
      %p360 = pneg %p190
      %p361 = pneg %p187
      %p362 = pneg %p211
      %p363 = pneg %p208
      %p364 = pneg %p232
      %p365 = pneg %p229
      %p366 = pneg %p253
      %p367 = pneg %p250
      %p368 = pneg %p279
      %p369 = pneg %p276
      %p370 = scmp.lt.s32.totalorder %s22, 1
      %s371 = scalar_select %p370, %s22, 1
      %s372 = smul.addr %s371, 8
      %s373 = scalar_lea.vmem %s11, %s372
      %p374 = scmp.lt.s32.totalorder %s22, 1
      %s375 = scalar_select %p374, %s22, 1
      %s376 = smul.addr %s375, 8
      %s377 = scalar_lea.vmem %s0, %s376
      %p378 = scmp.lt.s32.totalorder %s22, 1
      %s379 = scalar_select %p378, %s22, 1
      %s380 = smul.addr %s379, 8
      %s381 = scalar_lea.vmem %s11, %s380
      %v383 = vld [vmem:[%s377] sm:$0xff]
      %v384 = vld [vmem:[%s1] sm:$0x1]
      %v385 = vld [vmem:[%s2] sm:$0x1]
      %vm386 = vcmask 523264
      %v387 = vsel %vm386, %v383, 0.0
      %388 = vadd.xlane.f32.xlu0 %v387
      %v389 = vpop.xlane.xlu0 %388
      %v390 = vrcp.pop 64.0
      %v391 = vmul.f32 %v389, %v390
      %v392 = vsub.f32 %v383, %v391
      %v393 = vmul.f32 %v392, %v392
      %v394 = vsel %vm386, %v393, 0.0
      %395 = vadd.xlane.f32.xlu0 %v394
      %v396 = vpop.xlane.xlu0 %395
      %v397 = vmul.f32 %v396, %v390
      %v398 = vadd.f32 %v397, 1e-05
      %v399 = vrsqrt.pop %v398
      %v400 = vmul.f32 %v392, %v399
      %v402 = vlaneseq
      %v403 = vshrl.u32 %v402, 7
      %v404 = vsub.s32 0, %v403
      %v405 = vrot.slane %v384, %v404
      %v407 = vmul.f32 %v400, %v405
      %v409 = vlaneseq
      %v410 = vshrl.u32 %v409, 7
      %v411 = vsub.s32 0, %v410
      %v412 = vrot.slane %v385, %v411
      %v414 = vadd.f32 %v407, %v412
      %v415 = vpack.c.bf16 %v414, %v414
      %v416 = vld [vmem:[%s3] sm:$0xff]
      %v417 = vld [vmem:[%s3 + $0x8] sm:$0xff]
      %v418 = vld [vmem:[%s3 + $0x10] sm:$0xff]
      %v419 = vld [vmem:[%s3 + $0x18] sm:$0xff]
      %v420 = vld [vmem:[%s3 + $0x20] sm:$0xff]
      %v421 = vld [vmem:[%s3 + $0x28] sm:$0xff]
      %v422 = vld [vmem:[%s3 + $0x30] sm:$0xff]
      %v423 = vld [vmem:[%s3 + $0x38] sm:$0xff]
      %v424 = vld [vmem:[%s4] sm:$0x3]
      %v426 = vlaneseq
      %v427 = vshrl.u32 %v426, 7
      %v428 = vsub.s32 0, %v427
      %v429 = vrot.slane %v424, %v428
      %v430 = vlaneseq
      %v431 = vshrl.u32 %v430, 7
      %v432 = vsub.s32 1, %v431
      %v433 = vrot.slane %v424, %v432
      %v444 = vunpack.c.l.b16 %v416
      %v445 = vunpack.c.h.b16 %v416
      %v446 = vunpack.c.l.b16 %v417
      %v447 = vunpack.c.h.b16 %v417
      %v448 = vunpack.c.l.b16 %v418
      %v449 = vunpack.c.h.b16 %v418
      %v450 = vunpack.c.l.b16 %v419
      %v451 = vunpack.c.h.b16 %v419
      %v452 = vunpack.c.l.b16 %v420
      %v453 = vunpack.c.h.b16 %v420
      %v454 = vunpack.c.l.b16 %v421
      %v455 = vunpack.c.h.b16 %v421
      %v456 = vunpack.c.l.b16 %v422
      %v457 = vunpack.c.h.b16 %v422
      %v458 = vunpack.c.l.b16 %v423
      %v459 = vunpack.c.h.b16 %v423
      %v460 = vpack.c.b16 %v446, %v444
      %v461 = vpack.c.b16 %v447, %v445
      %v462 = vpack.c.b16 %v450, %v448
      %v463 = vpack.c.b16 %v451, %v449
      %v464 = vpack.c.b16 %v454, %v452
      %v465 = vpack.c.b16 %v455, %v453
      %v466 = vpack.c.b16 %v458, %v456
      %v467 = vpack.c.b16 %v459, %v457
      %v477 = vsel %vm386, %v415, 0
      %479 = vmatprep.subr.bf16.mxu0 0
      %480 = vmatpush1.bf16.msra.mxu0 0
      %481 = vmatprep.subr.bf16.mxu0 0
      %482 = vmatpush1.bf16.msra.mxu0 0
      %483 = vmatprep.subr.bf16.mxu0 0
      %484 = vmatpush1.bf16.msra.mxu0 0
      %485 = vmatprep.subr.bf16.mxu0 0
      %486 = vmatpush1.bf16.msra.mxu0 0
      %487 = vmatprep.subr.bf16.mxu0 %v467
      %488 = vmatpush1.bf16.msra.mxu0 %v466
      %489 = vmatprep.subr.bf16.mxu0 %v465
      %490 = vmatpush1.bf16.msra.mxu0 %v464
      %491 = vmatprep.subr.bf16.mxu0 %v463
      %492 = vmatpush1.bf16.msra.mxu0 %v462
      %493 = vmatprep.subr.bf16.mxu0 %v461
      %494 = vmatpush1.bf16.msra.mxu0 %v460
      %495 = vmatprep.subr.bf16.mxu0 0
      %496 = vmatpush2.bf16.msra.mxu0 0
      %497 = vmatprep.subr.bf16.mxu0 0
      %498 = vmatpush2.bf16.msra.mxu0 0
      %499 = vmatprep.subr.bf16.mxu0 0
      %500 = vmatpush2.bf16.msra.mxu0 0
      %501 = vmatprep.subr.bf16.mxu0 0
      %502 = vmatpush2.bf16.msra.mxu0 0
      %503 = vmatprep.subr.bf16.mxu0 0
      %504 = vmatpush2.bf16.msra.mxu0 0
      %505 = vmatprep.subr.bf16.mxu0 0
      %506 = vmatpush2.bf16.msra.mxu0 0
      %507 = vmatprep.subr.bf16.mxu0 0
      %508 = vmatpush2.bf16.msra.mxu0 0
      %509 = vmatprep.subr.bf16.mxu0 0
      %510 = vmatpush2.bf16.msra.mxu0 0
      %511 = vmatprep.mubr.bf16.mxu0 0
      %512 = vmatmul.mubr.bf16.gmra.mxu0 %v477
      %v513 = vpop.f32.mrf.mxu0
      %v514 = vadd.f32 %v429, %v513
      %v515 = vpop.f32.mrf.mxu0
      %v516 = vadd.f32 %v433, %v515
      %v517 = vpop.f32.mrf.mxu0
      %v518 = vpop.f32.mrf.mxu0
      %519 = vdwg.mxu0
      %v520 = vxor.u32 %v516, 2147483648
      %v521 = vmul.f32 %v520, 1.442695
      %v522 = vpow.pop %v521
      %v523 = vadd.f32 %v522, 1.0
      %v524 = vrcp.pop %v523
      %v525 = vmul.f32 1.0, %v524
      %v526 = vmul.f32 %v514, %v525
      %527 = vst [vmem:[#allocation2] sm:$0xff] 0.0
      %528 = vst [vmem:[#allocation2 + $0x8] sm:$0xff] 0.0
      %529 = vst [vmem:[#allocation2 + $0x18] sm:$0xff] 0.0
      %530 = vst [vmem:[#allocation2 + $0x20] sm:$0xff] 0.0
      %531 = vst [vmem:[#allocation2 + $0x10] sm:$0xff] %v526
      %v532 = vld [vmem:[#allocation2] sm:$0xff]
      %v533 = vld [vmem:[#allocation2 + $0x8] sm:$0xff]
      %v534 = vld [vmem:[#allocation2 + $0x10] sm:$0xff]
      %v535 = vld [vmem:[#allocation2 + $0x18] sm:$0xff]
      %v536 = vld [vmem:[#allocation2 + $0x20] sm:$0xff]
      %v537 = vld [vmem:[%s5] sm:$0xff]
      %v538 = vld [vmem:[%s5 + $0x8] sm:$0xff]
      %v539 = vld [vmem:[%s5 + $0x10] sm:$0xff]
      %v540 = vld [vmem:[%s5 + $0x18] sm:$0x7f]
      %v541 = vlaneseq
      %v542 = vshrl.u32 %v541, 7
      %v543 = vsub.s32 0, %v542
      %v544 = vrot.slane %v537, %v543
      %v545 = vmul.f32 %v532, %v544
      %v546 = vmul.f32 %v533, %v544
      %v547 = vadd.f32 %v545, 0.0
      %v548 = vadd.f32 %v546, 0.0
      %v549 = vlaneseq
      %v550 = vshrl.u32 %v549, 7
      %v551 = vsub.s32 1, %v550
      %v552 = vrot.slane %v537, %v551
      %v553 = vmul.f32 %v532, %v552
      %v554 = vmul.f32 %v533, %v552
      %v555 = vadd.f32 %v553, 0.0
      %v556 = vadd.f32 %v554, 0.0
      %v557 = vlaneseq
      %v558 = vshrl.u32 %v557, 7
      %v559 = vsub.s32 2, %v558
      %v560 = vrot.slane %v537, %v559
      %v561 = vmul.f32 %v532, %v560
      %v562 = vmul.f32 %v533, %v560
      %v563 = vadd.f32 %v561, 0.0
      %v564 = vadd.f32 %v562, 0.0
      %v565 = vlaneseq
      %v566 = vshrl.u32 %v565, 7
      %v567 = vsub.s32 3, %v566
      %v568 = vrot.slane %v537, %v567
      %v569 = vmul.f32 %v532, %v568
      %v570 = vmul.f32 %v533, %v568
      %v571 = vadd.f32 %v569, 0.0
      %v572 = vadd.f32 %v570, 0.0
      %v573 = vlaneseq
      %v574 = vshrl.u32 %v573, 7
      %v575 = vsub.s32 4, %v574
      %v576 = vrot.slane %v537, %v575
      %v577 = vmul.f32 %v532, %v576
      %v578 = vmul.f32 %v533, %v576
      %vm581 = vcmask 1043456
      %v582 = vrot.slane %v577, 4
      %v583 = vrot.slane %v578, 4
      %v584 = vsel %vm581, %v582, %v583
      %v587 = vadd.f32 %v547, %v584
      %v588 = vadd.f32 %v548, %v583
      %v589 = vlaneseq
      %v590 = vshrl.u32 %v589, 7
      %v591 = vsub.s32 5, %v590
      %v592 = vrot.slane %v537, %v591
      %v593 = vmul.f32 %v532, %v592
      %v594 = vmul.f32 %v533, %v592
      %v597 = vrot.slane %v593, 4
      %v598 = vrot.slane %v594, 4
      %v599 = vsel %vm581, %v597, %v598
      %v602 = vadd.f32 %v555, %v599
      %v603 = vadd.f32 %v556, %v598
      %v604 = vlaneseq
      %v605 = vshrl.u32 %v604, 7
      %v606 = vsub.s32 6, %v605
      %v607 = vrot.slane %v537, %v606
      %v608 = vmul.f32 %v532, %v607
      %v609 = vmul.f32 %v533, %v607
      %v612 = vrot.slane %v608, 4
      %v613 = vrot.slane %v609, 4
      %v614 = vsel %vm581, %v612, %v613
      %v617 = vadd.f32 %v563, %v614
      %v618 = vadd.f32 %v564, %v613
      %v619 = vlaneseq
      %v620 = vshrl.u32 %v619, 7
      %v621 = vsub.s32 7, %v620
      %v622 = vrot.slane %v537, %v621
      %v623 = vmul.f32 %v533, %v622
      %v625 = vrot.slane %v623, 4
      %v627 = vadd.f32 %v571, %v625
      %v628 = vadd.f32 %v572, %v625
      %v629 = vlaneseq
      %v630 = vshrl.u32 %v629, 7
      %v631 = vsub.s32 0, %v630
      %v632 = vrot.slane %v538, %v631
      %v633 = vmul.f32 %v533, %v632
      %v634 = vmul.f32 %v534, %v632
      %v635 = vadd.f32 %v587, %v633
      %v636 = vadd.f32 %v588, %v634
      %v637 = vlaneseq
      %v638 = vshrl.u32 %v637, 7
      %v639 = vsub.s32 1, %v638
      %v640 = vrot.slane %v538, %v639
      %v641 = vmul.f32 %v533, %v640
      %v642 = vmul.f32 %v534, %v640
      %v643 = vadd.f32 %v602, %v641
      %v644 = vadd.f32 %v603, %v642
      %v645 = vlaneseq
      %v646 = vshrl.u32 %v645, 7
      %v647 = vsub.s32 2, %v646
      %v648 = vrot.slane %v538, %v647
      %v649 = vmul.f32 %v533, %v648
      %v650 = vmul.f32 %v534, %v648
      %v651 = vadd.f32 %v617, %v649
      %v652 = vadd.f32 %v618, %v650
      %v653 = vlaneseq
      %v654 = vshrl.u32 %v653, 7
      %v655 = vsub.s32 3, %v654
      %v656 = vrot.slane %v538, %v655
      %v657 = vmul.f32 %v533, %v656
      %v658 = vmul.f32 %v534, %v656
      %v659 = vadd.f32 %v627, %v657
      %v660 = vadd.f32 %v628, %v658
      %v661 = vlaneseq
      %v662 = vshrl.u32 %v661, 7
      %v663 = vsub.s32 4, %v662
      %v664 = vrot.slane %v538, %v663
      %v665 = vmul.f32 %v533, %v664
      %v666 = vmul.f32 %v534, %v664
      %v669 = vrot.slane %v665, 4
      %v670 = vrot.slane %v666, 4
      %v671 = vsel %vm581, %v669, %v670
      %v674 = vadd.f32 %v635, %v671
      %v675 = vadd.f32 %v636, %v670
      %v676 = vlaneseq
      %v677 = vshrl.u32 %v676, 7
      %v678 = vsub.s32 5, %v677
      %v679 = vrot.slane %v538, %v678
      %v680 = vmul.f32 %v533, %v679
      %v681 = vmul.f32 %v534, %v679
      %v684 = vrot.slane %v680, 4
      %v685 = vrot.slane %v681, 4
      %v686 = vsel %vm581, %v684, %v685
      %v689 = vadd.f32 %v643, %v686
      %v690 = vadd.f32 %v644, %v685
      %v691 = vlaneseq
      %v692 = vshrl.u32 %v691, 7
      %v693 = vsub.s32 6, %v692
      %v694 = vrot.slane %v538, %v693
      %v695 = vmul.f32 %v533, %v694
      %v696 = vmul.f32 %v534, %v694
      %v699 = vrot.slane %v695, 4
      %v700 = vrot.slane %v696, 4
      %v701 = vsel %vm581, %v699, %v700
      %v704 = vadd.f32 %v651, %v701
      %v705 = vadd.f32 %v652, %v700
      %v706 = vlaneseq
      %v707 = vshrl.u32 %v706, 7
      %v708 = vsub.s32 7, %v707
      %v709 = vrot.slane %v538, %v708
      %v710 = vmul.f32 %v534, %v709
      %v712 = vrot.slane %v710, 4
      %v714 = vadd.f32 %v659, %v712
      %v715 = vadd.f32 %v660, %v712
      %v716 = vlaneseq
      %v717 = vshrl.u32 %v716, 7
      %v718 = vsub.s32 0, %v717
      %v719 = vrot.slane %v539, %v718
      %v720 = vmul.f32 %v534, %v719
      %v721 = vmul.f32 %v535, %v719
      %v722 = vadd.f32 %v674, %v720
      %v723 = vadd.f32 %v675, %v721
      %v724 = vlaneseq
      %v725 = vshrl.u32 %v724, 7
      %v726 = vsub.s32 1, %v725
      %v727 = vrot.slane %v539, %v726
      %v728 = vmul.f32 %v534, %v727
      %v729 = vmul.f32 %v535, %v727
      %v730 = vadd.f32 %v689, %v728
      %v731 = vadd.f32 %v690, %v729
      %v732 = vlaneseq
      %v733 = vshrl.u32 %v732, 7
      %v734 = vsub.s32 2, %v733
      %v735 = vrot.slane %v539, %v734
      %v736 = vmul.f32 %v534, %v735
      %v737 = vmul.f32 %v535, %v735
      %v738 = vadd.f32 %v704, %v736
      %v739 = vadd.f32 %v705, %v737
      %v740 = vlaneseq
      %v741 = vshrl.u32 %v740, 7
      %v742 = vsub.s32 3, %v741
      %v743 = vrot.slane %v539, %v742
      %v744 = vmul.f32 %v534, %v743
      %v745 = vmul.f32 %v535, %v743
      %v746 = vadd.f32 %v714, %v744
      %v747 = vadd.f32 %v715, %v745
      %v748 = vlaneseq
      %v749 = vshrl.u32 %v748, 7
      %v750 = vsub.s32 4, %v749
      %v751 = vrot.slane %v539, %v750
      %v752 = vmul.f32 %v534, %v751
      %v753 = vmul.f32 %v535, %v751
      %v756 = vrot.slane %v752, 4
      %v757 = vrot.slane %v753, 4
      %v758 = vsel %vm581, %v756, %v757
      %v761 = vadd.f32 %v722, %v758
      %v762 = vadd.f32 %v723, %v757
      %v763 = vlaneseq
      %v764 = vshrl.u32 %v763, 7
      %v765 = vsub.s32 5, %v764
      %v766 = vrot.slane %v539, %v765
      %v767 = vmul.f32 %v534, %v766
      %v768 = vmul.f32 %v535, %v766
      %v771 = vrot.slane %v767, 4
      %v772 = vrot.slane %v768, 4
      %v773 = vsel %vm581, %v771, %v772
      %v776 = vadd.f32 %v730, %v773
      %v777 = vadd.f32 %v731, %v772
      %v778 = vlaneseq
      %v779 = vshrl.u32 %v778, 7
      %v780 = vsub.s32 6, %v779
      %v781 = vrot.slane %v539, %v780
      %v782 = vmul.f32 %v534, %v781
      %v783 = vmul.f32 %v535, %v781
      %v786 = vrot.slane %v782, 4
      %v787 = vrot.slane %v783, 4
      %v788 = vsel %vm581, %v786, %v787
      %v791 = vadd.f32 %v738, %v788
      %v792 = vadd.f32 %v739, %v787
      %v793 = vlaneseq
      %v794 = vshrl.u32 %v793, 7
      %v795 = vsub.s32 7, %v794
      %v796 = vrot.slane %v539, %v795
      %v797 = vmul.f32 %v535, %v796
      %v799 = vrot.slane %v797, 4
      %v801 = vadd.f32 %v746, %v799
      %v802 = vadd.f32 %v747, %v799
      %v803 = vlaneseq
      %v804 = vshrl.u32 %v803, 7
      %v805 = vsub.s32 0, %v804
      %v806 = vrot.slane %v540, %v805
      %v807 = vmul.f32 %v535, %v806
      %v808 = vmul.f32 %v536, %v806
      %v809 = vadd.f32 %v761, %v807
      %v810 = vadd.f32 %v762, %v808
      %v811 = vlaneseq
      %v812 = vshrl.u32 %v811, 7
      %v813 = vsub.s32 1, %v812
      %v814 = vrot.slane %v540, %v813
      %v815 = vmul.f32 %v535, %v814
      %v816 = vmul.f32 %v536, %v814
      %v817 = vadd.f32 %v776, %v815
      %v818 = vadd.f32 %v777, %v816
      %v819 = vlaneseq
      %v820 = vshrl.u32 %v819, 7
      %v821 = vsub.s32 2, %v820
      %v822 = vrot.slane %v540, %v821
      %v823 = vmul.f32 %v535, %v822
      %v824 = vmul.f32 %v536, %v822
      %v825 = vadd.f32 %v791, %v823
      %v826 = vadd.f32 %v792, %v824
      %v827 = vlaneseq
      %v828 = vshrl.u32 %v827, 7
      %v829 = vsub.s32 3, %v828
      %v830 = vrot.slane %v540, %v829
      %v831 = vmul.f32 %v535, %v830
      %v832 = vmul.f32 %v536, %v830
      %v833 = vadd.f32 %v801, %v831
      %v834 = vadd.f32 %v802, %v832
      %v835 = vlaneseq
      %v836 = vshrl.u32 %v835, 7
      %v837 = vsub.s32 4, %v836
      %v838 = vrot.slane %v540, %v837
      %v839 = vmul.f32 %v535, %v838
      %v840 = vmul.f32 %v536, %v838
      %v843 = vrot.slane %v839, 4
      %v844 = vrot.slane %v840, 4
      %v845 = vsel %vm581, %v843, %v844
      %v848 = vadd.f32 %v809, %v845
      %v849 = vadd.f32 %v810, %v844
      %v850 = vlaneseq
      %v851 = vshrl.u32 %v850, 7
      %v852 = vsub.s32 5, %v851
      %v853 = vrot.slane %v540, %v852
      %v854 = vmul.f32 %v535, %v853
      %v855 = vmul.f32 %v536, %v853
      %v858 = vrot.slane %v854, 4
      %v859 = vrot.slane %v855, 4
      %v860 = vsel %vm581, %v858, %v859
      %v863 = vadd.f32 %v817, %v860
      %v864 = vadd.f32 %v818, %v859
      %v865 = vlaneseq
      %v866 = vshrl.u32 %v865, 7
      %v867 = vsub.s32 6, %v866
      %v868 = vrot.slane %v540, %v867
      %v869 = vmul.f32 %v535, %v868
      %v870 = vmul.f32 %v536, %v868
      %v873 = vrot.slane %v869, 4
      %v874 = vrot.slane %v870, 4
      %v875 = vsel %vm581, %v873, %v874
      %v878 = vadd.f32 %v825, %v875
      %v879 = vadd.f32 %v826, %v874
      %vm882 = vcmask 1046528
      %v883 = vrot.slane %v863, 1
      %v884 = vrot.slane %v864, 1
      %v885 = vsel %vm882, %v883, %v884
      %v888 = vadd.f32 %v848, %v885
      %v889 = vadd.f32 %v849, %v884
      %v892 = vrot.slane %v833, 1
      %v893 = vrot.slane %v834, 1
      %v894 = vsel %vm882, %v892, %v893
      %v897 = vadd.f32 %v878, %v894
      %v898 = vadd.f32 %v879, %v893
      %vm901 = vcmask 1045504
      %v902 = vrot.slane %v897, 2
      %v903 = vrot.slane %v898, 2
      %v904 = vsel %vm901, %v902, %v903
      %v907 = vadd.f32 %v888, %v904
      %v908 = vadd.f32 %v889, %v903
      %v909 = vld [vmem:[%s6] sm:$0x1]
      %v911 = vlaneseq
      %v912 = vshrl.u32 %v911, 7
      %v913 = vsub.s32 0, %v912
      %v914 = vrot.slane %v909, %v913
      %v916 = vadd.f32 %v907, %v914
      %v917 = vadd.f32 %v908, %v914
      %v918 = vld [vmem:[%s7] sm:$0x1]
      %v920 = vlaneseq
      %v921 = vshrl.u32 %v920, 7
      %v922 = vsub.s32 0, %v921
      %v923 = vrot.slane %v918, %v922
      %v925 = vmul.f32 %v916, %v923
      %v926 = vmul.f32 %v917, %v923
      %v927 = vld [vmem:[%s8] sm:$0x1]
      %v929 = vlaneseq
      %v930 = vshrl.u32 %v929, 7
      %v931 = vsub.s32 0, %v930
      %v932 = vrot.slane %v927, %v931
      %v934 = vadd.f32 %v925, %v932
      %v935 = vadd.f32 %v926, %v932
      %v936 = vxor.u32 %v934, 2147483648
      %v937 = vxor.u32 %v935, 2147483648
      %v938 = vmul.f32 %v936, 1.442695
      %v939 = vpow.pop %v938
      %v940 = vmul.f32 %v937, 1.442695
      %v941 = vpow.pop %v940
      %v942 = vadd.f32 %v939, 1.0
      %v943 = vadd.f32 %v941, 1.0
      %v944 = vrcp.pop %v942
      %v945 = vmul.f32 1.0, %v944
      %v946 = vrcp.pop %v943
      %v947 = vmul.f32 1.0, %v946
      %v948 = vmul.f32 %v934, %v945
      %v949 = vmul.f32 %v935, %v947
      %v950 = vpack.c.bf16 %v949, %v948
      %v951 = vld [vmem:[%s9] sm:$0xf]
      %v952 = vld [vmem:[%s9 + $0x4] sm:$0xf]
      %v953 = vld [vmem:[%s9 + $0x8] sm:$0xf]
      %v954 = vld [vmem:[%s9 + $0xc] sm:$0xf]
      %v955 = vld [vmem:[%s9 + $0x10] sm:$0xf]
      %v956 = vld [vmem:[%s9 + $0x14] sm:$0xf]
      %v957 = vld [vmem:[%s9 + $0x18] sm:$0xf]
      %v958 = vld [vmem:[%s9 + $0x1c] sm:$0xf]
      %v959 = vld [vmem:[%s9 + $0x20] sm:$0xf]
      %v960 = vld [vmem:[%s9 + $0x24] sm:$0xf]
      %v961 = vld [vmem:[%s9 + $0x28] sm:$0xf]
      %v962 = vld [vmem:[%s9 + $0x2c] sm:$0xf]
      %v963 = vld [vmem:[%s9 + $0x30] sm:$0xf]
      %v964 = vld [vmem:[%s9 + $0x34] sm:$0xf]
      %v965 = vld [vmem:[%s9 + $0x38] sm:$0xf]
      %v966 = vld [vmem:[%s9 + $0x3c] sm:$0xf]
      %v967 = vld [vmem:[%s10] sm:$0x1]
      %v969 = vlaneseq
      %v970 = vshrl.u32 %v969, 7
      %v971 = vsub.s32 0, %v970
      %v972 = vrot.slane %v967, %v971
      %v975 = vshrl.u32 %v950, 16
      %v977 = vshll.u32 %v950, 16
      %v979 = vrot.slane %v977, 1
      %v980 = vor.u32 %v975, %v979
      %v998 = vunpack.c.l.b16 %v951
      %v999 = vunpack.c.l.b16 %v952
      %v1000 = vunpack.c.l.b16 %v953
      %v1001 = vunpack.c.l.b16 %v954
      %v1002 = vunpack.c.l.b16 %v955
      %v1003 = vunpack.c.l.b16 %v956
      %v1004 = vunpack.c.l.b16 %v957
      %v1005 = vunpack.c.l.b16 %v958
      %v1006 = vunpack.c.l.b16 %v959
      %v1007 = vunpack.c.l.b16 %v960
      %v1008 = vunpack.c.l.b16 %v961
      %v1009 = vunpack.c.l.b16 %v962
      %v1010 = vunpack.c.l.b16 %v963
      %v1011 = vunpack.c.l.b16 %v964
      %v1012 = vunpack.c.l.b16 %v965
      %v1013 = vunpack.c.l.b16 %v966
      %v1014 = vpack.c.b16 %v999, %v998
      %v1015 = vpack.c.b16 %v1001, %v1000
      %v1016 = vpack.c.b16 %v1003, %v1002
      %v1017 = vpack.c.b16 %v1005, %v1004
      %v1018 = vpack.c.b16 %v1007, %v1006
      %v1019 = vpack.c.b16 %v1009, %v1008
      %v1020 = vpack.c.b16 %v1011, %v1010
      %v1021 = vpack.c.b16 %v1013, %v1012
      %1030 = vmatprep.subr.bf16.mxu0 0
      %1031 = vmatpush1.bf16.msra.mxu0 %v1021
      %1032 = vmatprep.subr.bf16.mxu0 0
      %1033 = vmatpush1.bf16.msra.mxu0 %v1020
      %1034 = vmatprep.subr.bf16.mxu0 0
      %1035 = vmatpush1.bf16.msra.mxu0 %v1019
      %1036 = vmatprep.subr.bf16.mxu0 0
      %1037 = vmatpush1.bf16.msra.mxu0 %v1018
      %1038 = vmatprep.subr.bf16.mxu0 0
      %1039 = vmatpush1.bf16.msra.mxu0 %v1017
      %1040 = vmatprep.subr.bf16.mxu0 0
      %1041 = vmatpush1.bf16.msra.mxu0 %v1016
      %1042 = vmatprep.subr.bf16.mxu0 0
      %1043 = vmatpush1.bf16.msra.mxu0 %v1015
      %1044 = vmatprep.subr.bf16.mxu0 0
      %1045 = vmatpush1.bf16.msra.mxu0 %v1014
      %1046 = vmatprep.subr.bf16.mxu0 0
      %1047 = vmatpush2.bf16.msra.mxu0 0
      %1048 = vmatprep.subr.bf16.mxu0 0
      %1049 = vmatpush2.bf16.msra.mxu0 0
      %1050 = vmatprep.subr.bf16.mxu0 0
      %1051 = vmatpush2.bf16.msra.mxu0 0
      %1052 = vmatprep.subr.bf16.mxu0 0
      %1053 = vmatpush2.bf16.msra.mxu0 0
      %1054 = vmatprep.subr.bf16.mxu0 0
      %1055 = vmatpush2.bf16.msra.mxu0 0
      %1056 = vmatprep.subr.bf16.mxu0 0
      %1057 = vmatpush2.bf16.msra.mxu0 0
      %1058 = vmatprep.subr.bf16.mxu0 0
      %1059 = vmatpush2.bf16.msra.mxu0 0
      %1060 = vmatprep.subr.bf16.mxu0 0
      %1061 = vmatpush2.bf16.msra.mxu0 0
      %1062 = vmatprep.mubr.bf16.mxu0 0
      %1063 = vmatmul.mubr.bf16.gmra.mxu0 %v980
      %v1064 = vpop.f32.mrf.mxu0
      %v1065 = vadd.f32 %v972, %v1064
      %v1066 = vpop.f32.mrf.mxu0
      %v1067 = vpop.f32.mrf.mxu0
      %v1068 = vpop.f32.mrf.mxu0
      %1069 = vdwg.mxu0
      %v1070 = vadd.f32 %v383, %v1065
      %1071 = vst.msk [vmem:[%s381] sm:$0xff] %vm386, %v1070
      %p1072 = scmp.lt.s32.totalorder %s22, 1
      %s1073 = scalar_select %p1072, %s22, 1
      %s1074 = smul.addr %s1073, 8
      %s1075 = scalar_lea.vmem %s11, %s1074
      // Predicated region
      $region65: #{conformer_linear_forward.6} parent=63 // pred_check
        %p1076 = pneg %p276
      $region66: #{conformer_linear_forward.6} parent=63 // pred_check_branch
        %1078 = sbr.rel (%p1076) target = $region68
      $region67: #{conformer_linear_forward.6} parent=63 // pred_region
        _
      $region68: #{conformer_linear_forward.6} parent=63 // pred_fallthru
        _
    $region64: #{conformer_linear_forward.6} parent=5 // pred_fallthru
      _
    %p1079 = scmp.le.s32.totalorder 2, %s17
    // Predicated region
    $region69: #{conformer_linear_forward.6} parent=5 // pred_check
      %p1080 = pneg %p1079
    $region70: #{conformer_linear_forward.6} parent=5 // pred_check_branch
      %1082 = sbr.rel (%p1080) target = $region72
    $region71: #{conformer_linear_forward.6} parent=5 // pred_region
      %s1083 = ssub.s32 %s17, 2
      // Predicated region
      $region73: #{conformer_linear_forward.6} parent=71 // pred_check
        %p1084 = pneg %p282
      $region74: #{conformer_linear_forward.6} parent=71 // pred_check_branch
        %1086 = sbr.rel (%p1084) target = $region76
      $region75: #{conformer_linear_forward.6} parent=71 // pred_region
        %p1087 = scmp.lt.s32.totalorder %s23, 1
        %s1088 = scalar_select %p1087, %s23, 1
        %s1089 = smul.addr %s1088, 8
        %s1090 = scalar_lea.vmem %s11, %s1089
      $region76: #{conformer_linear_forward.6} parent=71 // pred_fallthru
        _
    $region72: #{conformer_linear_forward.6} parent=5 // pred_fallthru
      _
  $region6: #{conformer_linear_forward.6} parent=0 // loop_footer
    %s21 = sadd.s32 1, %s17
  $region7: #{conformer_linear_forward.6} parent=0 // loop_footer_branch
    %16 = sbr.rel target = $region3
  $region8: #{conformer_linear_forward.6} parent=0 // loop_exit
    _

// kernel: conformer_linear_forward.5
$region0: #{conformer_linear_forward.5}
  #allocation0 [shape = 'u32[]', space=smem, size = 0x4, offset = 0x4, fixed_abs, tag = 'smem constant byte address 0x4 - core index']
  #allocation1 [shape = 'u32[144,128]{1,0:T(1,128)}', space=vmem, size = 0x12000, scoped, tag = 'internal scratch']
  %s0 = inlined_call_operand.vmem [shape: f32[2,8,64], index: 0, kind: input, shape index: {}]
  %s1 = inlined_call_operand.vmem [shape: f32[1,64], index: 1, kind: input, shape index: {}]
  %s2 = inlined_call_operand.vmem [shape: f32[1,64], index: 2, kind: input, shape index: {}]
  %s3 = inlined_call_operand.vmem [shape: bf16[192,64], index: 3, kind: input, shape index: {}]
  %s4 = inlined_call_operand.vmem [shape: bf16[16,8], index: 4, kind: input, shape index: {}]
  %s5 = inlined_call_operand.vmem [shape: bf16[64,64], index: 5, kind: input, shape index: {}]
  %s6 = inlined_call_operand.vmem [shape: f32[1,64], index: 6, kind: input, shape index: {}]
  %s7 = inlined_call_operand.vmem [shape: f32[2,8,64], index: 7, kind: output, shape index: {}]
  %s8 = sld [smem:[#allocation0]]
  $region61: #{conformer_linear_forward.5} parent=0
    _
  %s10 = ssub.s32 1, %s8
  %s11 = scalar_select 0, %s10, %s8
  loop: start=0, step=1, limit=4
  $region2: #{conformer_linear_forward.5} parent=0 // loop_pre_header
    _
  $region3: #{conformer_linear_forward.5} parent=0 // loop_header
    %s13 = sphi 0, %s17
    %p14 = scmp.ge.s32.totalorder %s13, 4
    %s23 = sphi 0, %s25
    %s26 = sphi 0, %s23
    %s27 = sphi 0, %s26
    %s43 = sphi 0, %s27
    %s47 = sphi 0, %s47
    %s49 = sphi 0, %s47
    %s50 = sphi 0, %s49
    %s64 = sphi 0, %s50
    %s68 = sphi 0, %s68
    %s70 = sphi 0, %s68
    %s71 = sphi 0, %s70
    %s85 = sphi 0, %s71
    %s89 = sphi 0, %s89
    %s91 = sphi 0, %s89
    %s92 = sphi 0, %s91
    %s106 = sphi 0, %s92
    %s110 = sphi 0, %s110
    %s112 = sphi 0, %s110
    %s113 = sphi 0, %s112
    %s127 = sphi 0, %s113
    %s131 = sphi 0, %s131
    %s133 = sphi 0, %s131
    %s134 = sphi 0, %s133
    %s148 = sphi 0, %s134
    %s152 = sphi 0, %s152
    %s154 = sphi 0, %s152
    %s155 = sphi 0, %s154
    %s169 = sphi 0, %s155
    %s175 = sphi 0, %s177
    %s178 = sphi 0, %s175
    %s179 = sphi 0, %s178
    %s195 = sphi 0, %s179
  $region4: #{conformer_linear_forward.5} parent=0 // loop_header_branch
    %16 = sbr.rel (%p14) target = $region8
  $region5: #{conformer_linear_forward.5} parent=0 // loop_body
    %s18 = ssub.s32 %s13, 1
    %s19 = ssub.s32 %s13, 2
    %s20 = sadd.s32 %s13, 1
    %s21 = ssub.s32 %s13, %s20
    %p22 = scmp.eq.s32.totalorder %s21, 0
    %s24 = sadd.s32 %s23, 1
    %s25 = scalar_select %p22, %s23, %s24
    %p28 = pneg %p22
    %p29 = scmp.eq.s32.totalorder %s13, 1
    %p30 = por %p28, %p29
    %p31 = scmp.ne.s32.totalorder %s23, %s26
    %p32 = scmp.eq.s32.totalorder %s13, 0
    %p33 = por %p31, %p32
    %p34 = scmp.ne.s32.totalorder %s23, %s26
    %p35 = scmp.eq.s32.totalorder %s18, 1
    %p36 = por %p34, %p35
    %p37 = scmp.ne.s32.totalorder %s26, %s27
    %p38 = scmp.eq.s32.totalorder %s18, 0
    %p39 = por %p37, %p38
    %p40 = scmp.ne.s32.totalorder %s26, %s27
    %p41 = scmp.eq.s32.totalorder %s19, 1
    %p42 = por %p40, %p41
    %p44 = scmp.ne.s32.totalorder %s27, %s43
    %p45 = scmp.eq.s32.totalorder %s19, 0
    %p46 = por %p44, %p45
    %s48 = sadd.s32 %s47, 1
    %p51 = scmp.eq.s32.totalorder %s13, 1
    %p52 = scmp.ne.s32.totalorder %s47, %s49
    %p53 = scmp.eq.s32.totalorder %s13, 0
    %p54 = por %p52, %p53
    %p55 = scmp.ne.s32.totalorder %s47, %s49
    %p56 = scmp.eq.s32.totalorder %s18, 1
    %p57 = por %p55, %p56
    %p58 = scmp.ne.s32.totalorder %s49, %s50
    %p59 = scmp.eq.s32.totalorder %s18, 0
    %p60 = por %p58, %p59
    %p61 = scmp.ne.s32.totalorder %s49, %s50
    %p62 = scmp.eq.s32.totalorder %s19, 1
    %p63 = por %p61, %p62
    %p65 = scmp.ne.s32.totalorder %s50, %s64
    %p66 = scmp.eq.s32.totalorder %s19, 0
    %p67 = por %p65, %p66
    %s69 = sadd.s32 %s68, 1
    %p72 = scmp.eq.s32.totalorder %s13, 1
    %p73 = scmp.ne.s32.totalorder %s68, %s70
    %p74 = scmp.eq.s32.totalorder %s13, 0
    %p75 = por %p73, %p74
    %p76 = scmp.ne.s32.totalorder %s68, %s70
    %p77 = scmp.eq.s32.totalorder %s18, 1
    %p78 = por %p76, %p77
    %p79 = scmp.ne.s32.totalorder %s70, %s71
    %p80 = scmp.eq.s32.totalorder %s18, 0
    %p81 = por %p79, %p80
    %p82 = scmp.ne.s32.totalorder %s70, %s71
    %p83 = scmp.eq.s32.totalorder %s19, 1
    %p84 = por %p82, %p83
    %p86 = scmp.ne.s32.totalorder %s71, %s85
    %p87 = scmp.eq.s32.totalorder %s19, 0
    %p88 = por %p86, %p87
    %s90 = sadd.s32 %s89, 1
    %p93 = scmp.eq.s32.totalorder %s13, 1
    %p94 = scmp.ne.s32.totalorder %s89, %s91
    %p95 = scmp.eq.s32.totalorder %s13, 0
    %p96 = por %p94, %p95
    %p97 = scmp.ne.s32.totalorder %s89, %s91
    %p98 = scmp.eq.s32.totalorder %s18, 1
    %p99 = por %p97, %p98
    %p100 = scmp.ne.s32.totalorder %s91, %s92
    %p101 = scmp.eq.s32.totalorder %s18, 0
    %p102 = por %p100, %p101
    %p103 = scmp.ne.s32.totalorder %s91, %s92
    %p104 = scmp.eq.s32.totalorder %s19, 1
    %p105 = por %p103, %p104
    %p107 = scmp.ne.s32.totalorder %s92, %s106
    %p108 = scmp.eq.s32.totalorder %s19, 0
    %p109 = por %p107, %p108
    %s111 = sadd.s32 %s110, 1
    %p114 = scmp.eq.s32.totalorder %s13, 1
    %p115 = scmp.ne.s32.totalorder %s110, %s112
    %p116 = scmp.eq.s32.totalorder %s13, 0
    %p117 = por %p115, %p116
    %p118 = scmp.ne.s32.totalorder %s110, %s112
    %p119 = scmp.eq.s32.totalorder %s18, 1
    %p120 = por %p118, %p119
    %p121 = scmp.ne.s32.totalorder %s112, %s113
    %p122 = scmp.eq.s32.totalorder %s18, 0
    %p123 = por %p121, %p122
    %p124 = scmp.ne.s32.totalorder %s112, %s113
    %p125 = scmp.eq.s32.totalorder %s19, 1
    %p126 = por %p124, %p125
    %p128 = scmp.ne.s32.totalorder %s113, %s127
    %p129 = scmp.eq.s32.totalorder %s19, 0
    %p130 = por %p128, %p129
    %s132 = sadd.s32 %s131, 1
    %p135 = scmp.eq.s32.totalorder %s13, 1
    %p136 = scmp.ne.s32.totalorder %s131, %s133
    %p137 = scmp.eq.s32.totalorder %s13, 0
    %p138 = por %p136, %p137
    %p139 = scmp.ne.s32.totalorder %s131, %s133
    %p140 = scmp.eq.s32.totalorder %s18, 1
    %p141 = por %p139, %p140
    %p142 = scmp.ne.s32.totalorder %s133, %s134
    %p143 = scmp.eq.s32.totalorder %s18, 0
    %p144 = por %p142, %p143
    %p145 = scmp.ne.s32.totalorder %s133, %s134
    %p146 = scmp.eq.s32.totalorder %s19, 1
    %p147 = por %p145, %p146
    %p149 = scmp.ne.s32.totalorder %s134, %s148
    %p150 = scmp.eq.s32.totalorder %s19, 0
    %p151 = por %p149, %p150
    %s153 = sadd.s32 %s152, 1
    %p156 = scmp.eq.s32.totalorder %s13, 1
    %p157 = scmp.ne.s32.totalorder %s152, %s154
    %p158 = scmp.eq.s32.totalorder %s13, 0
    %p159 = por %p157, %p158
    %p160 = scmp.ne.s32.totalorder %s152, %s154
    %p161 = scmp.eq.s32.totalorder %s18, 1
    %p162 = por %p160, %p161
    %p163 = scmp.ne.s32.totalorder %s154, %s155
    %p164 = scmp.eq.s32.totalorder %s18, 0
    %p165 = por %p163, %p164
    %p166 = scmp.ne.s32.totalorder %s154, %s155
    %p167 = scmp.eq.s32.totalorder %s19, 1
    %p168 = por %p166, %p167
    %p170 = scmp.ne.s32.totalorder %s155, %s169
    %p171 = scmp.eq.s32.totalorder %s19, 0
    %p172 = por %p170, %p171
    %s173 = ssub.s32 %s13, %s20
    %p174 = scmp.eq.s32.totalorder %s173, 0
    %s176 = sadd.s32 %s175, 1
    %s177 = scalar_select %p174, %s175, %s176
    %p180 = pneg %p174
    %p181 = scmp.eq.s32.totalorder %s13, 1
    %p182 = por %p180, %p181
    %p183 = scmp.ne.s32.totalorder %s175, %s178
    %p184 = scmp.eq.s32.totalorder %s13, 0
    %p185 = por %p183, %p184
    %p186 = scmp.ne.s32.totalorder %s175, %s178
    %p187 = scmp.eq.s32.totalorder %s18, 1
    %p188 = por %p186, %p187
    %p189 = scmp.ne.s32.totalorder %s178, %s179
    %p190 = scmp.eq.s32.totalorder %s18, 0
    %p191 = por %p189, %p190
    %p192 = scmp.ne.s32.totalorder %s178, %s179
    %p193 = scmp.eq.s32.totalorder %s19, 1
    %p194 = por %p192, %p193
    %p196 = scmp.ne.s32.totalorder %s179, %s195
    %p197 = scmp.eq.s32.totalorder %s19, 0
    %p198 = por %p196, %p197
    %p199 = scmp.le.s32.totalorder 1, %s13
    %p200 = scmp.lt.s32.totalorder %s13, 3
    %p201 = pnand %p199, %p200
    %p202 = pneg %p201
    // Predicated region
    $region9: #{conformer_linear_forward.5} parent=5 // pred_check
      _
    $region10: #{conformer_linear_forward.5} parent=5 // pred_check_branch
      %204 = sbr.rel (%p201) target = $region12
    $region11: #{conformer_linear_forward.5} parent=5 // pred_region
      %s205 = ssub.s32 %s13, 1
      // Predicated region
      $region13: #{conformer_linear_forward.5} parent=11 // pred_check
        %p206 = pneg %p60
      $region14: #{conformer_linear_forward.5} parent=11 // pred_check_branch
        %208 = sbr.rel (%p206) target = $region16
      $region15: #{conformer_linear_forward.5} parent=11 // pred_region
        _
      $region16: #{conformer_linear_forward.5} parent=11 // pred_fallthru
        _
      // Predicated region
      $region17: #{conformer_linear_forward.5} parent=11 // pred_check
        %p209 = pneg %p81
      $region18: #{conformer_linear_forward.5} parent=11 // pred_check_branch
        %211 = sbr.rel (%p209) target = $region20
      $region19: #{conformer_linear_forward.5} parent=11 // pred_region
        _
      $region20: #{conformer_linear_forward.5} parent=11 // pred_fallthru
        _
      // Predicated region
      $region21: #{conformer_linear_forward.5} parent=11 // pred_check
        %p212 = pneg %p102
      $region22: #{conformer_linear_forward.5} parent=11 // pred_check_branch
        %214 = sbr.rel (%p212) target = $region24
      $region23: #{conformer_linear_forward.5} parent=11 // pred_region
        _
      $region24: #{conformer_linear_forward.5} parent=11 // pred_fallthru
        _
      // Predicated region
      $region25: #{conformer_linear_forward.5} parent=11 // pred_check
        %p215 = pneg %p123
      $region26: #{conformer_linear_forward.5} parent=11 // pred_check_branch
        %217 = sbr.rel (%p215) target = $region28
      $region27: #{conformer_linear_forward.5} parent=11 // pred_region
        _
      $region28: #{conformer_linear_forward.5} parent=11 // pred_fallthru
        _
      // Predicated region
      $region29: #{conformer_linear_forward.5} parent=11 // pred_check
        %p218 = pneg %p144
      $region30: #{conformer_linear_forward.5} parent=11 // pred_check_branch
        %220 = sbr.rel (%p218) target = $region32
      $region31: #{conformer_linear_forward.5} parent=11 // pred_region
        _
      $region32: #{conformer_linear_forward.5} parent=11 // pred_fallthru
        _
      // Predicated region
      $region33: #{conformer_linear_forward.5} parent=11 // pred_check
        %p221 = pneg %p165
      $region34: #{conformer_linear_forward.5} parent=11 // pred_check_branch
        %223 = sbr.rel (%p221) target = $region36
      $region35: #{conformer_linear_forward.5} parent=11 // pred_region
        _
      $region36: #{conformer_linear_forward.5} parent=11 // pred_fallthru
        _
    $region12: #{conformer_linear_forward.5} parent=5 // pred_fallthru
      _
    %p224 = scmp.lt.s32.totalorder %s13, 2
    // Predicated region
    $region37: #{conformer_linear_forward.5} parent=5 // pred_check
      %p225 = pneg %p224
    $region38: #{conformer_linear_forward.5} parent=5 // pred_check_branch
      %227 = sbr.rel (%p225) target = $region40
    $region39: #{conformer_linear_forward.5} parent=5 // pred_region
      // Predicated region
      $region41: #{conformer_linear_forward.5} parent=39 // pred_check
        %p228 = pneg %p33
      $region42: #{conformer_linear_forward.5} parent=39 // pred_check_branch
        %230 = sbr.rel (%p228) target = $region44
      $region43: #{conformer_linear_forward.5} parent=39 // pred_region
        %p231 = scmp.lt.s32.totalorder %s13, 1
        %s232 = scalar_select %p231, %s13, 1
        %s233 = smul.addr %s232, 8
        %s234 = scalar_lea.vmem %s0, %s233
      $region44: #{conformer_linear_forward.5} parent=39 // pred_fallthru
        _
    $region40: #{conformer_linear_forward.5} parent=5 // pred_fallthru
      _
    %p235 = scmp.le.s32.totalorder 1, %s13
    %p236 = scmp.lt.s32.totalorder %s13, 3
    %p237 = pnand %p235, %p236
    %p238 = pneg %p237
    // Predicated region
    $region45: #{conformer_linear_forward.5} parent=5 // pred_check
      _
    $region46: #{conformer_linear_forward.5} parent=5 // pred_check_branch
      %240 = sbr.rel (%p237) target = $region48
    $region47: #{conformer_linear_forward.5} parent=5 // pred_region
      %s241 = ssub.s32 %s13, 1
      %p242 = scmp.lt.s32.totalorder %s18, 1
      %s243 = scalar_select %p242, %s18, 1
      %s244 = smul.addr %s243, 8
      %s245 = scalar_lea.vmem %s0, %s244
      %p246 = pneg %p39
      %p247 = pneg %p36
      %p248 = pneg %p60
      %p249 = pneg %p57
      %p250 = pneg %p81
      %p251 = pneg %p78
      %p252 = pneg %p102
      %p253 = pneg %p99
      %p254 = pneg %p123
      %p255 = pneg %p120
      %p256 = pneg %p144
      %p257 = pneg %p141
      %p258 = pneg %p165
      %p259 = pneg %p162
      %p260 = pneg %p191
      %p261 = pneg %p188
      %p262 = scmp.lt.s32.totalorder %s18, 1
      %s263 = scalar_select %p262, %s18, 1
      %s264 = smul.addr %s263, 8
      %s265 = scalar_lea.vmem %s7, %s264
      %p266 = scmp.lt.s32.totalorder %s18, 1
      %s267 = scalar_select %p266, %s18, 1
      %s268 = smul.addr %s267, 8
      %s269 = scalar_lea.vmem %s0, %s268
      %p270 = scmp.lt.s32.totalorder %s18, 1
      %s271 = scalar_select %p270, %s18, 1
      %s272 = smul.addr %s271, 8
      %s273 = scalar_lea.vmem %s7, %s272
      %v275 = vld [vmem:[%s269] sm:$0xff]
      %v276 = vld [vmem:[%s1] sm:$0x1]
      %v277 = vld [vmem:[%s2] sm:$0x1]
      %vm278 = vcmask 523264
      %v279 = vsel %vm278, %v275, 0.0
      %280 = vadd.xlane.f32.xlu0 %v279
      %v281 = vpop.xlane.xlu0 %280
      %v282 = vrcp.pop 64.0
      %v283 = vmul.f32 %v281, %v282
      %v284 = vsub.f32 %v275, %v283
      %v285 = vmul.f32 %v284, %v284
      %v286 = vsel %vm278, %v285, 0.0
      %287 = vadd.xlane.f32.xlu0 %v286
      %v288 = vpop.xlane.xlu0 %287
      %v289 = vmul.f32 %v288, %v282
      %v290 = vadd.f32 %v289, 1e-05
      %v291 = vrsqrt.pop %v290
      %v292 = vmul.f32 %v284, %v291
      %v294 = vlaneseq
      %v295 = vshrl.u32 %v294, 7
      %v296 = vsub.s32 0, %v295
      %v297 = vrot.slane %v276, %v296
      %v299 = vmul.f32 %v292, %v297
      %v301 = vlaneseq
      %v302 = vshrl.u32 %v301, 7
      %v303 = vsub.s32 0, %v302
      %v304 = vrot.slane %v277, %v303
      %v306 = vadd.f32 %v299, %v304
      %v307 = vld [vmem:[%s3] sm:$0xf]
      %v308 = vld [vmem:[%s3 + $0x4] sm:$0xf]
      %v309 = vld [vmem:[%s3 + $0x8] sm:$0xf]
      %v310 = vld [vmem:[%s3 + $0xc] sm:$0xf]
      %v311 = vld [vmem:[%s3 + $0x10] sm:$0xf]
      %v312 = vld [vmem:[%s3 + $0x14] sm:$0xf]
      %v313 = vld [vmem:[%s3 + $0x18] sm:$0xf]
      %v314 = vld [vmem:[%s3 + $0x1c] sm:$0xf]
      %v315 = vld [vmem:[%s3 + $0x20] sm:$0xf]
      %v316 = vld [vmem:[%s3 + $0x24] sm:$0xf]
      %v317 = vld [vmem:[%s3 + $0x28] sm:$0xf]
      %v318 = vld [vmem:[%s3 + $0x2c] sm:$0xf]
      %v319 = vld [vmem:[%s3 + $0x30] sm:$0xf]
      %v320 = vld [vmem:[%s3 + $0x34] sm:$0xf]
      %v321 = vld [vmem:[%s3 + $0x38] sm:$0xf]
      %v322 = vld [vmem:[%s3 + $0x3c] sm:$0xf]
      %v323 = vld [vmem:[%s3 + $0x40] sm:$0xf]
      %v324 = vld [vmem:[%s3 + $0x44] sm:$0xf]
      %v325 = vld [vmem:[%s3 + $0x48] sm:$0xf]
      %v326 = vld [vmem:[%s3 + $0x4c] sm:$0xf]
      %v327 = vld [vmem:[%s3 + $0x50] sm:$0xf]
      %v328 = vld [vmem:[%s3 + $0x54] sm:$0xf]
      %v329 = vld [vmem:[%s3 + $0x58] sm:$0xf]
      %v330 = vld [vmem:[%s3 + $0x5c] sm:$0xf]
      %v331 = vpack.c.bf16 %v306, %v306
      %v356 = vunpack.c.l.b16 %v307
      %v357 = vunpack.c.l.b16 %v308
      %v358 = vunpack.c.l.b16 %v309
      %v359 = vunpack.c.l.b16 %v310
      %v360 = vunpack.c.l.b16 %v311
      %v361 = vunpack.c.l.b16 %v312
      %v362 = vunpack.c.l.b16 %v313
      %v363 = vunpack.c.l.b16 %v314
      %v364 = vunpack.c.l.b16 %v315
      %v365 = vunpack.c.l.b16 %v316
      %v366 = vunpack.c.l.b16 %v317
      %v367 = vunpack.c.l.b16 %v318
      %v368 = vunpack.c.l.b16 %v319
      %v369 = vunpack.c.l.b16 %v320
      %v370 = vunpack.c.l.b16 %v321
      %v371 = vunpack.c.l.b16 %v322
      %v372 = vunpack.c.l.b16 %v323
      %v373 = vunpack.c.l.b16 %v324
      %v374 = vunpack.c.l.b16 %v325
      %v375 = vunpack.c.l.b16 %v326
      %v376 = vunpack.c.l.b16 %v327
      %v377 = vunpack.c.l.b16 %v328
      %v378 = vunpack.c.l.b16 %v329
      %v379 = vunpack.c.l.b16 %v330
      %v380 = vpack.c.b16 %v357, %v356
      %v381 = vpack.c.b16 %v359, %v358
      %v382 = vpack.c.b16 %v361, %v360
      %v383 = vpack.c.b16 %v363, %v362
      %v384 = vpack.c.b16 %v365, %v364
      %v385 = vpack.c.b16 %v367, %v366
      %v386 = vpack.c.b16 %v369, %v368
      %v387 = vpack.c.b16 %v371, %v370
      %v388 = vpack.c.b16 %v373, %v372
      %v389 = vpack.c.b16 %v375, %v374
      %v390 = vpack.c.b16 %v377, %v376
      %v391 = vpack.c.b16 %v379, %v378
      %v393 = vsel %vm278, %v380, 0
      %v396 = vsel %vm278, %v381, 0
      %v399 = vsel %vm278, %v382, 0
      %v402 = vsel %vm278, %v383, 0
      %v405 = vsel %vm278, %v384, 0
      %v408 = vsel %vm278, %v385, 0
      %v411 = vsel %vm278, %v386, 0
      %v414 = vsel %vm278, %v387, 0
      %v417 = vsel %vm278, %v388, 0
      %v420 = vsel %vm278, %v389, 0
      %v423 = vsel %vm278, %v390, 0
      %v426 = vsel %vm278, %v391, 0
      %v429 = vsel %vm278, %v331, 0
      %431 = vmatprep.subr.bf16.mxu0 0
      %432 = vmatpush1.bf16.xpose.msra.mxu0 0
      %433 = vmatprep.subr.bf16.mxu0 0
      %434 = vmatpush1.bf16.xpose.msra.mxu0 0
      %435 = vmatprep.subr.bf16.mxu0 0
      %436 = vmatpush1.bf16.xpose.msra.mxu0 0
      %437 = vmatprep.subr.bf16.mxu0 0
      %438 = vmatpush1.bf16.xpose.msra.mxu0 0
      %439 = vmatprep.subr.bf16.mxu0 0
      %440 = vmatpush1.bf16.xpose.msra.mxu0 0
      %441 = vmatprep.subr.bf16.mxu0 0
      %442 = vmatpush1.bf16.xpose.msra.mxu0 0
      %443 = vmatprep.subr.bf16.mxu0 0
      %444 = vmatpush1.bf16.xpose.msra.mxu0 0
      %445 = vmatprep.subr.bf16.mxu0 0
      %446 = vmatpush1.bf16.xpose.msra.mxu0 %v429
      %447 = vmatprep.subr.bf16.mxu0 0
      %448 = vmatpush2.bf16.xpose.msra.mxu0 0
      %449 = vmatprep.subr.bf16.mxu0 0
      %450 = vmatpush2.bf16.xpose.msra.mxu0 0
      %451 = vmatprep.subr.bf16.mxu0 0
      %452 = vmatpush2.bf16.xpose.msra.mxu0 0
      %453 = vmatprep.subr.bf16.mxu0 0
      %454 = vmatpush2.bf16.xpose.msra.mxu0 0
      %455 = vmatprep.subr.bf16.mxu0 0
      %456 = vmatpush2.bf16.xpose.msra.mxu0 0
      %457 = vmatprep.subr.bf16.mxu0 0
      %458 = vmatpush2.bf16.xpose.msra.mxu0 0
      %459 = vmatprep.subr.bf16.mxu0 0
      %460 = vmatpush2.bf16.xpose.msra.mxu0 0
      %461 = vmatprep.subr.bf16.mxu0 0
      %462 = vmatpush2.bf16.xpose.msra.mxu0 0
      %463 = vmatprep.mubr.bf16.mxu0 0
      %464 = vmatmul.mubr.bf16.gmra.mxu0 %v393
      %v465 = vpop.f32.mrf.mxu0
      %v466 = vadd.f32 0.0, %v465
      %v467 = vpop.f32.mrf.mxu0
      %v468 = vpop.f32.mrf.mxu0
      %v469 = vadd.f32 0.0, %v468
      %v470 = vpop.f32.mrf.mxu0
      %471 = vmatprep.mubr.bf16.mxu0 0
      %472 = vmatmul.mubr.bf16.gmra.mxu0 %v396
      %v473 = vpop.f32.mrf.mxu0
      %v474 = vadd.f32 0.0, %v473
      %v475 = vpop.f32.mrf.mxu0
      %v476 = vpop.f32.mrf.mxu0
      %v477 = vadd.f32 0.0, %v476
      %v478 = vpop.f32.mrf.mxu0
      %479 = vmatprep.mubr.bf16.mxu0 0
      %480 = vmatmul.mubr.bf16.gmra.mxu0 %v399
      %v481 = vpop.f32.mrf.mxu0
      %v482 = vadd.f32 0.0, %v481
      %v483 = vpop.f32.mrf.mxu0
      %v484 = vpop.f32.mrf.mxu0
      %v485 = vadd.f32 0.0, %v484
      %v486 = vpop.f32.mrf.mxu0
      %487 = vmatprep.mubr.bf16.mxu0 0
      %488 = vmatmul.mubr.bf16.gmra.mxu0 %v402
      %v489 = vpop.f32.mrf.mxu0
      %v490 = vadd.f32 0.0, %v489
      %v491 = vpop.f32.mrf.mxu0
      %v492 = vpop.f32.mrf.mxu0
      %v493 = vadd.f32 0.0, %v492
      %v494 = vpop.f32.mrf.mxu0
      %495 = vmatprep.mubr.bf16.mxu0 0
      %496 = vmatmul.mubr.bf16.gmra.mxu0 %v405
      %v497 = vpop.f32.mrf.mxu0
      %v498 = vadd.f32 0.0, %v497
      %v499 = vpop.f32.mrf.mxu0
      %v500 = vpop.f32.mrf.mxu0
      %v501 = vadd.f32 0.0, %v500
      %v502 = vpop.f32.mrf.mxu0
      %503 = vmatprep.mubr.bf16.mxu0 0
      %504 = vmatmul.mubr.bf16.gmra.mxu0 %v408
      %v505 = vpop.f32.mrf.mxu0
      %v506 = vadd.f32 0.0, %v505
      %v507 = vpop.f32.mrf.mxu0
      %v508 = vpop.f32.mrf.mxu0
      %v509 = vadd.f32 0.0, %v508
      %v510 = vpop.f32.mrf.mxu0
      %511 = vmatprep.mubr.bf16.mxu0 0
      %512 = vmatmul.mubr.bf16.gmra.mxu0 %v411
      %v513 = vpop.f32.mrf.mxu0
      %v514 = vadd.f32 0.0, %v513
      %v515 = vpop.f32.mrf.mxu0
      %v516 = vpop.f32.mrf.mxu0
      %v517 = vadd.f32 0.0, %v516
      %v518 = vpop.f32.mrf.mxu0
      %519 = vmatprep.mubr.bf16.mxu0 0
      %520 = vmatmul.mubr.bf16.gmra.mxu0 %v414
      %v521 = vpop.f32.mrf.mxu0
      %v522 = vadd.f32 0.0, %v521
      %v523 = vpop.f32.mrf.mxu0
      %v524 = vpop.f32.mrf.mxu0
      %v525 = vadd.f32 0.0, %v524
      %v526 = vpop.f32.mrf.mxu0
      %527 = vmatprep.mubr.bf16.mxu0 0
      %528 = vmatmul.mubr.bf16.gmra.mxu0 %v417
      %v529 = vpop.f32.mrf.mxu0
      %v530 = vadd.f32 0.0, %v529
      %v531 = vpop.f32.mrf.mxu0
      %v532 = vpop.f32.mrf.mxu0
      %v533 = vadd.f32 0.0, %v532
      %v534 = vpop.f32.mrf.mxu0
      %535 = vmatprep.mubr.bf16.mxu0 0
      %536 = vmatmul.mubr.bf16.gmra.mxu0 %v420
      %v537 = vpop.f32.mrf.mxu0
      %v538 = vadd.f32 0.0, %v537
      %v539 = vpop.f32.mrf.mxu0
      %v540 = vpop.f32.mrf.mxu0
      %v541 = vadd.f32 0.0, %v540
      %v542 = vpop.f32.mrf.mxu0
      %543 = vmatprep.mubr.bf16.mxu0 0
      %544 = vmatmul.mubr.bf16.gmra.mxu0 %v423
      %v545 = vpop.f32.mrf.mxu0
      %v546 = vadd.f32 0.0, %v545
      %v547 = vpop.f32.mrf.mxu0
      %v548 = vpop.f32.mrf.mxu0
      %v549 = vadd.f32 0.0, %v548
      %v550 = vpop.f32.mrf.mxu0
      %551 = vmatprep.mubr.bf16.mxu0 0
      %552 = vmatmul.mubr.bf16.gmra.mxu0 %v426
      %v553 = vpop.f32.mrf.mxu0
      %v554 = vadd.f32 0.0, %v553
      %v555 = vpop.f32.mrf.mxu0
      %v556 = vpop.f32.mrf.mxu0
      %v557 = vadd.f32 0.0, %v556
      %v558 = vpop.f32.mrf.mxu0
      %559 = vdwg.mxu0
      %560 = vxpose.xlu0.b32.start [1/16] %v466, 128
      %561 = vxpose.xlu0.b32.cont [2/16] 0.0, 128
      %562 = vxpose.xlu0.b32.cont [3/16] 0.0, 128
      %563 = vxpose.xlu0.b32.cont [4/16] 0.0, 128
      %564 = vxpose.xlu0.b32.cont [5/16] 0.0, 128
      %565 = vxpose.xlu0.b32.cont [6/16] 0.0, 128
      %566 = vxpose.xlu0.b32.cont [7/16] 0.0, 128
      %567 = vxpose.xlu0.b32.cont [8/16] 0.0, 128
      %568 = vxpose.xlu0.b32.cont [9/16] 0.0, 128
      %569 = vxpose.xlu0.b32.cont [10/16] 0.0, 128
      %570 = vxpose.xlu0.b32.cont [11/16] 0.0, 128
      %571 = vxpose.xlu0.b32.cont [12/16] 0.0, 128
      %572 = vxpose.xlu0.b32.cont [13/16] 0.0, 128
      %573 = vxpose.xlu0.b32.cont [14/16] 0.0, 128
      %574 = vxpose.xlu0.b32.cont [15/16] 0.0, 128
      %575 = vxpose.xlu0.b32.end [16/16] 0.0, 128
      %v576 = vpop.trf.xlu0
      %v577 = vpop.trf.xlu0
      %v578 = vpop.trf.xlu0
      %v579 = vpop.trf.xlu0
      %v580 = vpop.trf.xlu0
      %v581 = vpop.trf.xlu0
      %v582 = vpop.trf.xlu0
      %v583 = vpop.trf.xlu0
      %v584 = vpop.trf.xlu0
      %v585 = vpop.trf.xlu0
      %v586 = vpop.trf.xlu0
      %v587 = vpop.trf.xlu0
      %v588 = vpop.trf.xlu0
      %v589 = vpop.trf.xlu0
      %v590 = vpop.trf.xlu0
      %v591 = vpop.trf.xlu0
      %592 = vxpose.xlu0.b32.start [1/16] %v469, 128
      %593 = vxpose.xlu0.b32.cont [2/16] 0.0, 128
      %594 = vxpose.xlu0.b32.cont [3/16] 0.0, 128
      %595 = vxpose.xlu0.b32.cont [4/16] 0.0, 128
      %596 = vxpose.xlu0.b32.cont [5/16] 0.0, 128
      %597 = vxpose.xlu0.b32.cont [6/16] 0.0, 128
      %598 = vxpose.xlu0.b32.cont [7/16] 0.0, 128
      %599 = vxpose.xlu0.b32.cont [8/16] 0.0, 128
      %600 = vxpose.xlu0.b32.cont [9/16] 0.0, 128
      %601 = vxpose.xlu0.b32.cont [10/16] 0.0, 128
      %602 = vxpose.xlu0.b32.cont [11/16] 0.0, 128
      %603 = vxpose.xlu0.b32.cont [12/16] 0.0, 128
      %604 = vxpose.xlu0.b32.cont [13/16] 0.0, 128
      %605 = vxpose.xlu0.b32.cont [14/16] 0.0, 128
      %606 = vxpose.xlu0.b32.cont [15/16] 0.0, 128
      %607 = vxpose.xlu0.b32.end [16/16] 0.0, 128
      %v608 = vpop.trf.xlu0
      %v609 = vpop.trf.xlu0
      %v610 = vpop.trf.xlu0
      %v611 = vpop.trf.xlu0
      %v612 = vpop.trf.xlu0
      %v613 = vpop.trf.xlu0
      %v614 = vpop.trf.xlu0
      %v615 = vpop.trf.xlu0
      %v616 = vpop.trf.xlu0
      %v617 = vpop.trf.xlu0
      %v618 = vpop.trf.xlu0
      %v619 = vpop.trf.xlu0
      %v620 = vpop.trf.xlu0
      %v621 = vpop.trf.xlu0
      %v622 = vpop.trf.xlu0
      %v623 = vpop.trf.xlu0
      %624 = vxpose.xlu0.b32.start [1/16] %v474, 128
      %625 = vxpose.xlu0.b32.cont [2/16] 0.0, 128
      %626 = vxpose.xlu0.b32.cont [3/16] 0.0, 128
      %627 = vxpose.xlu0.b32.cont [4/16] 0.0, 128
      %628 = vxpose.xlu0.b32.cont [5/16] 0.0, 128
      %629 = vxpose.xlu0.b32.cont [6/16] 0.0, 128
      %630 = vxpose.xlu0.b32.cont [7/16] 0.0, 128
      %631 = vxpose.xlu0.b32.cont [8/16] 0.0, 128
      %632 = vxpose.xlu0.b32.cont [9/16] 0.0, 128
      %633 = vxpose.xlu0.b32.cont [10/16] 0.0, 128
      %634 = vxpose.xlu0.b32.cont [11/16] 0.0, 128
      %635 = vxpose.xlu0.b32.cont [12/16] 0.0, 128
      %636 = vxpose.xlu0.b32.cont [13/16] 0.0, 128
      %637 = vxpose.xlu0.b32.cont [14/16] 0.0, 128
      %638 = vxpose.xlu0.b32.cont [15/16] 0.0, 128
      %639 = vxpose.xlu0.b32.end [16/16] 0.0, 128
      %v640 = vpop.trf.xlu0
      %v641 = vpop.trf.xlu0
      %v642 = vpop.trf.xlu0
      %v643 = vpop.trf.xlu0
      %v644 = vpop.trf.xlu0
      %v645 = vpop.trf.xlu0
      %v646 = vpop.trf.xlu0
      %v647 = vpop.trf.xlu0
      %v648 = vpop.trf.xlu0
      %v649 = vpop.trf.xlu0
      %v650 = vpop.trf.xlu0
      %v651 = vpop.trf.xlu0
      %v652 = vpop.trf.xlu0
      %v653 = vpop.trf.xlu0
      %v654 = vpop.trf.xlu0
      %v655 = vpop.trf.xlu0
      %656 = vxpose.xlu0.b32.start [1/16] %v477, 128
      %657 = vxpose.xlu0.b32.cont [2/16] 0.0, 128
      %658 = vxpose.xlu0.b32.cont [3/16] 0.0, 128
      %659 = vxpose.xlu0.b32.cont [4/16] 0.0, 128
      %660 = vxpose.xlu0.b32.cont [5/16] 0.0, 128
      %661 = vxpose.xlu0.b32.cont [6/16] 0.0, 128
      %662 = vxpose.xlu0.b32.cont [7/16] 0.0, 128
      %663 = vxpose.xlu0.b32.cont [8/16] 0.0, 128
      %664 = vxpose.xlu0.b32.cont [9/16] 0.0, 128
      %665 = vxpose.xlu0.b32.cont [10/16] 0.0, 128
      %666 = vxpose.xlu0.b32.cont [11/16] 0.0, 128
      %667 = vxpose.xlu0.b32.cont [12/16] 0.0, 128
      %668 = vxpose.xlu0.b32.cont [13/16] 0.0, 128
      %669 = vxpose.xlu0.b32.cont [14/16] 0.0, 128
      %670 = vxpose.xlu0.b32.cont [15/16] 0.0, 128
      %671 = vxpose.xlu0.b32.end [16/16] 0.0, 128
      %v672 = vpop.trf.xlu0
      %v673 = vpop.trf.xlu0
      %v674 = vpop.trf.xlu0
      %v675 = vpop.trf.xlu0
      %v676 = vpop.trf.xlu0
      %v677 = vpop.trf.xlu0
      %v678 = vpop.trf.xlu0
      %v679 = vpop.trf.xlu0
      %v680 = vpop.trf.xlu0
      %v681 = vpop.trf.xlu0
      %v682 = vpop.trf.xlu0
      %v683 = vpop.trf.xlu0
      %v684 = vpop.trf.xlu0
      %v685 = vpop.trf.xlu0
      %v686 = vpop.trf.xlu0
      %v687 = vpop.trf.xlu0
      %688 = vxpose.xlu0.b32.start [1/16] %v482, 128
      %689 = vxpose.xlu0.b32.cont [2/16] 0.0, 128
      %690 = vxpose.xlu0.b32.cont [3/16] 0.0, 128
      %691 = vxpose.xlu0.b32.cont [4/16] 0.0, 128
      %692 = vxpose.xlu0.b32.cont [5/16] 0.0, 128
      %693 = vxpose.xlu0.b32.cont [6/16] 0.0, 128
      %694 = vxpose.xlu0.b32.cont [7/16] 0.0, 128
      %695 = vxpose.xlu0.b32.cont [8/16] 0.0, 128
      %696 = vxpose.xlu0.b32.cont [9/16] 0.0, 128
      %697 = vxpose.xlu0.b32.cont [10/16] 0.0, 128
      %698 = vxpose.xlu0.b32.cont [11/16] 0.0, 128
      %699 = vxpose.xlu0.b32.cont [12/16] 0.0, 128
      %700 = vxpose.xlu0.b32.cont [13/16] 0.0, 128
      %701 = vxpose.xlu0.b32.cont [14/16] 0.0, 128
      %702 = vxpose.xlu0.b32.cont [15/16] 0.0, 128
      %703 = vxpose.xlu0.b32.end [16/16] 0.0, 128
      %v704 = vpop.trf.xlu0
      %v705 = vpop.trf.xlu0
      %v706 = vpop.trf.xlu0
      %v707 = vpop.trf.xlu0
      %v708 = vpop.trf.xlu0
      %v709 = vpop.trf.xlu0
      %v710 = vpop.trf.xlu0
      %v711 = vpop.trf.xlu0
      %v712 = vpop.trf.xlu0
      %v713 = vpop.trf.xlu0
      %v714 = vpop.trf.xlu0
      %v715 = vpop.trf.xlu0
      %v716 = vpop.trf.xlu0
      %v717 = vpop.trf.xlu0
      %v718 = vpop.trf.xlu0
      %v719 = vpop.trf.xlu0
      %720 = vxpose.xlu0.b32.start [1/16] %v485, 128
      %721 = vxpose.xlu0.b32.cont [2/16] 0.0, 128
      %722 = vxpose.xlu0.b32.cont [3/16] 0.0, 128
      %723 = vxpose.xlu0.b32.cont [4/16] 0.0, 128
      %724 = vxpose.xlu0.b32.cont [5/16] 0.0, 128
      %725 = vxpose.xlu0.b32.cont [6/16] 0.0, 128
      %726 = vxpose.xlu0.b32.cont [7/16] 0.0, 128
      %727 = vxpose.xlu0.b32.cont [8/16] 0.0, 128
      %728 = vxpose.xlu0.b32.cont [9/16] 0.0, 128
      %729 = vxpose.xlu0.b32.cont [10/16] 0.0, 128
      %730 = vxpose.xlu0.b32.cont [11/16] 0.0, 128
      %731 = vxpose.xlu0.b32.cont [12/16] 0.0, 128
      %732 = vxpose.xlu0.b32.cont [13/16] 0.0, 128
      %733 = vxpose.xlu0.b32.cont [14/16] 0.0, 128
      %734 = vxpose.xlu0.b32.cont [15/16] 0.0, 128
      %735 = vxpose.xlu0.b32.end [16/16] 0.0, 128
      %v736 = vpop.trf.xlu0
      %v737 = vpop.trf.xlu0
      %v738 = vpop.trf.xlu0
      %v739 = vpop.trf.xlu0
      %v740 = vpop.trf.xlu0
      %v741 = vpop.trf.xlu0
      %v742 = vpop.trf.xlu0
      %v743 = vpop.trf.xlu0
      %v744 = vpop.trf.xlu0
      %v745 = vpop.trf.xlu0
      %v746 = vpop.trf.xlu0
      %v747 = vpop.trf.xlu0
      %v748 = vpop.trf.xlu0
      %v749 = vpop.trf.xlu0
      %v750 = vpop.trf.xlu0
      %v751 = vpop.trf.xlu0
      %752 = vxpose.xlu0.b32.start [1/16] %v490, 128
      %753 = vxpose.xlu0.b32.cont [2/16] 0.0, 128
      %754 = vxpose.xlu0.b32.cont [3/16] 0.0, 128
      %755 = vxpose.xlu0.b32.cont [4/16] 0.0, 128
      %756 = vxpose.xlu0.b32.cont [5/16] 0.0, 128
      %757 = vxpose.xlu0.b32.cont [6/16] 0.0, 128
      %758 = vxpose.xlu0.b32.cont [7/16] 0.0, 128
      %759 = vxpose.xlu0.b32.cont [8/16] 0.0, 128
      %760 = vxpose.xlu0.b32.cont [9/16] 0.0, 128
      %761 = vxpose.xlu0.b32.cont [10/16] 0.0, 128
      %762 = vxpose.xlu0.b32.cont [11/16] 0.0, 128
      %763 = vxpose.xlu0.b32.cont [12/16] 0.0, 128
      %764 = vxpose.xlu0.b32.cont [13/16] 0.0, 128
      %765 = vxpose.xlu0.b32.cont [14/16] 0.0, 128
      %766 = vxpose.xlu0.b32.cont [15/16] 0.0, 128
      %767 = vxpose.xlu0.b32.end [16/16] 0.0, 128
      %v768 = vpop.trf.xlu0
      %v769 = vpop.trf.xlu0
      %v770 = vpop.trf.xlu0
      %v771 = vpop.trf.xlu0
      %v772 = vpop.trf.xlu0
      %v773 = vpop.trf.xlu0
      %v774 = vpop.trf.xlu0
      %v775 = vpop.trf.xlu0
      %v776 = vpop.trf.xlu0
      %v777 = vpop.trf.xlu0
      %v778 = vpop.trf.xlu0
      %v779 = vpop.trf.xlu0
      %v780 = vpop.trf.xlu0
      %v781 = vpop.trf.xlu0
      %v782 = vpop.trf.xlu0
      %v783 = vpop.trf.xlu0
      %784 = vxpose.xlu0.b32.start [1/16] %v493, 128
      %785 = vxpose.xlu0.b32.cont [2/16] 0.0, 128
      %786 = vxpose.xlu0.b32.cont [3/16] 0.0, 128
      %787 = vxpose.xlu0.b32.cont [4/16] 0.0, 128
      %788 = vxpose.xlu0.b32.cont [5/16] 0.0, 128
      %789 = vxpose.xlu0.b32.cont [6/16] 0.0, 128
      %790 = vxpose.xlu0.b32.cont [7/16] 0.0, 128
      %791 = vxpose.xlu0.b32.cont [8/16] 0.0, 128
      %792 = vxpose.xlu0.b32.cont [9/16] 0.0, 128
      %793 = vxpose.xlu0.b32.cont [10/16] 0.0, 128
      %794 = vxpose.xlu0.b32.cont [11/16] 0.0, 128
      %795 = vxpose.xlu0.b32.cont [12/16] 0.0, 128
      %796 = vxpose.xlu0.b32.cont [13/16] 0.0, 128
      %797 = vxpose.xlu0.b32.cont [14/16] 0.0, 128
      %798 = vxpose.xlu0.b32.cont [15/16] 0.0, 128
      %799 = vxpose.xlu0.b32.end [16/16] 0.0, 128
      %v800 = vpop.trf.xlu0
      %v801 = vpop.trf.xlu0
      %v802 = vpop.trf.xlu0
      %v803 = vpop.trf.xlu0
      %v804 = vpop.trf.xlu0
      %v805 = vpop.trf.xlu0
      %v806 = vpop.trf.xlu0
      %v807 = vpop.trf.xlu0
      %v808 = vpop.trf.xlu0
      %v809 = vpop.trf.xlu0
      %v810 = vpop.trf.xlu0
      %v811 = vpop.trf.xlu0
      %v812 = vpop.trf.xlu0
      %v813 = vpop.trf.xlu0
      %v814 = vpop.trf.xlu0
      %v815 = vpop.trf.xlu0
      %v816 = vpack.c.bf16 %v576, %v576
      %v817 = vpack.c.bf16 %v608, %v608
      %v818 = vpack.c.bf16 %v640, %v640
      %v819 = vpack.c.bf16 %v672, %v672
      %v820 = vpack.c.bf16 %v704, %v704
      %v821 = vpack.c.bf16 %v736, %v736
      %v822 = vpack.c.bf16 %v768, %v768
      %v823 = vpack.c.bf16 %v800, %v800
      %v824 = vpack.c.bf16 %v498, %v498
      %v825 = vpack.c.bf16 %v501, %v501
      %v826 = vpack.c.bf16 %v506, %v506
      %v827 = vpack.c.bf16 %v509, %v509
      %v828 = vpack.c.bf16 %v514, %v514
      %v829 = vpack.c.bf16 %v517, %v517
      %v830 = vpack.c.bf16 %v522, %v522
      %v831 = vpack.c.bf16 %v525, %v525
      %v832 = vpack.c.bf16 %v530, %v530
      %v833 = vpack.c.bf16 %v533, %v533
      %v834 = vpack.c.bf16 %v538, %v538
      %v835 = vpack.c.bf16 %v541, %v541
      %v836 = vpack.c.bf16 %v546, %v546
      %v837 = vpack.c.bf16 %v549, %v549
      %v838 = vpack.c.bf16 %v554, %v554
      %v839 = vpack.c.bf16 %v557, %v557
      %v840 = vld [vmem:[%s4] sm:$0xf]
      %v841 = vld [vmem:[%s4 + $0x4] sm:$0xf]
      %v850 = vunpack.c.l.b16 %v816
      %v851 = vunpack.c.l.b16 %v817
      %v852 = vunpack.c.l.b16 %v818
      %v853 = vunpack.c.l.b16 %v819
      %v854 = vunpack.c.l.b16 %v820
      %v855 = vunpack.c.l.b16 %v821
      %v856 = vunpack.c.l.b16 %v822
      %v857 = vunpack.c.l.b16 %v823
      %v858 = vpack.c.b16 %v851, %v850
      %v859 = vpack.c.b16 %v853, %v852
      %v860 = vpack.c.b16 %v855, %v854
      %v861 = vpack.c.b16 %v857, %v856
      %v864 = vunpack.c.l.b16 %v840
      %v865 = vunpack.c.l.b16 %v841
      %v866 = vpack.c.b16 %v865, %v864
      %vm867 = vcmask 64512
      %v869 = vsel %vm867, %v858, 0
      %v872 = vsel %vm867, %v859, 0
      %v875 = vsel %vm867, %v860, 0
      %v878 = vsel %vm867, %v861, 0
      %v881 = vsel %vm867, %v866, 0
      %883 = vmatprep.subr.bf16.mxu0 0
      %884 = vmatpush1.bf16.xpose.msra.mxu0 0
      %885 = vmatprep.subr.bf16.mxu0 0
      %886 = vmatpush1.bf16.xpose.msra.mxu0 0
      %887 = vmatprep.subr.bf16.mxu0 0
      %888 = vmatpush1.bf16.xpose.msra.mxu0 0
      %889 = vmatprep.subr.bf16.mxu0 0
      %890 = vmatpush1.bf16.xpose.msra.mxu0 0
      %891 = vmatprep.subr.bf16.mxu0 0
      %892 = vmatpush1.bf16.xpose.msra.mxu0 0
      %893 = vmatprep.subr.bf16.mxu0 0
      %894 = vmatpush1.bf16.xpose.msra.mxu0 0
      %895 = vmatprep.subr.bf16.mxu0 0
      %896 = vmatpush1.bf16.xpose.msra.mxu0 0
      %897 = vmatprep.subr.bf16.mxu0 0
      %898 = vmatpush1.bf16.xpose.msra.mxu0 %v881
      %899 = vmatprep.subr.bf16.mxu0 0
      %900 = vmatpush2.bf16.xpose.msra.mxu0 0
      %901 = vmatprep.subr.bf16.mxu0 0
      %902 = vmatpush2.bf16.xpose.msra.mxu0 0
      %903 = vmatprep.subr.bf16.mxu0 0
      %904 = vmatpush2.bf16.xpose.msra.mxu0 0
      %905 = vmatprep.subr.bf16.mxu0 0
      %906 = vmatpush2.bf16.xpose.msra.mxu0 0
      %907 = vmatprep.subr.bf16.mxu0 0
      %908 = vmatpush2.bf16.xpose.msra.mxu0 0
      %909 = vmatprep.subr.bf16.mxu0 0
      %910 = vmatpush2.bf16.xpose.msra.mxu0 0
      %911 = vmatprep.subr.bf16.mxu0 0
      %912 = vmatpush2.bf16.xpose.msra.mxu0 0
      %913 = vmatprep.subr.bf16.mxu0 0
      %914 = vmatpush2.bf16.xpose.msra.mxu0 0
      %915 = vmatprep.mubr.bf16.mxu0 0
      %916 = vmatmul.mubr.bf16.gmra.mxu0 %v869
      %v917 = vpop.f32.mrf.mxu0
      %v918 = vadd.f32 0.0, %v917
      %v919 = vpop.f32.mrf.mxu0
      %v920 = vpop.f32.mrf.mxu0
      %v921 = vadd.f32 0.0, %v920
      %v922 = vpop.f32.mrf.mxu0
      %923 = vmatprep.mubr.bf16.mxu0 0
      %924 = vmatmul.mubr.bf16.gmra.mxu0 %v872
      %v925 = vpop.f32.mrf.mxu0
      %v926 = vadd.f32 0.0, %v925
      %v927 = vpop.f32.mrf.mxu0
      %v928 = vpop.f32.mrf.mxu0
      %v929 = vadd.f32 0.0, %v928
      %v930 = vpop.f32.mrf.mxu0
      %931 = vmatprep.mubr.bf16.mxu0 0
      %932 = vmatmul.mubr.bf16.gmra.mxu0 %v875
      %v933 = vpop.f32.mrf.mxu0
      %v934 = vadd.f32 0.0, %v933
      %v935 = vpop.f32.mrf.mxu0
      %v936 = vpop.f32.mrf.mxu0
      %v937 = vadd.f32 0.0, %v936
      %v938 = vpop.f32.mrf.mxu0
      %939 = vmatprep.mubr.bf16.mxu0 0
      %940 = vmatmul.mubr.bf16.gmra.mxu0 %v878
      %v941 = vpop.f32.mrf.mxu0
      %v942 = vadd.f32 0.0, %v941
      %v943 = vpop.f32.mrf.mxu0
      %v944 = vpop.f32.mrf.mxu0
      %v945 = vadd.f32 0.0, %v944
      %v946 = vpop.f32.mrf.mxu0
      %947 = vdwg.mxu0
      %v948 = vlaneseq
      %v949 = vshrl.u32 %v948, 7
      %v950 = vsub.s32 7, %v949
      %959 = vrot.lane.b32.xlu0 %v918, 127
      %v960 = vpop.permute.xlu0 %959
      %961 = vrot.lane.b32.xlu0 %v921, 127
      %v962 = vpop.permute.xlu0 %961
      %963 = vrot.lane.b32.xlu0 %v926, 127
      %v964 = vpop.permute.xlu0 %963
      %965 = vrot.lane.b32.xlu0 %v929, 127
      %v966 = vpop.permute.xlu0 %965
      %967 = vrot.lane.b32.xlu0 %v934, 127
      %v968 = vpop.permute.xlu0 %967
      %969 = vrot.lane.b32.xlu0 %v937, 127
      %v970 = vpop.permute.xlu0 %969
      %971 = vrot.lane.b32.xlu0 %v942, 127
      %v972 = vpop.permute.xlu0 %971
      %973 = vrot.lane.b32.xlu0 %v945, 127
      %v974 = vpop.permute.xlu0 %973
      %983 = vrot.lane.b32.xlu0 %v918, 15
      %v984 = vpop.permute.xlu0 %983
      %985 = vrot.lane.b32.xlu0 %v921, 15
      %v986 = vpop.permute.xlu0 %985
      %987 = vrot.lane.b32.xlu0 %v926, 15
      %v988 = vpop.permute.xlu0 %987
      %989 = vrot.lane.b32.xlu0 %v929, 15
      %v990 = vpop.permute.xlu0 %989
      %991 = vrot.lane.b32.xlu0 %v934, 15
      %v992 = vpop.permute.xlu0 %991
      %993 = vrot.lane.b32.xlu0 %v937, 15
      %v994 = vpop.permute.xlu0 %993
      %995 = vrot.lane.b32.xlu0 %v942, 15
      %v996 = vpop.permute.xlu0 %995
      %997 = vrot.lane.b32.xlu0 %v945, 15
      %v998 = vpop.permute.xlu0 %997
      %vm1007 = vcmask 121856
      %v1008 = vsel %vm1007, %v960, %v984
      %v1009 = vsel %vm1007, %v962, %v986
      %v1010 = vsel %vm1007, %v964, %v988
      %v1011 = vsel %vm1007, %v966, %v990
      %v1012 = vsel %vm1007, %v968, %v992
      %v1013 = vsel %vm1007, %v970, %v994
      %v1014 = vsel %vm1007, %v972, %v996
      %v1015 = vsel %vm1007, %v974, %v998
      %v1016 = vand.u32 %v950, 1
      %vm1017 = vcmp.ne.s32.totalorder %v1016, 0
      %v1018 = vsel %vm1017, 1, 0
      %vm1019 = vcmp.eq.s32.totalorder %v1018, 1
      %v1020 = vsel %vm1019, %v1008, %v918
      %v1021 = vsel %vm1019, %v1009, %v921
      %v1022 = vsel %vm1019, %v1010, %v926
      %v1023 = vsel %vm1019, %v1011, %v929
      %v1024 = vsel %vm1019, %v1012, %v934
      %v1025 = vsel %vm1019, %v1013, %v937
      %v1026 = vsel %vm1019, %v1014, %v942
      %v1027 = vsel %vm1019, %v1015, %v945
      %1036 = vrot.lane.b32.xlu0 %v1020, 126
      %v1037 = vpop.permute.xlu0 %1036
      %1038 = vrot.lane.b32.xlu0 %v1021, 126
      %v1039 = vpop.permute.xlu0 %1038
      %1040 = vrot.lane.b32.xlu0 %v1022, 126
      %v1041 = vpop.permute.xlu0 %1040
      %1042 = vrot.lane.b32.xlu0 %v1023, 126
      %v1043 = vpop.permute.xlu0 %1042
      %1044 = vrot.lane.b32.xlu0 %v1024, 126
      %v1045 = vpop.permute.xlu0 %1044
      %1046 = vrot.lane.b32.xlu0 %v1025, 126
      %v1047 = vpop.permute.xlu0 %1046
      %1048 = vrot.lane.b32.xlu0 %v1026, 126
      %v1049 = vpop.permute.xlu0 %1048
      %1050 = vrot.lane.b32.xlu0 %v1027, 126
      %v1051 = vpop.permute.xlu0 %1050
      %1060 = vrot.lane.b32.xlu0 %v1020, 14
      %v1061 = vpop.permute.xlu0 %1060
      %1062 = vrot.lane.b32.xlu0 %v1021, 14
      %v1063 = vpop.permute.xlu0 %1062
      %1064 = vrot.lane.b32.xlu0 %v1022, 14
      %v1065 = vpop.permute.xlu0 %1064
      %1066 = vrot.lane.b32.xlu0 %v1023, 14
      %v1067 = vpop.permute.xlu0 %1066
      %1068 = vrot.lane.b32.xlu0 %v1024, 14
      %v1069 = vpop.permute.xlu0 %1068
      %1070 = vrot.lane.b32.xlu0 %v1025, 14
      %v1071 = vpop.permute.xlu0 %1070
      %1072 = vrot.lane.b32.xlu0 %v1026, 14
      %v1073 = vpop.permute.xlu0 %1072
      %1074 = vrot.lane.b32.xlu0 %v1027, 14
      %v1075 = vpop.permute.xlu0 %1074
      %vm1084 = vcmask 113664
      %v1085 = vsel %vm1084, %v1037, %v1061
      %v1086 = vsel %vm1084, %v1039, %v1063
      %v1087 = vsel %vm1084, %v1041, %v1065
      %v1088 = vsel %vm1084, %v1043, %v1067
      %v1089 = vsel %vm1084, %v1045, %v1069
      %v1090 = vsel %vm1084, %v1047, %v1071
      %v1091 = vsel %vm1084, %v1049, %v1073
      %v1092 = vsel %vm1084, %v1051, %v1075
      %v1093 = vand.u32 %v950, 2
      %vm1094 = vcmp.ne.s32.totalorder %v1093, 0
      %v1095 = vsel %vm1094, 1, 0
      %vm1096 = vcmp.eq.s32.totalorder %v1095, 1
      %v1097 = vsel %vm1096, %v1085, %v1020
      %v1098 = vsel %vm1096, %v1086, %v1021
      %v1099 = vsel %vm1096, %v1087, %v1022
      %v1100 = vsel %vm1096, %v1088, %v1023
      %v1101 = vsel %vm1096, %v1089, %v1024
      %v1102 = vsel %vm1096, %v1090, %v1025
      %v1103 = vsel %vm1096, %v1091, %v1026
      %v1104 = vsel %vm1096, %v1092, %v1027
      %1113 = vrot.lane.b32.xlu0 %v1097, 124
      %v1114 = vpop.permute.xlu0 %1113
      %1115 = vrot.lane.b32.xlu0 %v1098, 124
      %v1116 = vpop.permute.xlu0 %1115
      %1117 = vrot.lane.b32.xlu0 %v1099, 124
      %v1118 = vpop.permute.xlu0 %1117
      %1119 = vrot.lane.b32.xlu0 %v1100, 124
      %v1120 = vpop.permute.xlu0 %1119
      %1121 = vrot.lane.b32.xlu0 %v1101, 124
      %v1122 = vpop.permute.xlu0 %1121
      %1123 = vrot.lane.b32.xlu0 %v1102, 124
      %v1124 = vpop.permute.xlu0 %1123
      %1125 = vrot.lane.b32.xlu0 %v1103, 124
      %v1126 = vpop.permute.xlu0 %1125
      %1127 = vrot.lane.b32.xlu0 %v1104, 124
      %v1128 = vpop.permute.xlu0 %1127
      %1137 = vrot.lane.b32.xlu0 %v1097, 12
      %v1138 = vpop.permute.xlu0 %1137
      %1139 = vrot.lane.b32.xlu0 %v1098, 12
      %v1140 = vpop.permute.xlu0 %1139
      %1141 = vrot.lane.b32.xlu0 %v1099, 12
      %v1142 = vpop.permute.xlu0 %1141
      %1143 = vrot.lane.b32.xlu0 %v1100, 12
      %v1144 = vpop.permute.xlu0 %1143
      %1145 = vrot.lane.b32.xlu0 %v1101, 12
      %v1146 = vpop.permute.xlu0 %1145
      %1147 = vrot.lane.b32.xlu0 %v1102, 12
      %v1148 = vpop.permute.xlu0 %1147
      %1149 = vrot.lane.b32.xlu0 %v1103, 12
      %v1150 = vpop.permute.xlu0 %1149
      %1151 = vrot.lane.b32.xlu0 %v1104, 12
      %v1152 = vpop.permute.xlu0 %1151
      %vm1161 = vcmask 97280
      %v1162 = vsel %vm1161, %v1114, %v1138
      %v1163 = vsel %vm1161, %v1116, %v1140
      %v1164 = vsel %vm1161, %v1118, %v1142
      %v1165 = vsel %vm1161, %v1120, %v1144
      %v1166 = vsel %vm1161, %v1122, %v1146
      %v1167 = vsel %vm1161, %v1124, %v1148
      %v1168 = vsel %vm1161, %v1126, %v1150
      %v1169 = vsel %vm1161, %v1128, %v1152
      %v1170 = vand.u32 %v950, 4
      %vm1171 = vcmp.ne.s32.totalorder %v1170, 0
      %v1172 = vsel %vm1171, 1, 0
      %vm1173 = vcmp.eq.s32.totalorder %v1172, 1
      %v1174 = vsel %vm1173, %v1162, %v1097
      %v1175 = vsel %vm1173, %v1163, %v1098
      %v1176 = vsel %vm1173, %v1164, %v1099
      %v1177 = vsel %vm1173, %v1165, %v1100
      %v1178 = vsel %vm1173, %v1166, %v1101
      %v1179 = vsel %vm1173, %v1167, %v1102
      %v1180 = vsel %vm1173, %v1168, %v1103
      %v1181 = vsel %vm1173, %v1169, %v1104
      %v1183 = vsel %vm867, %v816, 0
      %vm1185 = vcmask 1043456
      %v1187 = vsel %vm1185, %v824, 0
      %1189 = vmatprep.subr.bf16.mxu0 0
      %1190 = vmatpush1.bf16.msra.mxu0 0
      %1191 = vmatprep.subr.bf16.mxu0 0
      %1192 = vmatpush1.bf16.msra.mxu0 0
      %1193 = vmatprep.subr.bf16.mxu0 0
      %1194 = vmatpush1.bf16.msra.mxu0 0
      %1195 = vmatprep.subr.bf16.mxu0 0
      %1196 = vmatpush1.bf16.msra.mxu0 0
      %1197 = vmatprep.subr.bf16.mxu0 0
      %1198 = vmatpush1.bf16.msra.mxu0 0
      %1199 = vmatprep.subr.bf16.mxu0 0
      %1200 = vmatpush1.bf16.msra.mxu0 0
      %1201 = vmatprep.subr.bf16.mxu0 0
      %1202 = vmatpush1.bf16.msra.mxu0 0
      %1203 = vmatprep.subr.bf16.mxu0 0
      %1204 = vmatpush1.bf16.msra.mxu0 %v1187
      %1205 = vmatprep.subr.bf16.mxu0 0
      %1206 = vmatpush2.bf16.msra.mxu0 0
      %1207 = vmatprep.subr.bf16.mxu0 0
      %1208 = vmatpush2.bf16.msra.mxu0 0
      %1209 = vmatprep.subr.bf16.mxu0 0
      %1210 = vmatpush2.bf16.msra.mxu0 0
      %1211 = vmatprep.subr.bf16.mxu0 0
      %1212 = vmatpush2.bf16.msra.mxu0 0
      %1213 = vmatprep.subr.bf16.mxu0 0
      %1214 = vmatpush2.bf16.msra.mxu0 0
      %1215 = vmatprep.subr.bf16.mxu0 0
      %1216 = vmatpush2.bf16.msra.mxu0 0
      %1217 = vmatprep.subr.bf16.mxu0 0
      %1218 = vmatpush2.bf16.msra.mxu0 0
      %1219 = vmatprep.subr.bf16.mxu0 0
      %1220 = vmatpush2.bf16.msra.mxu0 0
      %1221 = vmatprep.mubr.bf16.mxu0 0
      %1222 = vmatmul.mubr.bf16.gmra.mxu0 %v1183
      %v1223 = vpop.f32.mrf.mxu0
      %v1224 = vadd.f32 %v1174, %v1223
      %v1225 = vpop.f32.mrf.mxu0
      %v1226 = vpop.f32.mrf.mxu0
      %v1227 = vpop.f32.mrf.mxu0
      %1228 = vdwg.mxu0
      %v1230 = vsel %vm867, %v817, 0
      %v1233 = vsel %vm1185, %v825, 0
      %1235 = vmatprep.subr.bf16.mxu0 0
      %1236 = vmatpush1.bf16.msra.mxu0 0
      %1237 = vmatprep.subr.bf16.mxu0 0
      %1238 = vmatpush1.bf16.msra.mxu0 0
      %1239 = vmatprep.subr.bf16.mxu0 0
      %1240 = vmatpush1.bf16.msra.mxu0 0
      %1241 = vmatprep.subr.bf16.mxu0 0
      %1242 = vmatpush1.bf16.msra.mxu0 0
      %1243 = vmatprep.subr.bf16.mxu0 0
      %1244 = vmatpush1.bf16.msra.mxu0 0
      %1245 = vmatprep.subr.bf16.mxu0 0
      %1246 = vmatpush1.bf16.msra.mxu0 0
      %1247 = vmatprep.subr.bf16.mxu0 0
      %1248 = vmatpush1.bf16.msra.mxu0 0
      %1249 = vmatprep.subr.bf16.mxu0 0
      %1250 = vmatpush1.bf16.msra.mxu0 %v1233
      %1251 = vmatprep.subr.bf16.mxu0 0
      %1252 = vmatpush2.bf16.msra.mxu0 0
      %1253 = vmatprep.subr.bf16.mxu0 0
      %1254 = vmatpush2.bf16.msra.mxu0 0
      %1255 = vmatprep.subr.bf16.mxu0 0
      %1256 = vmatpush2.bf16.msra.mxu0 0
      %1257 = vmatprep.subr.bf16.mxu0 0
      %1258 = vmatpush2.bf16.msra.mxu0 0
      %1259 = vmatprep.subr.bf16.mxu0 0
      %1260 = vmatpush2.bf16.msra.mxu0 0
      %1261 = vmatprep.subr.bf16.mxu0 0
      %1262 = vmatpush2.bf16.msra.mxu0 0
      %1263 = vmatprep.subr.bf16.mxu0 0
      %1264 = vmatpush2.bf16.msra.mxu0 0
      %1265 = vmatprep.subr.bf16.mxu0 0
      %1266 = vmatpush2.bf16.msra.mxu0 0
      %1267 = vmatprep.mubr.bf16.mxu0 0
      %1268 = vmatmul.mubr.bf16.gmra.mxu0 %v1230
      %v1269 = vpop.f32.mrf.mxu0
      %v1270 = vadd.f32 %v1175, %v1269
      %v1271 = vpop.f32.mrf.mxu0
      %v1272 = vpop.f32.mrf.mxu0
      %v1273 = vpop.f32.mrf.mxu0
      %1274 = vdwg.mxu0
      %v1276 = vsel %vm867, %v818, 0
      %v1279 = vsel %vm1185, %v826, 0
      %1281 = vmatprep.subr.bf16.mxu0 0
      %1282 = vmatpush1.bf16.msra.mxu0 0
      %1283 = vmatprep.subr.bf16.mxu0 0
      %1284 = vmatpush1.bf16.msra.mxu0 0
      %1285 = vmatprep.subr.bf16.mxu0 0
      %1286 = vmatpush1.bf16.msra.mxu0 0
      %1287 = vmatprep.subr.bf16.mxu0 0
      %1288 = vmatpush1.bf16.msra.mxu0 0
      %1289 = vmatprep.subr.bf16.mxu0 0
      %1290 = vmatpush1.bf16.msra.mxu0 0
      %1291 = vmatprep.subr.bf16.mxu0 0
      %1292 = vmatpush1.bf16.msra.mxu0 0
      %1293 = vmatprep.subr.bf16.mxu0 0
      %1294 = vmatpush1.bf16.msra.mxu0 0
      %1295 = vmatprep.subr.bf16.mxu0 0
      %1296 = vmatpush1.bf16.msra.mxu0 %v1279
      %1297 = vmatprep.subr.bf16.mxu0 0
      %1298 = vmatpush2.bf16.msra.mxu0 0
      %1299 = vmatprep.subr.bf16.mxu0 0
      %1300 = vmatpush2.bf16.msra.mxu0 0
      %1301 = vmatprep.subr.bf16.mxu0 0
      %1302 = vmatpush2.bf16.msra.mxu0 0
      %1303 = vmatprep.subr.bf16.mxu0 0
      %1304 = vmatpush2.bf16.msra.mxu0 0
      %1305 = vmatprep.subr.bf16.mxu0 0
      %1306 = vmatpush2.bf16.msra.mxu0 0
      %1307 = vmatprep.subr.bf16.mxu0 0
      %1308 = vmatpush2.bf16.msra.mxu0 0
      %1309 = vmatprep.subr.bf16.mxu0 0
      %1310 = vmatpush2.bf16.msra.mxu0 0
      %1311 = vmatprep.subr.bf16.mxu0 0
      %1312 = vmatpush2.bf16.msra.mxu0 0
      %1313 = vmatprep.mubr.bf16.mxu0 0
      %1314 = vmatmul.mubr.bf16.gmra.mxu0 %v1276
      %v1315 = vpop.f32.mrf.mxu0
      %v1316 = vadd.f32 %v1176, %v1315
      %v1317 = vpop.f32.mrf.mxu0
      %v1318 = vpop.f32.mrf.mxu0
      %v1319 = vpop.f32.mrf.mxu0
      %1320 = vdwg.mxu0
      %v1322 = vsel %vm867, %v819, 0
      %v1325 = vsel %vm1185, %v827, 0
      %1327 = vmatprep.subr.bf16.mxu0 0
      %1328 = vmatpush1.bf16.msra.mxu0 0
      %1329 = vmatprep.subr.bf16.mxu0 0
      %1330 = vmatpush1.bf16.msra.mxu0 0
      %1331 = vmatprep.subr.bf16.mxu0 0
      %1332 = vmatpush1.bf16.msra.mxu0 0
      %1333 = vmatprep.subr.bf16.mxu0 0
      %1334 = vmatpush1.bf16.msra.mxu0 0
      %1335 = vmatprep.subr.bf16.mxu0 0
      %1336 = vmatpush1.bf16.msra.mxu0 0
      %1337 = vmatprep.subr.bf16.mxu0 0
      %1338 = vmatpush1.bf16.msra.mxu0 0
      %1339 = vmatprep.subr.bf16.mxu0 0
      %1340 = vmatpush1.bf16.msra.mxu0 0
      %1341 = vmatprep.subr.bf16.mxu0 0
      %1342 = vmatpush1.bf16.msra.mxu0 %v1325
      %1343 = vmatprep.subr.bf16.mxu0 0
      %1344 = vmatpush2.bf16.msra.mxu0 0
      %1345 = vmatprep.subr.bf16.mxu0 0
      %1346 = vmatpush2.bf16.msra.mxu0 0
      %1347 = vmatprep.subr.bf16.mxu0 0
      %1348 = vmatpush2.bf16.msra.mxu0 0
      %1349 = vmatprep.subr.bf16.mxu0 0
      %1350 = vmatpush2.bf16.msra.mxu0 0
      %1351 = vmatprep.subr.bf16.mxu0 0
      %1352 = vmatpush2.bf16.msra.mxu0 0
      %1353 = vmatprep.subr.bf16.mxu0 0
      %1354 = vmatpush2.bf16.msra.mxu0 0
      %1355 = vmatprep.subr.bf16.mxu0 0
      %1356 = vmatpush2.bf16.msra.mxu0 0
      %1357 = vmatprep.subr.bf16.mxu0 0
      %1358 = vmatpush2.bf16.msra.mxu0 0
      %1359 = vmatprep.mubr.bf16.mxu0 0
      %1360 = vmatmul.mubr.bf16.gmra.mxu0 %v1322
      %v1361 = vpop.f32.mrf.mxu0
      %v1362 = vadd.f32 %v1177, %v1361
      %v1363 = vpop.f32.mrf.mxu0
      %v1364 = vpop.f32.mrf.mxu0
      %v1365 = vpop.f32.mrf.mxu0
      %1366 = vdwg.mxu0
      %v1368 = vsel %vm867, %v820, 0
      %v1371 = vsel %vm1185, %v828, 0
      %1373 = vmatprep.subr.bf16.mxu0 0
      %1374 = vmatpush1.bf16.msra.mxu0 0
      %1375 = vmatprep.subr.bf16.mxu0 0
      %1376 = vmatpush1.bf16.msra.mxu0 0
      %1377 = vmatprep.subr.bf16.mxu0 0
      %1378 = vmatpush1.bf16.msra.mxu0 0
      %1379 = vmatprep.subr.bf16.mxu0 0
      %1380 = vmatpush1.bf16.msra.mxu0 0
      %1381 = vmatprep.subr.bf16.mxu0 0
      %1382 = vmatpush1.bf16.msra.mxu0 0
      %1383 = vmatprep.subr.bf16.mxu0 0
      %1384 = vmatpush1.bf16.msra.mxu0 0
      %1385 = vmatprep.subr.bf16.mxu0 0
      %1386 = vmatpush1.bf16.msra.mxu0 0
      %1387 = vmatprep.subr.bf16.mxu0 0
      %1388 = vmatpush1.bf16.msra.mxu0 %v1371
      %1389 = vmatprep.subr.bf16.mxu0 0
      %1390 = vmatpush2.bf16.msra.mxu0 0
      %1391 = vmatprep.subr.bf16.mxu0 0
      %1392 = vmatpush2.bf16.msra.mxu0 0
      %1393 = vmatprep.subr.bf16.mxu0 0
      %1394 = vmatpush2.bf16.msra.mxu0 0
      %1395 = vmatprep.subr.bf16.mxu0 0
      %1396 = vmatpush2.bf16.msra.mxu0 0
      %1397 = vmatprep.subr.bf16.mxu0 0
      %1398 = vmatpush2.bf16.msra.mxu0 0
      %1399 = vmatprep.subr.bf16.mxu0 0
      %1400 = vmatpush2.bf16.msra.mxu0 0
      %1401 = vmatprep.subr.bf16.mxu0 0
      %1402 = vmatpush2.bf16.msra.mxu0 0
      %1403 = vmatprep.subr.bf16.mxu0 0
      %1404 = vmatpush2.bf16.msra.mxu0 0
      %1405 = vmatprep.mubr.bf16.mxu0 0
      %1406 = vmatmul.mubr.bf16.gmra.mxu0 %v1368
      %v1407 = vpop.f32.mrf.mxu0
      %v1408 = vadd.f32 %v1178, %v1407
      %v1409 = vpop.f32.mrf.mxu0
      %v1410 = vpop.f32.mrf.mxu0
      %v1411 = vpop.f32.mrf.mxu0
      %1412 = vdwg.mxu0
      %v1414 = vsel %vm867, %v821, 0
      %v1417 = vsel %vm1185, %v829, 0
      %1419 = vmatprep.subr.bf16.mxu0 0
      %1420 = vmatpush1.bf16.msra.mxu0 0
      %1421 = vmatprep.subr.bf16.mxu0 0
      %1422 = vmatpush1.bf16.msra.mxu0 0
      %1423 = vmatprep.subr.bf16.mxu0 0
      %1424 = vmatpush1.bf16.msra.mxu0 0
      %1425 = vmatprep.subr.bf16.mxu0 0
      %1426 = vmatpush1.bf16.msra.mxu0 0
      %1427 = vmatprep.subr.bf16.mxu0 0
      %1428 = vmatpush1.bf16.msra.mxu0 0
      %1429 = vmatprep.subr.bf16.mxu0 0
      %1430 = vmatpush1.bf16.msra.mxu0 0
      %1431 = vmatprep.subr.bf16.mxu0 0
      %1432 = vmatpush1.bf16.msra.mxu0 0
      %1433 = vmatprep.subr.bf16.mxu0 0
      %1434 = vmatpush1.bf16.msra.mxu0 %v1417
      %1435 = vmatprep.subr.bf16.mxu0 0
      %1436 = vmatpush2.bf16.msra.mxu0 0
      %1437 = vmatprep.subr.bf16.mxu0 0
      %1438 = vmatpush2.bf16.msra.mxu0 0
      %1439 = vmatprep.subr.bf16.mxu0 0
      %1440 = vmatpush2.bf16.msra.mxu0 0
      %1441 = vmatprep.subr.bf16.mxu0 0
      %1442 = vmatpush2.bf16.msra.mxu0 0
      %1443 = vmatprep.subr.bf16.mxu0 0
      %1444 = vmatpush2.bf16.msra.mxu0 0
      %1445 = vmatprep.subr.bf16.mxu0 0
      %1446 = vmatpush2.bf16.msra.mxu0 0
      %1447 = vmatprep.subr.bf16.mxu0 0
      %1448 = vmatpush2.bf16.msra.mxu0 0
      %1449 = vmatprep.subr.bf16.mxu0 0
      %1450 = vmatpush2.bf16.msra.mxu0 0
      %1451 = vmatprep.mubr.bf16.mxu0 0
      %1452 = vmatmul.mubr.bf16.gmra.mxu0 %v1414
      %v1453 = vpop.f32.mrf.mxu0
      %v1454 = vadd.f32 %v1179, %v1453
      %v1455 = vpop.f32.mrf.mxu0
      %v1456 = vpop.f32.mrf.mxu0
      %v1457 = vpop.f32.mrf.mxu0
      %1458 = vdwg.mxu0
      %v1460 = vsel %vm867, %v822, 0
      %v1463 = vsel %vm1185, %v830, 0
      %1465 = vmatprep.subr.bf16.mxu0 0
      %1466 = vmatpush1.bf16.msra.mxu0 0
      %1467 = vmatprep.subr.bf16.mxu0 0
      %1468 = vmatpush1.bf16.msra.mxu0 0
      %1469 = vmatprep.subr.bf16.mxu0 0
      %1470 = vmatpush1.bf16.msra.mxu0 0
      %1471 = vmatprep.subr.bf16.mxu0 0
      %1472 = vmatpush1.bf16.msra.mxu0 0
      %1473 = vmatprep.subr.bf16.mxu0 0
      %1474 = vmatpush1.bf16.msra.mxu0 0
      %1475 = vmatprep.subr.bf16.mxu0 0
      %1476 = vmatpush1.bf16.msra.mxu0 0
      %1477 = vmatprep.subr.bf16.mxu0 0
      %1478 = vmatpush1.bf16.msra.mxu0 0
      %1479 = vmatprep.subr.bf16.mxu0 0
      %1480 = vmatpush1.bf16.msra.mxu0 %v1463
      %1481 = vmatprep.subr.bf16.mxu0 0
      %1482 = vmatpush2.bf16.msra.mxu0 0
      %1483 = vmatprep.subr.bf16.mxu0 0
      %1484 = vmatpush2.bf16.msra.mxu0 0
      %1485 = vmatprep.subr.bf16.mxu0 0
      %1486 = vmatpush2.bf16.msra.mxu0 0
      %1487 = vmatprep.subr.bf16.mxu0 0
      %1488 = vmatpush2.bf16.msra.mxu0 0
      %1489 = vmatprep.subr.bf16.mxu0 0
      %1490 = vmatpush2.bf16.msra.mxu0 0
      %1491 = vmatprep.subr.bf16.mxu0 0
      %1492 = vmatpush2.bf16.msra.mxu0 0
      %1493 = vmatprep.subr.bf16.mxu0 0
      %1494 = vmatpush2.bf16.msra.mxu0 0
      %1495 = vmatprep.subr.bf16.mxu0 0
      %1496 = vmatpush2.bf16.msra.mxu0 0
      %1497 = vmatprep.mubr.bf16.mxu0 0
      %1498 = vmatmul.mubr.bf16.gmra.mxu0 %v1460
      %v1499 = vpop.f32.mrf.mxu0
      %v1500 = vadd.f32 %v1180, %v1499
      %v1501 = vpop.f32.mrf.mxu0
      %v1502 = vpop.f32.mrf.mxu0
      %v1503 = vpop.f32.mrf.mxu0
      %1504 = vdwg.mxu0
      %v1506 = vsel %vm867, %v823, 0
      %v1509 = vsel %vm1185, %v831, 0
      %1511 = vmatprep.subr.bf16.mxu0 0
      %1512 = vmatpush1.bf16.msra.mxu0 0
      %1513 = vmatprep.subr.bf16.mxu0 0
      %1514 = vmatpush1.bf16.msra.mxu0 0
      %1515 = vmatprep.subr.bf16.mxu0 0
      %1516 = vmatpush1.bf16.msra.mxu0 0
      %1517 = vmatprep.subr.bf16.mxu0 0
      %1518 = vmatpush1.bf16.msra.mxu0 0
      %1519 = vmatprep.subr.bf16.mxu0 0
      %1520 = vmatpush1.bf16.msra.mxu0 0
      %1521 = vmatprep.subr.bf16.mxu0 0
      %1522 = vmatpush1.bf16.msra.mxu0 0
      %1523 = vmatprep.subr.bf16.mxu0 0
      %1524 = vmatpush1.bf16.msra.mxu0 0
      %1525 = vmatprep.subr.bf16.mxu0 0
      %1526 = vmatpush1.bf16.msra.mxu0 %v1509
      %1527 = vmatprep.subr.bf16.mxu0 0
      %1528 = vmatpush2.bf16.msra.mxu0 0
      %1529 = vmatprep.subr.bf16.mxu0 0
      %1530 = vmatpush2.bf16.msra.mxu0 0
      %1531 = vmatprep.subr.bf16.mxu0 0
      %1532 = vmatpush2.bf16.msra.mxu0 0
      %1533 = vmatprep.subr.bf16.mxu0 0
      %1534 = vmatpush2.bf16.msra.mxu0 0
      %1535 = vmatprep.subr.bf16.mxu0 0
      %1536 = vmatpush2.bf16.msra.mxu0 0
      %1537 = vmatprep.subr.bf16.mxu0 0
      %1538 = vmatpush2.bf16.msra.mxu0 0
      %1539 = vmatprep.subr.bf16.mxu0 0
      %1540 = vmatpush2.bf16.msra.mxu0 0
      %1541 = vmatprep.subr.bf16.mxu0 0
      %1542 = vmatpush2.bf16.msra.mxu0 0
      %1543 = vmatprep.mubr.bf16.mxu0 0
      %1544 = vmatmul.mubr.bf16.gmra.mxu0 %v1506
      %v1545 = vpop.f32.mrf.mxu0
      %v1546 = vadd.f32 %v1181, %v1545
      %v1547 = vpop.f32.mrf.mxu0
      %v1548 = vpop.f32.mrf.mxu0
      %v1549 = vpop.f32.mrf.mxu0
      %1550 = vdwg.mxu0
      %v1551 = vmul.f32 %v1224, 0.35355338
      %v1552 = vmul.f32 %v1270, 0.35355338
      %v1553 = vmul.f32 %v1316, 0.35355338
      %v1554 = vmul.f32 %v1362, 0.35355338
      %v1555 = vmul.f32 %v1408, 0.35355338
      %v1556 = vmul.f32 %v1454, 0.35355338
      %v1557 = vmul.f32 %v1500, 0.35355338
      %v1558 = vmul.f32 %v1546, 0.35355338
      %v1559 = vsel %vm867, %v1551, -inf
      %1560 = vmax.xlane.f32.xlu0 %v1559
      %v1561 = vpop.xlane.xlu0 %1560
      %v1562 = vsel %vm867, %v1552, -inf
      %1563 = vmax.xlane.f32.xlu0 %v1562
      %v1564 = vpop.xlane.xlu0 %1563
      %v1565 = vsel %vm867, %v1553, -inf
      %1566 = vmax.xlane.f32.xlu0 %v1565
      %v1567 = vpop.xlane.xlu0 %1566
      %v1568 = vsel %vm867, %v1554, -inf
      %1569 = vmax.xlane.f32.xlu0 %v1568
      %v1570 = vpop.xlane.xlu0 %1569
      %v1571 = vsel %vm867, %v1555, -inf
      %1572 = vmax.xlane.f32.xlu0 %v1571
      %v1573 = vpop.xlane.xlu0 %1572
      %v1574 = vsel %vm867, %v1556, -inf
      %1575 = vmax.xlane.f32.xlu0 %v1574
      %v1576 = vpop.xlane.xlu0 %1575
      %v1577 = vsel %vm867, %v1557, -inf
      %1578 = vmax.xlane.f32.xlu0 %v1577
      %v1579 = vpop.xlane.xlu0 %1578
      %v1580 = vsel %vm867, %v1558, -inf
      %1581 = vmax.xlane.f32.xlu0 %v1580
      %v1582 = vpop.xlane.xlu0 %1581
      %v1583 = vsub.f32 %v1551, %v1561
      %v1584 = vsub.f32 %v1552, %v1564
      %v1585 = vsub.f32 %v1553, %v1567
      %v1586 = vsub.f32 %v1554, %v1570
      %v1587 = vsub.f32 %v1555, %v1573
      %v1588 = vsub.f32 %v1556, %v1576
      %v1589 = vsub.f32 %v1557, %v1579
      %v1590 = vsub.f32 %v1558, %v1582
      %v1591 = vmul.f32 %v1583, 1.442695
      %v1592 = vpow.pop %v1591
      %v1593 = vmul.f32 %v1584, 1.442695
      %v1594 = vpow.pop %v1593
      %v1595 = vmul.f32 %v1585, 1.442695
      %v1596 = vpow.pop %v1595
      %v1597 = vmul.f32 %v1586, 1.442695
      %v1598 = vpow.pop %v1597
      %v1599 = vmul.f32 %v1587, 1.442695
      %v1600 = vpow.pop %v1599
      %v1601 = vmul.f32 %v1588, 1.442695
      %v1602 = vpow.pop %v1601
      %v1603 = vmul.f32 %v1589, 1.442695
      %v1604 = vpow.pop %v1603
      %v1605 = vmul.f32 %v1590, 1.442695
      %v1606 = vpow.pop %v1605
      %v1607 = vsel %vm867, %v1592, 0.0
      %1608 = vadd.xlane.f32.xlu0 %v1607
      %v1609 = vpop.xlane.xlu0 %1608
      %v1610 = vsel %vm867, %v1594, 0.0
      %1611 = vadd.xlane.f32.xlu0 %v1610
      %v1612 = vpop.xlane.xlu0 %1611
      %v1613 = vsel %vm867, %v1596, 0.0
      %1614 = vadd.xlane.f32.xlu0 %v1613
      %v1615 = vpop.xlane.xlu0 %1614
      %v1616 = vsel %vm867, %v1598, 0.0
      %1617 = vadd.xlane.f32.xlu0 %v1616
      %v1618 = vpop.xlane.xlu0 %1617
      %v1619 = vsel %vm867, %v1600, 0.0
      %1620 = vadd.xlane.f32.xlu0 %v1619
      %v1621 = vpop.xlane.xlu0 %1620
      %v1622 = vsel %vm867, %v1602, 0.0
      %1623 = vadd.xlane.f32.xlu0 %v1622
      %v1624 = vpop.xlane.xlu0 %1623
      %v1625 = vsel %vm867, %v1604, 0.0
      %1626 = vadd.xlane.f32.xlu0 %v1625
      %v1627 = vpop.xlane.xlu0 %1626
      %v1628 = vsel %vm867, %v1606, 0.0
      %1629 = vadd.xlane.f32.xlu0 %v1628
      %v1630 = vpop.xlane.xlu0 %1629
      %v1631 = vrcp.pop %v1609
      %v1632 = vrcp.pop %v1612
      %v1633 = vrcp.pop %v1615
      %v1634 = vrcp.pop %v1618
      %v1635 = vrcp.pop %v1621
      %v1636 = vrcp.pop %v1624
      %v1637 = vrcp.pop %v1627
      %v1638 = vrcp.pop %v1630
      %v1639 = vmul.f32 %v1592, %v1631
      %v1640 = vmul.f32 %v1594, %v1632
      %v1641 = vmul.f32 %v1596, %v1633
      %v1642 = vmul.f32 %v1598, %v1634
      %v1643 = vmul.f32 %v1600, %v1635
      %v1644 = vmul.f32 %v1602, %v1636
      %v1645 = vmul.f32 %v1604, %v1637
      %v1646 = vmul.f32 %v1606, %v1638
      %v1647 = vpack.c.bf16 %v1639, %v1639
      %v1648 = vpack.c.bf16 %v1640, %v1640
      %v1649 = vpack.c.bf16 %v1641, %v1641
      %v1650 = vpack.c.bf16 %v1642, %v1642
      %v1651 = vpack.c.bf16 %v1643, %v1643
      %v1652 = vpack.c.bf16 %v1644, %v1644
      %v1653 = vpack.c.bf16 %v1645, %v1645
      %v1654 = vpack.c.bf16 %v1646, %v1646
      %v1656 = vsel %vm867, %v832, 0
      %v1659 = vsel %vm867, %v1647, 0
      %1661 = vmatprep.subr.bf16.mxu0 0
      %1662 = vmatpush1.bf16.xpose.msra.mxu0 0
      %1663 = vmatprep.subr.bf16.mxu0 0
      %1664 = vmatpush1.bf16.xpose.msra.mxu0 0
      %1665 = vmatprep.subr.bf16.mxu0 0
      %1666 = vmatpush1.bf16.xpose.msra.mxu0 0
      %1667 = vmatprep.subr.bf16.mxu0 0
      %1668 = vmatpush1.bf16.xpose.msra.mxu0 0
      %1669 = vmatprep.subr.bf16.mxu0 0
      %1670 = vmatpush1.bf16.xpose.msra.mxu0 0
      %1671 = vmatprep.subr.bf16.mxu0 0
      %1672 = vmatpush1.bf16.xpose.msra.mxu0 0
      %1673 = vmatprep.subr.bf16.mxu0 0
      %1674 = vmatpush1.bf16.xpose.msra.mxu0 0
      %1675 = vmatprep.subr.bf16.mxu0 0
      %1676 = vmatpush1.bf16.xpose.msra.mxu0 %v1659
      %1677 = vmatprep.subr.bf16.mxu0 0
      %1678 = vmatpush2.bf16.xpose.msra.mxu0 0
      %1679 = vmatprep.subr.bf16.mxu0 0
      %1680 = vmatpush2.bf16.xpose.msra.mxu0 0
      %1681 = vmatprep.subr.bf16.mxu0 0
      %1682 = vmatpush2.bf16.xpose.msra.mxu0 0
      %1683 = vmatprep.subr.bf16.mxu0 0
      %1684 = vmatpush2.bf16.xpose.msra.mxu0 0
      %1685 = vmatprep.subr.bf16.mxu0 0
      %1686 = vmatpush2.bf16.xpose.msra.mxu0 0
      %1687 = vmatprep.subr.bf16.mxu0 0
      %1688 = vmatpush2.bf16.xpose.msra.mxu0 0
      %1689 = vmatprep.subr.bf16.mxu0 0
      %1690 = vmatpush2.bf16.xpose.msra.mxu0 0
      %1691 = vmatprep.subr.bf16.mxu0 0
      %1692 = vmatpush2.bf16.xpose.msra.mxu0 0
      %1693 = vmatprep.mubr.bf16.mxu0 0
      %1694 = vmatmul.mubr.bf16.gmra.mxu0 %v1656
      %v1695 = vpop.f32.mrf.mxu0
      %v1696 = vadd.f32 0.0, %v1695
      %v1697 = vpop.f32.mrf.mxu0
      %v1698 = vpop.f32.mrf.mxu0
      %v1699 = vpop.f32.mrf.mxu0
      %1700 = vdwg.mxu0
      %v1702 = vsel %vm867, %v833, 0
      %v1705 = vsel %vm867, %v1648, 0
      %1707 = vmatprep.subr.bf16.mxu0 0
      %1708 = vmatpush1.bf16.xpose.msra.mxu0 0
      %1709 = vmatprep.subr.bf16.mxu0 0
      %1710 = vmatpush1.bf16.xpose.msra.mxu0 0
      %1711 = vmatprep.subr.bf16.mxu0 0
      %1712 = vmatpush1.bf16.xpose.msra.mxu0 0
      %1713 = vmatprep.subr.bf16.mxu0 0
      %1714 = vmatpush1.bf16.xpose.msra.mxu0 0
      %1715 = vmatprep.subr.bf16.mxu0 0
      %1716 = vmatpush1.bf16.xpose.msra.mxu0 0
      %1717 = vmatprep.subr.bf16.mxu0 0
      %1718 = vmatpush1.bf16.xpose.msra.mxu0 0
      %1719 = vmatprep.subr.bf16.mxu0 0
      %1720 = vmatpush1.bf16.xpose.msra.mxu0 0
      %1721 = vmatprep.subr.bf16.mxu0 0
      %1722 = vmatpush1.bf16.xpose.msra.mxu0 %v1705
      %1723 = vmatprep.subr.bf16.mxu0 0
      %1724 = vmatpush2.bf16.xpose.msra.mxu0 0
      %1725 = vmatprep.subr.bf16.mxu0 0
      %1726 = vmatpush2.bf16.xpose.msra.mxu0 0
      %1727 = vmatprep.subr.bf16.mxu0 0
      %1728 = vmatpush2.bf16.xpose.msra.mxu0 0
      %1729 = vmatprep.subr.bf16.mxu0 0
      %1730 = vmatpush2.bf16.xpose.msra.mxu0 0
      %1731 = vmatprep.subr.bf16.mxu0 0
      %1732 = vmatpush2.bf16.xpose.msra.mxu0 0
      %1733 = vmatprep.subr.bf16.mxu0 0
      %1734 = vmatpush2.bf16.xpose.msra.mxu0 0
      %1735 = vmatprep.subr.bf16.mxu0 0
      %1736 = vmatpush2.bf16.xpose.msra.mxu0 0
      %1737 = vmatprep.subr.bf16.mxu0 0
      %1738 = vmatpush2.bf16.xpose.msra.mxu0 0
      %1739 = vmatprep.mubr.bf16.mxu0 0
      %1740 = vmatmul.mubr.bf16.gmra.mxu0 %v1702
      %v1741 = vpop.f32.mrf.mxu0
      %v1742 = vadd.f32 0.0, %v1741
      %v1743 = vpop.f32.mrf.mxu0
      %v1744 = vpop.f32.mrf.mxu0
      %v1745 = vpop.f32.mrf.mxu0
      %1746 = vdwg.mxu0
      %v1748 = vsel %vm867, %v834, 0
      %v1751 = vsel %vm867, %v1649, 0
      %1753 = vmatprep.subr.bf16.mxu0 0
      %1754 = vmatpush1.bf16.xpose.msra.mxu0 0
      %1755 = vmatprep.subr.bf16.mxu0 0
      %1756 = vmatpush1.bf16.xpose.msra.mxu0 0
      %1757 = vmatprep.subr.bf16.mxu0 0
      %1758 = vmatpush1.bf16.xpose.msra.mxu0 0
      %1759 = vmatprep.subr.bf16.mxu0 0
      %1760 = vmatpush1.bf16.xpose.msra.mxu0 0
      %1761 = vmatprep.subr.bf16.mxu0 0
      %1762 = vmatpush1.bf16.xpose.msra.mxu0 0
      %1763 = vmatprep.subr.bf16.mxu0 0
      %1764 = vmatpush1.bf16.xpose.msra.mxu0 0
      %1765 = vmatprep.subr.bf16.mxu0 0
      %1766 = vmatpush1.bf16.xpose.msra.mxu0 0
      %1767 = vmatprep.subr.bf16.mxu0 0
      %1768 = vmatpush1.bf16.xpose.msra.mxu0 %v1751
      %1769 = vmatprep.subr.bf16.mxu0 0
      %1770 = vmatpush2.bf16.xpose.msra.mxu0 0
      %1771 = vmatprep.subr.bf16.mxu0 0
      %1772 = vmatpush2.bf16.xpose.msra.mxu0 0
      %1773 = vmatprep.subr.bf16.mxu0 0
      %1774 = vmatpush2.bf16.xpose.msra.mxu0 0
      %1775 = vmatprep.subr.bf16.mxu0 0
      %1776 = vmatpush2.bf16.xpose.msra.mxu0 0
      %1777 = vmatprep.subr.bf16.mxu0 0
      %1778 = vmatpush2.bf16.xpose.msra.mxu0 0
      %1779 = vmatprep.subr.bf16.mxu0 0
      %1780 = vmatpush2.bf16.xpose.msra.mxu0 0
      %1781 = vmatprep.subr.bf16.mxu0 0
      %1782 = vmatpush2.bf16.xpose.msra.mxu0 0
      %1783 = vmatprep.subr.bf16.mxu0 0
      %1784 = vmatpush2.bf16.xpose.msra.mxu0 0
      %1785 = vmatprep.mubr.bf16.mxu0 0
      %1786 = vmatmul.mubr.bf16.gmra.mxu0 %v1748
      %v1787 = vpop.f32.mrf.mxu0
      %v1788 = vadd.f32 0.0, %v1787
      %v1789 = vpop.f32.mrf.mxu0
      %v1790 = vpop.f32.mrf.mxu0
      %v1791 = vpop.f32.mrf.mxu0
      %1792 = vdwg.mxu0
      %v1794 = vsel %vm867, %v835, 0
      %v1797 = vsel %vm867, %v1650, 0
      %1799 = vmatprep.subr.bf16.mxu0 0
      %1800 = vmatpush1.bf16.xpose.msra.mxu0 0
      %1801 = vmatprep.subr.bf16.mxu0 0
      %1802 = vmatpush1.bf16.xpose.msra.mxu0 0
      %1803 = vmatprep.subr.bf16.mxu0 0
      %1804 = vmatpush1.bf16.xpose.msra.mxu0 0
      %1805 = vmatprep.subr.bf16.mxu0 0
      %1806 = vmatpush1.bf16.xpose.msra.mxu0 0
      %1807 = vmatprep.subr.bf16.mxu0 0
      %1808 = vmatpush1.bf16.xpose.msra.mxu0 0
      %1809 = vmatprep.subr.bf16.mxu0 0
      %1810 = vmatpush1.bf16.xpose.msra.mxu0 0
      %1811 = vmatprep.subr.bf16.mxu0 0
      %1812 = vmatpush1.bf16.xpose.msra.mxu0 0
      %1813 = vmatprep.subr.bf16.mxu0 0
      %1814 = vmatpush1.bf16.xpose.msra.mxu0 %v1797
      %1815 = vmatprep.subr.bf16.mxu0 0
      %1816 = vmatpush2.bf16.xpose.msra.mxu0 0
      %1817 = vmatprep.subr.bf16.mxu0 0
      %1818 = vmatpush2.bf16.xpose.msra.mxu0 0
      %1819 = vmatprep.subr.bf16.mxu0 0
      %1820 = vmatpush2.bf16.xpose.msra.mxu0 0
      %1821 = vmatprep.subr.bf16.mxu0 0
      %1822 = vmatpush2.bf16.xpose.msra.mxu0 0
      %1823 = vmatprep.subr.bf16.mxu0 0
      %1824 = vmatpush2.bf16.xpose.msra.mxu0 0
      %1825 = vmatprep.subr.bf16.mxu0 0
      %1826 = vmatpush2.bf16.xpose.msra.mxu0 0
      %1827 = vmatprep.subr.bf16.mxu0 0
      %1828 = vmatpush2.bf16.xpose.msra.mxu0 0
      %1829 = vmatprep.subr.bf16.mxu0 0
      %1830 = vmatpush2.bf16.xpose.msra.mxu0 0
      %1831 = vmatprep.mubr.bf16.mxu0 0
      %1832 = vmatmul.mubr.bf16.gmra.mxu0 %v1794
      %v1833 = vpop.f32.mrf.mxu0
      %v1834 = vadd.f32 0.0, %v1833
      %v1835 = vpop.f32.mrf.mxu0
      %v1836 = vpop.f32.mrf.mxu0
      %v1837 = vpop.f32.mrf.mxu0
      %1838 = vdwg.mxu0
      %v1840 = vsel %vm867, %v836, 0
      %v1843 = vsel %vm867, %v1651, 0
      %1845 = vmatprep.subr.bf16.mxu0 0
      %1846 = vmatpush1.bf16.xpose.msra.mxu0 0
      %1847 = vmatprep.subr.bf16.mxu0 0
      %1848 = vmatpush1.bf16.xpose.msra.mxu0 0
      %1849 = vmatprep.subr.bf16.mxu0 0
      %1850 = vmatpush1.bf16.xpose.msra.mxu0 0
      %1851 = vmatprep.subr.bf16.mxu0 0
      %1852 = vmatpush1.bf16.xpose.msra.mxu0 0
      %1853 = vmatprep.subr.bf16.mxu0 0
      %1854 = vmatpush1.bf16.xpose.msra.mxu0 0
      %1855 = vmatprep.subr.bf16.mxu0 0
      %1856 = vmatpush1.bf16.xpose.msra.mxu0 0
      %1857 = vmatprep.subr.bf16.mxu0 0
      %1858 = vmatpush1.bf16.xpose.msra.mxu0 0
      %1859 = vmatprep.subr.bf16.mxu0 0
      %1860 = vmatpush1.bf16.xpose.msra.mxu0 %v1843
      %1861 = vmatprep.subr.bf16.mxu0 0
      %1862 = vmatpush2.bf16.xpose.msra.mxu0 0
      %1863 = vmatprep.subr.bf16.mxu0 0
      %1864 = vmatpush2.bf16.xpose.msra.mxu0 0
      %1865 = vmatprep.subr.bf16.mxu0 0
      %1866 = vmatpush2.bf16.xpose.msra.mxu0 0
      %1867 = vmatprep.subr.bf16.mxu0 0
      %1868 = vmatpush2.bf16.xpose.msra.mxu0 0
      %1869 = vmatprep.subr.bf16.mxu0 0
      %1870 = vmatpush2.bf16.xpose.msra.mxu0 0
      %1871 = vmatprep.subr.bf16.mxu0 0
      %1872 = vmatpush2.bf16.xpose.msra.mxu0 0
      %1873 = vmatprep.subr.bf16.mxu0 0
      %1874 = vmatpush2.bf16.xpose.msra.mxu0 0
      %1875 = vmatprep.subr.bf16.mxu0 0
      %1876 = vmatpush2.bf16.xpose.msra.mxu0 0
      %1877 = vmatprep.mubr.bf16.mxu0 0
      %1878 = vmatmul.mubr.bf16.gmra.mxu0 %v1840
      %v1879 = vpop.f32.mrf.mxu0
      %v1880 = vadd.f32 0.0, %v1879
      %v1881 = vpop.f32.mrf.mxu0
      %v1882 = vpop.f32.mrf.mxu0
      %v1883 = vpop.f32.mrf.mxu0
      %1884 = vdwg.mxu0
      %v1886 = vsel %vm867, %v837, 0
      %v1889 = vsel %vm867, %v1652, 0
      %1891 = vmatprep.subr.bf16.mxu0 0
      %1892 = vmatpush1.bf16.xpose.msra.mxu0 0
      %1893 = vmatprep.subr.bf16.mxu0 0
      %1894 = vmatpush1.bf16.xpose.msra.mxu0 0
      %1895 = vmatprep.subr.bf16.mxu0 0
      %1896 = vmatpush1.bf16.xpose.msra.mxu0 0
      %1897 = vmatprep.subr.bf16.mxu0 0
      %1898 = vmatpush1.bf16.xpose.msra.mxu0 0
      %1899 = vmatprep.subr.bf16.mxu0 0
      %1900 = vmatpush1.bf16.xpose.msra.mxu0 0
      %1901 = vmatprep.subr.bf16.mxu0 0
      %1902 = vmatpush1.bf16.xpose.msra.mxu0 0
      %1903 = vmatprep.subr.bf16.mxu0 0
      %1904 = vmatpush1.bf16.xpose.msra.mxu0 0
      %1905 = vmatprep.subr.bf16.mxu0 0
      %1906 = vmatpush1.bf16.xpose.msra.mxu0 %v1889
      %1907 = vmatprep.subr.bf16.mxu0 0
      %1908 = vmatpush2.bf16.xpose.msra.mxu0 0
      %1909 = vmatprep.subr.bf16.mxu0 0
      %1910 = vmatpush2.bf16.xpose.msra.mxu0 0
      %1911 = vmatprep.subr.bf16.mxu0 0
      %1912 = vmatpush2.bf16.xpose.msra.mxu0 0
      %1913 = vmatprep.subr.bf16.mxu0 0
      %1914 = vmatpush2.bf16.xpose.msra.mxu0 0
      %1915 = vmatprep.subr.bf16.mxu0 0
      %1916 = vmatpush2.bf16.xpose.msra.mxu0 0
      %1917 = vmatprep.subr.bf16.mxu0 0
      %1918 = vmatpush2.bf16.xpose.msra.mxu0 0
      %1919 = vmatprep.subr.bf16.mxu0 0
      %1920 = vmatpush2.bf16.xpose.msra.mxu0 0
      %1921 = vmatprep.subr.bf16.mxu0 0
      %1922 = vmatpush2.bf16.xpose.msra.mxu0 0
      %1923 = vmatprep.mubr.bf16.mxu0 0
      %1924 = vmatmul.mubr.bf16.gmra.mxu0 %v1886
      %v1925 = vpop.f32.mrf.mxu0
      %v1926 = vadd.f32 0.0, %v1925
      %v1927 = vpop.f32.mrf.mxu0
      %v1928 = vpop.f32.mrf.mxu0
      %v1929 = vpop.f32.mrf.mxu0
      %1930 = vdwg.mxu0
      %v1932 = vsel %vm867, %v838, 0
      %v1935 = vsel %vm867, %v1653, 0
      %1937 = vmatprep.subr.bf16.mxu0 0
      %1938 = vmatpush1.bf16.xpose.msra.mxu0 0
      %1939 = vmatprep.subr.bf16.mxu0 0
      %1940 = vmatpush1.bf16.xpose.msra.mxu0 0
      %1941 = vmatprep.subr.bf16.mxu0 0
      %1942 = vmatpush1.bf16.xpose.msra.mxu0 0
      %1943 = vmatprep.subr.bf16.mxu0 0
      %1944 = vmatpush1.bf16.xpose.msra.mxu0 0
      %1945 = vmatprep.subr.bf16.mxu0 0
      %1946 = vmatpush1.bf16.xpose.msra.mxu0 0
      %1947 = vmatprep.subr.bf16.mxu0 0
      %1948 = vmatpush1.bf16.xpose.msra.mxu0 0
      %1949 = vmatprep.subr.bf16.mxu0 0
      %1950 = vmatpush1.bf16.xpose.msra.mxu0 0
      %1951 = vmatprep.subr.bf16.mxu0 0
      %1952 = vmatpush1.bf16.xpose.msra.mxu0 %v1935
      %1953 = vmatprep.subr.bf16.mxu0 0
      %1954 = vmatpush2.bf16.xpose.msra.mxu0 0
      %1955 = vmatprep.subr.bf16.mxu0 0
      %1956 = vmatpush2.bf16.xpose.msra.mxu0 0
      %1957 = vmatprep.subr.bf16.mxu0 0
      %1958 = vmatpush2.bf16.xpose.msra.mxu0 0
      %1959 = vmatprep.subr.bf16.mxu0 0
      %1960 = vmatpush2.bf16.xpose.msra.mxu0 0
      %1961 = vmatprep.subr.bf16.mxu0 0
      %1962 = vmatpush2.bf16.xpose.msra.mxu0 0
      %1963 = vmatprep.subr.bf16.mxu0 0
      %1964 = vmatpush2.bf16.xpose.msra.mxu0 0
      %1965 = vmatprep.subr.bf16.mxu0 0
      %1966 = vmatpush2.bf16.xpose.msra.mxu0 0
      %1967 = vmatprep.subr.bf16.mxu0 0
      %1968 = vmatpush2.bf16.xpose.msra.mxu0 0
      %1969 = vmatprep.mubr.bf16.mxu0 0
      %1970 = vmatmul.mubr.bf16.gmra.mxu0 %v1932
      %v1971 = vpop.f32.mrf.mxu0
      %v1972 = vadd.f32 0.0, %v1971
      %v1973 = vpop.f32.mrf.mxu0
      %v1974 = vpop.f32.mrf.mxu0
      %v1975 = vpop.f32.mrf.mxu0
      %1976 = vdwg.mxu0
      %v1978 = vsel %vm867, %v839, 0
      %v1981 = vsel %vm867, %v1654, 0
      %1983 = vmatprep.subr.bf16.mxu0 0
      %1984 = vmatpush1.bf16.xpose.msra.mxu0 0
      %1985 = vmatprep.subr.bf16.mxu0 0
      %1986 = vmatpush1.bf16.xpose.msra.mxu0 0
      %1987 = vmatprep.subr.bf16.mxu0 0
      %1988 = vmatpush1.bf16.xpose.msra.mxu0 0
      %1989 = vmatprep.subr.bf16.mxu0 0
      %1990 = vmatpush1.bf16.xpose.msra.mxu0 0
      %1991 = vmatprep.subr.bf16.mxu0 0
      %1992 = vmatpush1.bf16.xpose.msra.mxu0 0
      %1993 = vmatprep.subr.bf16.mxu0 0
      %1994 = vmatpush1.bf16.xpose.msra.mxu0 0
      %1995 = vmatprep.subr.bf16.mxu0 0
      %1996 = vmatpush1.bf16.xpose.msra.mxu0 0
      %1997 = vmatprep.subr.bf16.mxu0 0
      %1998 = vmatpush1.bf16.xpose.msra.mxu0 %v1981
      %1999 = vmatprep.subr.bf16.mxu0 0
      %2000 = vmatpush2.bf16.xpose.msra.mxu0 0
      %2001 = vmatprep.subr.bf16.mxu0 0
      %2002 = vmatpush2.bf16.xpose.msra.mxu0 0
      %2003 = vmatprep.subr.bf16.mxu0 0
      %2004 = vmatpush2.bf16.xpose.msra.mxu0 0
      %2005 = vmatprep.subr.bf16.mxu0 0
      %2006 = vmatpush2.bf16.xpose.msra.mxu0 0
      %2007 = vmatprep.subr.bf16.mxu0 0
      %2008 = vmatpush2.bf16.xpose.msra.mxu0 0
      %2009 = vmatprep.subr.bf16.mxu0 0
      %2010 = vmatpush2.bf16.xpose.msra.mxu0 0
      %2011 = vmatprep.subr.bf16.mxu0 0
      %2012 = vmatpush2.bf16.xpose.msra.mxu0 0
      %2013 = vmatprep.subr.bf16.mxu0 0
      %2014 = vmatpush2.bf16.xpose.msra.mxu0 0
      %2015 = vmatprep.mubr.bf16.mxu0 0
      %2016 = vmatmul.mubr.bf16.gmra.mxu0 %v1978
      %v2017 = vpop.f32.mrf.mxu0
      %v2018 = vadd.f32 0.0, %v2017
      %v2019 = vpop.f32.mrf.mxu0
      %v2020 = vpop.f32.mrf.mxu0
      %v2021 = vpop.f32.mrf.mxu0
      %2022 = vdwg.mxu0
      %2023 = vxpose.xlu0.b32.start [1/16] %v1696, 128
      %2024 = vxpose.xlu0.b32.cont [2/16] %v1742, 128
      %2025 = vxpose.xlu0.b32.cont [3/16] %v1788, 128
      %2026 = vxpose.xlu0.b32.cont [4/16] %v1834, 128
      %2027 = vxpose.xlu0.b32.cont [5/16] %v1880, 128
      %2028 = vxpose.xlu0.b32.cont [6/16] %v1926, 128
      %2029 = vxpose.xlu0.b32.cont [7/16] %v1972, 128
      %2030 = vxpose.xlu0.b32.cont [8/16] %v2018, 128
      %2031 = vxpose.xlu0.b32.cont [9/16] 0.0, 128
      %2032 = vxpose.xlu0.b32.cont [10/16] 0.0, 128
      %2033 = vxpose.xlu0.b32.cont [11/16] 0.0, 128
      %2034 = vxpose.xlu0.b32.cont [12/16] 0.0, 128
      %2035 = vxpose.xlu0.b32.cont [13/16] 0.0, 128
      %2036 = vxpose.xlu0.b32.cont [14/16] 0.0, 128
      %2037 = vxpose.xlu0.b32.cont [15/16] 0.0, 128
      %2038 = vxpose.xlu0.b32.end [16/16] 0.0, 128
      %v2039 = vpop.trf.xlu0
      %v2040 = vpop.trf.xlu0
      %v2041 = vpop.trf.xlu0
      %v2042 = vpop.trf.xlu0
      %v2043 = vpop.trf.xlu0
      %v2044 = vpop.trf.xlu0
      %v2045 = vpop.trf.xlu0
      %v2046 = vpop.trf.xlu0
      %v2047 = vpop.trf.xlu0
      %v2048 = vpop.trf.xlu0
      %v2049 = vpop.trf.xlu0
      %v2050 = vpop.trf.xlu0
      %v2051 = vpop.trf.xlu0
      %v2052 = vpop.trf.xlu0
      %v2053 = vpop.trf.xlu0
      %v2054 = vpop.trf.xlu0
      %v2055 = vpack.c.bf16 %v2039, %v2039
      %v2056 = vld [vmem:[%s5] sm:$0xf]
      %v2057 = vld [vmem:[%s5 + $0x4] sm:$0xf]
      %v2058 = vld [vmem:[%s5 + $0x8] sm:$0xf]
      %v2059 = vld [vmem:[%s5 + $0xc] sm:$0xf]
      %v2060 = vld [vmem:[%s5 + $0x10] sm:$0xf]
      %v2061 = vld [vmem:[%s5 + $0x14] sm:$0xf]
      %v2062 = vld [vmem:[%s5 + $0x18] sm:$0xf]
      %v2063 = vld [vmem:[%s5 + $0x1c] sm:$0xf]
      %v2064 = vld [vmem:[%s6] sm:$0x1]
      %v2066 = vlaneseq
      %v2067 = vshrl.u32 %v2066, 7
      %v2068 = vsub.s32 0, %v2067
      %v2069 = vrot.slane %v2064, %v2068
      %v2079 = vunpack.c.l.b16 %v2056
      %v2080 = vunpack.c.l.b16 %v2057
      %v2081 = vunpack.c.l.b16 %v2058
      %v2082 = vunpack.c.l.b16 %v2059
      %v2083 = vunpack.c.l.b16 %v2060
      %v2084 = vunpack.c.l.b16 %v2061
      %v2085 = vunpack.c.l.b16 %v2062
      %v2086 = vunpack.c.l.b16 %v2063
      %v2087 = vpack.c.b16 %v2080, %v2079
      %v2088 = vpack.c.b16 %v2082, %v2081
      %v2089 = vpack.c.b16 %v2084, %v2083
      %v2090 = vpack.c.b16 %v2086, %v2085
      %v2096 = vsel %vm278, %v2055, 0
      %2098 = vmatprep.subr.bf16.mxu0 0
      %2099 = vmatpush1.bf16.msra.mxu0 0
      %2100 = vmatprep.subr.bf16.mxu0 0
      %2101 = vmatpush1.bf16.msra.mxu0 0
      %2102 = vmatprep.subr.bf16.mxu0 0
      %2103 = vmatpush1.bf16.msra.mxu0 0
      %2104 = vmatprep.subr.bf16.mxu0 0
      %2105 = vmatpush1.bf16.msra.mxu0 0
      %2106 = vmatprep.subr.bf16.mxu0 0
      %2107 = vmatpush1.bf16.msra.mxu0 %v2090
      %2108 = vmatprep.subr.bf16.mxu0 0
      %2109 = vmatpush1.bf16.msra.mxu0 %v2089
      %2110 = vmatprep.subr.bf16.mxu0 0
      %2111 = vmatpush1.bf16.msra.mxu0 %v2088
      %2112 = vmatprep.subr.bf16.mxu0 0
      %2113 = vmatpush1.bf16.msra.mxu0 %v2087
      %2114 = vmatprep.subr.bf16.mxu0 0
      %2115 = vmatpush2.bf16.msra.mxu0 0
      %2116 = vmatprep.subr.bf16.mxu0 0
      %2117 = vmatpush2.bf16.msra.mxu0 0
      %2118 = vmatprep.subr.bf16.mxu0 0
      %2119 = vmatpush2.bf16.msra.mxu0 0
      %2120 = vmatprep.subr.bf16.mxu0 0
      %2121 = vmatpush2.bf16.msra.mxu0 0
      %2122 = vmatprep.subr.bf16.mxu0 0
      %2123 = vmatpush2.bf16.msra.mxu0 0
      %2124 = vmatprep.subr.bf16.mxu0 0
      %2125 = vmatpush2.bf16.msra.mxu0 0
      %2126 = vmatprep.subr.bf16.mxu0 0
      %2127 = vmatpush2.bf16.msra.mxu0 0
      %2128 = vmatprep.subr.bf16.mxu0 0
      %2129 = vmatpush2.bf16.msra.mxu0 0
      %2130 = vmatprep.mubr.bf16.mxu0 0
      %2131 = vmatmul.mubr.bf16.gmra.mxu0 %v2096
      %v2132 = vpop.f32.mrf.mxu0
      %v2133 = vadd.f32 %v2069, %v2132
      %v2134 = vpop.f32.mrf.mxu0
      %v2135 = vpop.f32.mrf.mxu0
      %v2136 = vpop.f32.mrf.mxu0
      %2137 = vdwg.mxu0
      %v2138 = vadd.f32 %v275, %v2133
      %2139 = vst.msk [vmem:[%s273] sm:$0xff] %vm278, %v2138
      %p2140 = scmp.lt.s32.totalorder %s18, 1
      %s2141 = scalar_select %p2140, %s18, 1
      %s2142 = smul.addr %s2141, 8
      %s2143 = scalar_lea.vmem %s7, %s2142
      // Predicated region
      $region49: #{conformer_linear_forward.5} parent=47 // pred_check
        %p2144 = pneg %p188
      $region50: #{conformer_linear_forward.5} parent=47 // pred_check_branch
        %2146 = sbr.rel (%p2144) target = $region52
      $region51: #{conformer_linear_forward.5} parent=47 // pred_region
        _
      $region52: #{conformer_linear_forward.5} parent=47 // pred_fallthru
        _
    $region48: #{conformer_linear_forward.5} parent=5 // pred_fallthru
      _
    %p2147 = scmp.le.s32.totalorder 2, %s13
    // Predicated region
    $region53: #{conformer_linear_forward.5} parent=5 // pred_check
      %p2148 = pneg %p2147
    $region54: #{conformer_linear_forward.5} parent=5 // pred_check_branch
      %2150 = sbr.rel (%p2148) target = $region56
    $region55: #{conformer_linear_forward.5} parent=5 // pred_region
      %s2151 = ssub.s32 %s13, 2
      // Predicated region
      $region57: #{conformer_linear_forward.5} parent=55 // pred_check
        %p2152 = pneg %p194
      $region58: #{conformer_linear_forward.5} parent=55 // pred_check_branch
        %2154 = sbr.rel (%p2152) target = $region60
      $region59: #{conformer_linear_forward.5} parent=55 // pred_region
        %p2155 = scmp.lt.s32.totalorder %s19, 1
        %s2156 = scalar_select %p2155, %s19, 1
        %s2157 = smul.addr %s2156, 8
        %s2158 = scalar_lea.vmem %s7, %s2157
      $region60: #{conformer_linear_forward.5} parent=55 // pred_fallthru
        _
    $region56: #{conformer_linear_forward.5} parent=5 // pred_fallthru
      _
  $region6: #{conformer_linear_forward.5} parent=0 // loop_footer
    %s17 = sadd.s32 1, %s13
  $region7: #{conformer_linear_forward.5} parent=0 // loop_footer_branch
    %12 = sbr.rel target = $region3
  $region8: #{conformer_linear_forward.5} parent=0 // loop_exit
    _

</llo_original>
